<compile_context>
chip_gen: v7x
topology: tpu7x:2x2x1
jax: 0.10.0
libtpu: 0.0.40
codegen_flags: <defaults>
</compile_context>

<pallas_src>
import jax
import jax.numpy as jnp
from jax import lax
from jax.experimental import pallas as pl
from jax.experimental.pallas import tpu as pltpu


# ---------------------------------------------------------------------------
# Fused PNet kernel (one image per grid step)
# ---------------------------------------------------------------------------

def _pnet_fused_kernel(x_ref, w1_ref, b1_ref, w2_ref, b2_ref, w3_ref, b3_ref,
                       w4_ref, b4_ref, alpha_ref, out_ref, f1_ref, f2_ref):
    """Whole PNet forward for one image.

    x_ref   : (1, H, 3, W)        bf16  input, (H, C, W) layout (W on lanes)
    w{1,2,3}: (3, 3, Cout, Cin)   bf16  conv weights
    w4_ref  : (5, 32)             bf16  fused conv4_1 (row 0) + conv4_2 (1..4)
    b*_ref  : (Cout, 1)           f32   biases
    alpha   : (3,)                f32   PReLU slopes (SMEM)
    out_ref : (1, H3, 5, W3)      f32   row 0 = sigmoid head, rows 1..4 = offsets
    f1_ref  : (Hp, 10, Wp)        bf16  pooled conv1 activations (VMEM scratch)
    f2_ref  : (H2, 16, W2)        bf16  conv2 activations (VMEM scratch)
    """
    _, _, _, width = x_ref.shape
    kw = w1_ref.shape[1]
    wo = width - kw + 1                  # conv1 output width
    hp, _, wp = f1_ref.shape             # pooled conv1 dims
    h2, _, w2 = f2_ref.shape             # conv2 output dims
    _, h3, _, w3 = out_ref.shape         # conv3 / head output dims

    a1, a2, a3 = alpha_ref[0], alpha_ref[1], alpha_ref[2]
    b1, b2, b3, b4 = b1_ref[...], b2_ref[...], b3_ref[...], b4_ref[...]

    # One-hot (wo, wp) selectors picking even / odd columns: exact stride-2
    # "gather" expressed as an MXU matmul (no strided relayout needed).
    i_idx = lax.broadcasted_iota(jnp.int32, (wo, wp), 0)
    j_idx = lax.broadcasted_iota(jnp.int32, (wo, wp), 1)
    sel_even = (i_idx == 2 * j_idx).astype(jnp.float32)
    sel_odd = (i_idx == 2 * j_idx + 1).astype(jnp.float32)

    def conv_row(src, y, w_ref, bias, w_out):
        """3x3 VALID conv for one output row -> f32 (Cout, w_out)."""
        k_h, k_w, c_out, _ = w_ref.shape
        acc = jnp.zeros((c_out, w_out), jnp.float32)
        for dy in range(k_h):
            for dx in range(k_w):
                acc = acc + jnp.dot(w_ref[dy, dx], src(y + dy, dx, w_out),
                                    preferred_element_type=jnp.float32)
        return acc + bias

    def prelu(v, a):
        return jnp.where(v > 0, v, a * v)

    src1 = lambda y, dx, n: x_ref[0, y, :, dx:dx + n]     # (3,  n) bf16
    src2 = lambda y, dx, n: f1_ref[y, :, dx:dx + n]       # (10, n) bf16
    src3 = lambda y, dx, n: f2_ref[y, :, dx:dx + n]       # (16, n) bf16

    # ---- conv1 + PReLU + fused 2x2/2 max-pool (one pooled row per step) ----
    def c1_body(yp, carry):
        r0 = prelu(conv_row(src1, 2 * yp, w1_ref, b1, wo), a1)
        r1 = prelu(conv_row(src1, 2 * yp + 1, w1_ref, b1, wo), a1)
        rmax = jnp.maximum(r0, r1)                                   # (10, wo)
        pooled = jnp.maximum(
            jnp.dot(rmax, sel_even, preferred_element_type=jnp.float32),
            jnp.dot(rmax, sel_odd, preferred_element_type=jnp.float32))
        f1_ref[yp] = pooled.astype(f1_ref.dtype)                     # (10, wp)
        return carry

    lax.fori_loop(0, hp, c1_body, 0)

    # ---- conv2 + PReLU -----------------------------------------------------
    def c2_body(y, carry):
        act = prelu(conv_row(src2, y, w2_ref, b2, w2), a2)           # (16, w2)
        f2_ref[y] = act.astype(f2_ref.dtype)
        return carry

    lax.fori_loop(0, h2, c2_body, 0)

    # ---- conv3 + PReLU + fused conv4_1 / conv4_2 heads ---------------------
    def c3_body(y, carry):
        act = prelu(conv_row(src3, y, w3_ref, b3, w3), a3)           # (32, w3)
        head = jnp.dot(w4_ref[...], act.astype(jnp.bfloat16),
                       preferred_element_type=jnp.float32) + b4      # (5, w3)
        sig = pl.reciprocal(1.0 + jnp.exp(-head), approx=True)       # EUP path
        sig = jnp.minimum(sig, 1.0)                                  # clamp approx
        ch = lax.broadcasted_iota(jnp.int32, head.shape, 0)
        out_ref[0, y] = jnp.where(ch == 0, sig, head).astype(out_ref.dtype)
        return carry

    lax.fori_loop(0, h3, c3_body, 0)


# ---------------------------------------------------------------------------
# Parameters (PyTorch layouts: OIHW conv weights, scalar PReLU slopes)
# ---------------------------------------------------------------------------

def init_pnet_params(key):
    ks = jax.random.split(key, 10)

    def w(k, shape, scale=0.1):
        return scale * jax.random.normal(k, shape, jnp.float32)

    return {
        "conv1_w": w(ks[0], (10, 3, 3, 3)), "conv1_b": w(ks[1], (10,)),
        "prelu1_a": jnp.float32(0.25),
        "conv2_w": w(ks[2], (16, 10, 3, 3)), "conv2_b": w(ks[3], (16,)),
        "prelu2_a": jnp.float32(0.25),
        "conv3_w": w(ks[4], (32, 16, 3, 3)), "conv3_b": w(ks[5], (32,)),
        "prelu3_a": jnp.float32(0.25),
        "conv4_1_w": w(ks[6], (1, 32, 1, 1)), "conv4_1_b": w(ks[7], (1,)),
        "conv4_2_w": w(ks[8], (4, 32, 1, 1)), "conv4_2_b": w(ks[9], (4,)),
    }


# ---------------------------------------------------------------------------
# Forward wrapper (layout plumbing only; all compute is inside the kernel)
# ---------------------------------------------------------------------------

def pnet_forward(params, x_nchw):
    """PNet forward. x_nchw: (N, 3, H, W) f32. Returns (label, offset) in NCHW."""
    n, cin, h, w = x_nchw.shape
    ho, wo = h - 2, w - 2
    hp, wp = ho // 2, wo // 2
    h2, w2 = hp - 2, wp - 2
    h3, w3 = h2 - 2, w2 - 2
    c1, c2, c3, c4 = 10, 16, 32, 5

    # (N, C, H, W) -> (N, H, C, W): W lands on lanes inside the kernel.
    x_hcw = jnp.transpose(x_nchw, (0, 2, 1, 3)).astype(jnp.bfloat16)

    def conv_w(wt):   # OIHW -> (KH, KW, O, I), bf16 for the MXU
        return jnp.transpose(wt, (2, 3, 0, 1)).astype(jnp.bfloat16)

    w1 = conv_w(params["conv1_w"])
    w2_ = conv_w(params["conv2_w"])
    w3_ = conv_w(params["conv3_w"])
    w4 = jnp.concatenate([params["conv4_1_w"].reshape(1, c3),
                          params["conv4_2_w"].reshape(4, c3)], 0).astype(jnp.bfloat16)
    b1 = params["conv1_b"].reshape(c1, 1).astype(jnp.float32)
    b2 = params["conv2_b"].reshape(c2, 1).astype(jnp.float32)
    b3 = params["conv3_b"].reshape(c3, 1).astype(jnp.float32)
    b4 = jnp.concatenate([params["conv4_1_b"],
                          params["conv4_2_b"]], 0).reshape(c4, 1).astype(jnp.float32)
    alphas = jnp.stack([params["prelu1_a"], params["prelu2_a"],
                        params["prelu3_a"]]).astype(jnp.float32)

    macs = (ho * wo * c1 * cin * 9 + h2 * w2 * c2 * c1 * 9 +
            h3 * w3 * c3 * c2 * 9 + h3 * w3 * c4 * c3) * n
    param_bytes = sum(int(t.size) * t.dtype.itemsize
                      for t in (w1, w2_, w3_, w4, b1, b2, b3, b4, alphas))
    bytes_accessed = int(x_hcw.size) * 2 + n * h3 * c4 * w3 * 4 + param_bytes

    out = pl.pallas_call(
        _pnet_fused_kernel,
        out_shape=jax.ShapeDtypeStruct((n, h3, c4, w3), jnp.float32),
        grid=(n,),
        in_specs=[
            pl.BlockSpec((1, h, cin, w), lambda i: (i, 0, 0, 0)),     # image
            pl.BlockSpec((3, 3, c1, cin), lambda i: (0, 0, 0, 0)),    # w1 (resident)
            pl.BlockSpec((c1, 1), lambda i: (0, 0)),                  # b1
            pl.BlockSpec((3, 3, c2, c1), lambda i: (0, 0, 0, 0)),     # w2
            pl.BlockSpec((c2, 1), lambda i: (0, 0)),                  # b2
            pl.BlockSpec((3, 3, c3, c2), lambda i: (0, 0, 0, 0)),     # w3
            pl.BlockSpec((c3, 1), lambda i: (0, 0)),                  # b3
            pl.BlockSpec((c4, c3), lambda i: (0, 0)),                 # fused heads
            pl.BlockSpec((c4, 1), lambda i: (0, 0)),                  # head bias
            pl.BlockSpec(memory_space=pltpu.MemorySpace.SMEM),        # PReLU alphas
        ],
        out_specs=pl.BlockSpec((1, h3, c4, w3), lambda i: (i, 0, 0, 0)),
        scratch_shapes=[
            pltpu.VMEM((hp, c1, wp), jnp.bfloat16),   # pooled conv1 activations
            pltpu.VMEM((h2, c2, w2), jnp.bfloat16),   # conv2 activations
        ],
        compiler_params=pltpu.CompilerParams(
            dimension_semantics=("parallel",),
            vmem_limit_bytes=32 * 1024 * 1024),
        cost_estimate=pl.CostEstimate(flops=2 * macs,
                                      transcendentals=n * h3 * w3 * c4,
                                      bytes_accessed=bytes_accessed),
    )(x_hcw, w1, b1, w2_, b2, w3_, b3, w4, b4, alphas)

    out = jnp.transpose(out, (0, 2, 1, 3))            # (N, 5, H3, W3)
    return out[:, 0:1], out[:, 1:5]                   # label, offset (NCHW)


# ---------------------------------------------------------------------------
# Pure-JAX reference (mirrors the kernel's bf16-input / f32-accum numerics)
# ---------------------------------------------------------------------------

def pnet_reference(params, x_nchw):
    f32 = jnp.float32

    def conv(x, wt, b):
        y = lax.conv_general_dilated(
            x.astype(jnp.bfloat16), wt.astype(jnp.bfloat16),
            window_strides=(1, 1), padding="VALID",
            dimension_numbers=("NCHW", "OIHW", "NCHW"),
            preferred_element_type=f32)
        return y + b.reshape(1, -1, 1, 1).astype(f32)

    def prelu(v, a):
        return jnp.where(v > 0, v, a * v)

    x = prelu(conv(x_nchw, params["conv1_w"], params["conv1_b"]),
              params["prelu1_a"])
    n_, c_, h_, w_ = x.shape
    hp_, wp_ = h_ // 2, w_ // 2
    x = x[:, :, :2 * hp_, :2 * wp_].reshape(n_, c_, hp_, 2, wp_, 2).max(axis=(3, 5))
    x = x.astype(jnp.bfloat16).astype(f32)
    x = prelu(conv(x, params["conv2_w"], params["conv2_b"]), params["prelu2_a"])
    x = x.astype(jnp.bfloat16).astype(f32)
    x = prelu(conv(x, params["conv3_w"], params["conv3_b"]), params["prelu3_a"])
    x = x.astype(jnp.bfloat16).astype(f32)
    label = jax.nn.sigmoid(conv(x, params["conv4_1_w"], params["conv4_1_b"]))
    offset = conv(x, params["conv4_2_w"], params["conv4_2_b"])
    return label, offset


if __name__ == "__main__":
    key = jax.random.PRNGKey(0)
    k_params, k_x = jax.random.split(key)
    params = init_pnet_params(k_params)

    # N=2, C=3, H=W=16 (PNet minimum usable input is 12x12).
    x = jax.random.normal(k_x, (2, 3, 16, 16), jnp.float32)

    label, offset = jax.jit(pnet_forward)(params, x)
    jax.block_until_ready((label, offset))

    assert label.shape == (2, 1, 3, 3), label.shape
    assert offset.shape == (2, 4, 3, 3), offset.shape
    assert bool(jnp.all((label >= 0.0) & (label <= 1.0)))

    ref_label, ref_offset = pnet_reference(params, x)
    assert bool(jnp.allclose(label, ref_label, rtol=2e-2, atol=2e-2)), (
        float(jnp.max(jnp.abs(label - ref_label))))
    assert bool(jnp.allclose(offset, ref_offset, rtol=2e-2, atol=2e-2)), (
        float(jnp.max(jnp.abs(offset - ref_offset))))

    print("KERNEL_OK")
</pallas_src>

<mosaic_0001>
module attributes {stable_mosaic.version = 11 : i64} {
  func.func @_pnet_fused_kernel(%arg0: i32, %arg1: memref<1x16x3x16xbf16, #tpu.memory_space<vmem>>, %arg2: memref<3x3x10x3xbf16, #tpu.memory_space<vmem>>, %arg3: memref<10x1xf32, #tpu.memory_space<vmem>>, %arg4: memref<3x3x16x10xbf16, #tpu.memory_space<vmem>>, %arg5: memref<16x1xf32, #tpu.memory_space<vmem>>, %arg6: memref<3x3x32x16xbf16, #tpu.memory_space<vmem>>, %arg7: memref<32x1xf32, #tpu.memory_space<vmem>>, %arg8: memref<5x32xbf16, #tpu.memory_space<vmem>>, %arg9: memref<5x1xf32, #tpu.memory_space<vmem>>, %arg10: memref<3xf32, #tpu.memory_space<smem>>, %arg11: memref<1x3x5x3xf32, #tpu.memory_space<vmem>>, %arg12: memref<7x10x7xbf16, #tpu.memory_space<vmem>>, %arg13: memref<5x16x5xbf16, #tpu.memory_space<vmem>>) attributes {dimension_semantics = [#tpu.dimension_semantics<parallel>], iteration_bounds = array<i64: 2>, scalar_prefetch = 0 : i64, scratch_operands = 2 : i64, tpu.core_type = #tpu.core_type<tc>, window_params = [{transform_indices = @transform_0, window_bounds = array<i64: 1, 16, 3, 16>}, {pipeline_mode = #tpu.pipeline_mode<synchronous>, transform_indices = @transform_1, window_bounds = array<i64: 3, 3, 10, 3>}, {pipeline_mode = #tpu.pipeline_mode<synchronous>, transform_indices = @transform_2, window_bounds = array<i64: 10, 1>}, {pipeline_mode = #tpu.pipeline_mode<synchronous>, transform_indices = @transform_3, window_bounds = array<i64: 3, 3, 16, 10>}, {pipeline_mode = #tpu.pipeline_mode<synchronous>, transform_indices = @transform_4, window_bounds = array<i64: 16, 1>}, {pipeline_mode = #tpu.pipeline_mode<synchronous>, transform_indices = @transform_5, window_bounds = array<i64: 3, 3, 32, 16>}, {pipeline_mode = #tpu.pipeline_mode<synchronous>, transform_indices = @transform_6, window_bounds = array<i64: 32, 1>}, {pipeline_mode = #tpu.pipeline_mode<synchronous>, transform_indices = @transform_7, window_bounds = array<i64: 5, 32>}, {pipeline_mode = #tpu.pipeline_mode<synchronous>, transform_indices = @transform_8, window_bounds = array<i64: 5, 1>}, {transform_indices = @transform_9, window_bounds = array<i64: 3>}, {transform_indices = @transform_10, window_bounds = array<i64: 1, 3, 5, 3>}]} {
    %c0 = arith.constant 0 : index
    %0 = memref.load %arg10[%c0] : memref<3xf32, #tpu.memory_space<smem>>
    %c1 = arith.constant 1 : index
    %1 = memref.load %arg10[%c1] : memref<3xf32, #tpu.memory_space<smem>>
    %c2 = arith.constant 2 : index
    %2 = memref.load %arg10[%c2] : memref<3xf32, #tpu.memory_space<smem>>
    %c0_0 = arith.constant 0 : index
    %c0_1 = arith.constant 0 : index
    %3 = vector.load %arg3[%c0_0, %c0_1] : memref<10x1xf32, #tpu.memory_space<vmem>>, vector<10x1xf32>
    %c0_2 = arith.constant 0 : index
    %c0_3 = arith.constant 0 : index
    %4 = vector.load %arg5[%c0_2, %c0_3] : memref<16x1xf32, #tpu.memory_space<vmem>>, vector<16x1xf32>
    %c0_4 = arith.constant 0 : index
    %c0_5 = arith.constant 0 : index
    %5 = vector.load %arg7[%c0_4, %c0_5] : memref<32x1xf32, #tpu.memory_space<vmem>>, vector<32x1xf32>
    %c0_6 = arith.constant 0 : index
    %c0_7 = arith.constant 0 : index
    %6 = vector.load %arg9[%c0_6, %c0_7] : memref<5x1xf32, #tpu.memory_space<vmem>>, vector<5x1xf32>
    %7 = tpu.iota {dimensions = array<i32: 0>} : vector<14x7xi32>
    %8 = tpu.iota {dimensions = array<i32: 1>} : vector<14x7xi32>
    %c2_i32 = arith.constant 2 : i32
    %9 = vector.broadcast %c2_i32 : i32 to vector<14x7xi32>
    %10 = arith.muli %9, %8 : vector<14x7xi32>
    %11 = arith.cmpi eq, %7, %10 : vector<14x7xi32>
    %12 = arith.extui %11 : vector<14x7xi1> to vector<14x7xi32>
    %13 = arith.sitofp %12 : vector<14x7xi32> to vector<14x7xf32>
    %c2_i32_8 = arith.constant 2 : i32
    %14 = vector.broadcast %c2_i32_8 : i32 to vector<14x7xi32>
    %15 = arith.muli %14, %8 : vector<14x7xi32>
    %c1_i32 = arith.constant 1 : i32
    %16 = vector.broadcast %c1_i32 : i32 to vector<14x7xi32>
    %17 = arith.addi %15, %16 : vector<14x7xi32>
    %18 = arith.cmpi eq, %7, %17 : vector<14x7xi32>
    %19 = arith.extui %18 : vector<14x7xi1> to vector<14x7xi32>
    %20 = arith.sitofp %19 : vector<14x7xi32> to vector<14x7xf32>
    %c0_i32 = arith.constant 0 : i32
    %c7_i32 = arith.constant 7 : i32
    %21 = arith.addi %c0_i32, %c7_i32 : i32
    %c1_i32_9 = arith.constant 1 : i32
    scf.for %arg14 = %c0_i32 to %21 step %c1_i32_9  : i32 {
      %c2_i32_17 = arith.constant 2 : i32
      %24 = arith.muli %c2_i32_17, %arg14 : i32
      %cst = arith.constant 0.000000e+00 : f32
      %25 = vector.broadcast %cst : f32 to vector<10x14xf32>
      %c0_18 = arith.constant 0 : index
      %c0_19 = arith.constant 0 : index
      %c0_20 = arith.constant 0 : index
      %c0_21 = arith.constant 0 : index
      %26 = vector.load %arg2[%c0_18, %c0_19, %c0_20, %c0_21] : memref<3x3x10x3xbf16, #tpu.memory_space<vmem>>, vector<1x1x10x3xbf16>
      %27 = vector.shape_cast %26 : vector<1x1x10x3xbf16> to vector<10x3xbf16>
      %c0_i32_22 = arith.constant 0 : i32
      %28 = arith.addi %24, %c0_i32_22 : i32
      %c0_23 = arith.constant 0 : index
      %29 = arith.index_cast %28 : i32 to index
      %c0_24 = arith.constant 0 : index
      %c0_25 = arith.constant 0 : index
      %30 = vector.load %arg1[%c0_23, %29, %c0_24, %c0_25] : memref<1x16x3x16xbf16, #tpu.memory_space<vmem>>, vector<1x1x3x14xbf16>
      %31 = vector.shape_cast %30 : vector<1x1x3x14xbf16> to vector<3x14xbf16>
      %cst_26 = arith.constant dense<0.000000e+00> : vector<10x14xf32>
      %32 = tpu.matmul %27, %31, %cst_26 {dimension_numbers = #tpu.dot_dimension_numbers<[1], [0], [0], [1], [0, 0, 1, 1], [], []>} : vector<10x3xbf16>, vector<3x14xbf16>, vector<10x14xf32> -> vector<10x14xf32>
      %33 = arith.addf %25, %32 : vector<10x14xf32>
      %c0_27 = arith.constant 0 : index
      %c1_28 = arith.constant 1 : index
      %c0_29 = arith.constant 0 : index
      %c0_30 = arith.constant 0 : index
      %34 = vector.load %arg2[%c0_27, %c1_28, %c0_29, %c0_30] : memref<3x3x10x3xbf16, #tpu.memory_space<vmem>>, vector<1x1x10x3xbf16>
      %35 = vector.shape_cast %34 : vector<1x1x10x3xbf16> to vector<10x3xbf16>
      %c0_i32_31 = arith.constant 0 : i32
      %36 = arith.addi %24, %c0_i32_31 : i32
      %c0_32 = arith.constant 0 : index
      %37 = arith.index_cast %36 : i32 to index
      %c0_33 = arith.constant 0 : index
      %c1_34 = arith.constant 1 : index
      %38 = vector.load %arg1[%c0_32, %37, %c0_33, %c1_34] : memref<1x16x3x16xbf16, #tpu.memory_space<vmem>>, vector<1x1x3x14xbf16>
      %39 = vector.shape_cast %38 : vector<1x1x3x14xbf16> to vector<3x14xbf16>
      %cst_35 = arith.constant dense<0.000000e+00> : vector<10x14xf32>
      %40 = tpu.matmul %35, %39, %cst_35 {dimension_numbers = #tpu.dot_dimension_numbers<[1], [0], [0], [1], [0, 0, 1, 1], [], []>} : vector<10x3xbf16>, vector<3x14xbf16>, vector<10x14xf32> -> vector<10x14xf32>
      %41 = arith.addf %33, %40 : vector<10x14xf32>
      %c0_36 = arith.constant 0 : index
      %c2_37 = arith.constant 2 : index
      %c0_38 = arith.constant 0 : index
      %c0_39 = arith.constant 0 : index
      %42 = vector.load %arg2[%c0_36, %c2_37, %c0_38, %c0_39] : memref<3x3x10x3xbf16, #tpu.memory_space<vmem>>, vector<1x1x10x3xbf16>
      %43 = vector.shape_cast %42 : vector<1x1x10x3xbf16> to vector<10x3xbf16>
      %c0_i32_40 = arith.constant 0 : i32
      %44 = arith.addi %24, %c0_i32_40 : i32
      %c0_41 = arith.constant 0 : index
      %45 = arith.index_cast %44 : i32 to index
      %c0_42 = arith.constant 0 : index
      %c2_43 = arith.constant 2 : index
      %46 = vector.load %arg1[%c0_41, %45, %c0_42, %c2_43] : memref<1x16x3x16xbf16, #tpu.memory_space<vmem>>, vector<1x1x3x14xbf16>
      %47 = vector.shape_cast %46 : vector<1x1x3x14xbf16> to vector<3x14xbf16>
      %cst_44 = arith.constant dense<0.000000e+00> : vector<10x14xf32>
      %48 = tpu.matmul %43, %47, %cst_44 {dimension_numbers = #tpu.dot_dimension_numbers<[1], [0], [0], [1], [0, 0, 1, 1], [], []>} : vector<10x3xbf16>, vector<3x14xbf16>, vector<10x14xf32> -> vector<10x14xf32>
      %49 = arith.addf %41, %48 : vector<10x14xf32>
      %c1_45 = arith.constant 1 : index
      %c0_46 = arith.constant 0 : index
      %c0_47 = arith.constant 0 : index
      %c0_48 = arith.constant 0 : index
      %50 = vector.load %arg2[%c1_45, %c0_46, %c0_47, %c0_48] : memref<3x3x10x3xbf16, #tpu.memory_space<vmem>>, vector<1x1x10x3xbf16>
      %51 = vector.shape_cast %50 : vector<1x1x10x3xbf16> to vector<10x3xbf16>
      %c1_i32_49 = arith.constant 1 : i32
      %52 = arith.addi %24, %c1_i32_49 : i32
      %c0_50 = arith.constant 0 : index
      %53 = arith.index_cast %52 : i32 to index
      %c0_51 = arith.constant 0 : index
      %c0_52 = arith.constant 0 : index
      %54 = vector.load %arg1[%c0_50, %53, %c0_51, %c0_52] : memref<1x16x3x16xbf16, #tpu.memory_space<vmem>>, vector<1x1x3x14xbf16>
      %55 = vector.shape_cast %54 : vector<1x1x3x14xbf16> to vector<3x14xbf16>
      %cst_53 = arith.constant dense<0.000000e+00> : vector<10x14xf32>
      %56 = tpu.matmul %51, %55, %cst_53 {dimension_numbers = #tpu.dot_dimension_numbers<[1], [0], [0], [1], [0, 0, 1, 1], [], []>} : vector<10x3xbf16>, vector<3x14xbf16>, vector<10x14xf32> -> vector<10x14xf32>
      %57 = arith.addf %49, %56 : vector<10x14xf32>
      %c1_54 = arith.constant 1 : index
      %c1_55 = arith.constant 1 : index
      %c0_56 = arith.constant 0 : index
      %c0_57 = arith.constant 0 : index
      %58 = vector.load %arg2[%c1_54, %c1_55, %c0_56, %c0_57] : memref<3x3x10x3xbf16, #tpu.memory_space<vmem>>, vector<1x1x10x3xbf16>
      %59 = vector.shape_cast %58 : vector<1x1x10x3xbf16> to vector<10x3xbf16>
      %c1_i32_58 = arith.constant 1 : i32
      %60 = arith.addi %24, %c1_i32_58 : i32
      %c0_59 = arith.constant 0 : index
      %61 = arith.index_cast %60 : i32 to index
      %c0_60 = arith.constant 0 : index
      %c1_61 = arith.constant 1 : index
      %62 = vector.load %arg1[%c0_59, %61, %c0_60, %c1_61] : memref<1x16x3x16xbf16, #tpu.memory_space<vmem>>, vector<1x1x3x14xbf16>
      %63 = vector.shape_cast %62 : vector<1x1x3x14xbf16> to vector<3x14xbf16>
      %cst_62 = arith.constant dense<0.000000e+00> : vector<10x14xf32>
      %64 = tpu.matmul %59, %63, %cst_62 {dimension_numbers = #tpu.dot_dimension_numbers<[1], [0], [0], [1], [0, 0, 1, 1], [], []>} : vector<10x3xbf16>, vector<3x14xbf16>, vector<10x14xf32> -> vector<10x14xf32>
      %65 = arith.addf %57, %64 : vector<10x14xf32>
      %c1_63 = arith.constant 1 : index
      %c2_64 = arith.constant 2 : index
      %c0_65 = arith.constant 0 : index
      %c0_66 = arith.constant 0 : index
      %66 = vector.load %arg2[%c1_63, %c2_64, %c0_65, %c0_66] : memref<3x3x10x3xbf16, #tpu.memory_space<vmem>>, vector<1x1x10x3xbf16>
      %67 = vector.shape_cast %66 : vector<1x1x10x3xbf16> to vector<10x3xbf16>
      %c1_i32_67 = arith.constant 1 : i32
      %68 = arith.addi %24, %c1_i32_67 : i32
      %c0_68 = arith.constant 0 : index
      %69 = arith.index_cast %68 : i32 to index
      %c0_69 = arith.constant 0 : index
      %c2_70 = arith.constant 2 : index
      %70 = vector.load %arg1[%c0_68, %69, %c0_69, %c2_70] : memref<1x16x3x16xbf16, #tpu.memory_space<vmem>>, vector<1x1x3x14xbf16>
      %71 = vector.shape_cast %70 : vector<1x1x3x14xbf16> to vector<3x14xbf16>
      %cst_71 = arith.constant dense<0.000000e+00> : vector<10x14xf32>
      %72 = tpu.matmul %67, %71, %cst_71 {dimension_numbers = #tpu.dot_dimension_numbers<[1], [0], [0], [1], [0, 0, 1, 1], [], []>} : vector<10x3xbf16>, vector<3x14xbf16>, vector<10x14xf32> -> vector<10x14xf32>
      %73 = arith.addf %65, %72 : vector<10x14xf32>
      %c2_72 = arith.constant 2 : index
      %c0_73 = arith.constant 0 : index
      %c0_74 = arith.constant 0 : index
      %c0_75 = arith.constant 0 : index
      %74 = vector.load %arg2[%c2_72, %c0_73, %c0_74, %c0_75] : memref<3x3x10x3xbf16, #tpu.memory_space<vmem>>, vector<1x1x10x3xbf16>
      %75 = vector.shape_cast %74 : vector<1x1x10x3xbf16> to vector<10x3xbf16>
      %c2_i32_76 = arith.constant 2 : i32
      %76 = arith.addi %24, %c2_i32_76 : i32
      %c0_77 = arith.constant 0 : index
      %77 = arith.index_cast %76 : i32 to index
      %c0_78 = arith.constant 0 : index
      %c0_79 = arith.constant 0 : index
      %78 = vector.load %arg1[%c0_77, %77, %c0_78, %c0_79] : memref<1x16x3x16xbf16, #tpu.memory_space<vmem>>, vector<1x1x3x14xbf16>
      %79 = vector.shape_cast %78 : vector<1x1x3x14xbf16> to vector<3x14xbf16>
      %cst_80 = arith.constant dense<0.000000e+00> : vector<10x14xf32>
      %80 = tpu.matmul %75, %79, %cst_80 {dimension_numbers = #tpu.dot_dimension_numbers<[1], [0], [0], [1], [0, 0, 1, 1], [], []>} : vector<10x3xbf16>, vector<3x14xbf16>, vector<10x14xf32> -> vector<10x14xf32>
      %81 = arith.addf %73, %80 : vector<10x14xf32>
      %c2_81 = arith.constant 2 : index
      %c1_82 = arith.constant 1 : index
      %c0_83 = arith.constant 0 : index
      %c0_84 = arith.constant 0 : index
      %82 = vector.load %arg2[%c2_81, %c1_82, %c0_83, %c0_84] : memref<3x3x10x3xbf16, #tpu.memory_space<vmem>>, vector<1x1x10x3xbf16>
      %83 = vector.shape_cast %82 : vector<1x1x10x3xbf16> to vector<10x3xbf16>
      %c2_i32_85 = arith.constant 2 : i32
      %84 = arith.addi %24, %c2_i32_85 : i32
      %c0_86 = arith.constant 0 : index
      %85 = arith.index_cast %84 : i32 to index
      %c0_87 = arith.constant 0 : index
      %c1_88 = arith.constant 1 : index
      %86 = vector.load %arg1[%c0_86, %85, %c0_87, %c1_88] : memref<1x16x3x16xbf16, #tpu.memory_space<vmem>>, vector<1x1x3x14xbf16>
      %87 = vector.shape_cast %86 : vector<1x1x3x14xbf16> to vector<3x14xbf16>
      %cst_89 = arith.constant dense<0.000000e+00> : vector<10x14xf32>
      %88 = tpu.matmul %83, %87, %cst_89 {dimension_numbers = #tpu.dot_dimension_numbers<[1], [0], [0], [1], [0, 0, 1, 1], [], []>} : vector<10x3xbf16>, vector<3x14xbf16>, vector<10x14xf32> -> vector<10x14xf32>
      %89 = arith.addf %81, %88 : vector<10x14xf32>
      %c2_90 = arith.constant 2 : index
      %c2_91 = arith.constant 2 : index
      %c0_92 = arith.constant 0 : index
      %c0_93 = arith.constant 0 : index
      %90 = vector.load %arg2[%c2_90, %c2_91, %c0_92, %c0_93] : memref<3x3x10x3xbf16, #tpu.memory_space<vmem>>, vector<1x1x10x3xbf16>
      %91 = vector.shape_cast %90 : vector<1x1x10x3xbf16> to vector<10x3xbf16>
      %c2_i32_94 = arith.constant 2 : i32
      %92 = arith.addi %24, %c2_i32_94 : i32
      %c0_95 = arith.constant 0 : index
      %93 = arith.index_cast %92 : i32 to index
      %c0_96 = arith.constant 0 : index
      %c2_97 = arith.constant 2 : index
      %94 = vector.load %arg1[%c0_95, %93, %c0_96, %c2_97] : memref<1x16x3x16xbf16, #tpu.memory_space<vmem>>, vector<1x1x3x14xbf16>
      %95 = vector.shape_cast %94 : vector<1x1x3x14xbf16> to vector<3x14xbf16>
      %cst_98 = arith.constant dense<0.000000e+00> : vector<10x14xf32>
      %96 = tpu.matmul %91, %95, %cst_98 {dimension_numbers = #tpu.dot_dimension_numbers<[1], [0], [0], [1], [0, 0, 1, 1], [], []>} : vector<10x3xbf16>, vector<3x14xbf16>, vector<10x14xf32> -> vector<10x14xf32>
      %97 = arith.addf %89, %96 : vector<10x14xf32>
      %98 = vector.broadcast %3 : vector<10x1xf32> to vector<10x14xf32>
      %99 = arith.addf %97, %98 : vector<10x14xf32>
      %cst_99 = arith.constant 0.000000e+00 : f32
      %100 = vector.broadcast %cst_99 : f32 to vector<10x14xf32>
      %101 = arith.cmpf ogt, %99, %100 : vector<10x14xf32>
      %102 = vector.broadcast %0 : f32 to vector<10x14xf32>
      %103 = arith.mulf %102, %99 : vector<10x14xf32>
      %104 = arith.select %101, %99, %103 : vector<10x14xi1>, vector<10x14xf32>
      %c2_i32_100 = arith.constant 2 : i32
      %105 = arith.muli %c2_i32_100, %arg14 : i32
      %c1_i32_101 = arith.constant 1 : i32
      %106 = arith.addi %105, %c1_i32_101 : i32
      %cst_102 = arith.constant 0.000000e+00 : f32
      %107 = vector.broadcast %cst_102 : f32 to vector<10x14xf32>
      %c0_103 = arith.constant 0 : index
      %c0_104 = arith.constant 0 : index
      %c0_105 = arith.constant 0 : index
      %c0_106 = arith.constant 0 : index
      %108 = vector.load %arg2[%c0_103, %c0_104, %c0_105, %c0_106] : memref<3x3x10x3xbf16, #tpu.memory_space<vmem>>, vector<1x1x10x3xbf16>
      %109 = vector.shape_cast %108 : vector<1x1x10x3xbf16> to vector<10x3xbf16>
      %c0_i32_107 = arith.constant 0 : i32
      %110 = arith.addi %106, %c0_i32_107 : i32
      %c0_108 = arith.constant 0 : index
      %111 = arith.index_cast %110 : i32 to index
      %c0_109 = arith.constant 0 : index
      %c0_110 = arith.constant 0 : index
      %112 = vector.load %arg1[%c0_108, %111, %c0_109, %c0_110] : memref<1x16x3x16xbf16, #tpu.memory_space<vmem>>, vector<1x1x3x14xbf16>
      %113 = vector.shape_cast %112 : vector<1x1x3x14xbf16> to vector<3x14xbf16>
      %cst_111 = arith.constant dense<0.000000e+00> : vector<10x14xf32>
      %114 = tpu.matmul %109, %113, %cst_111 {dimension_numbers = #tpu.dot_dimension_numbers<[1], [0], [0], [1], [0, 0, 1, 1], [], []>} : vector<10x3xbf16>, vector<3x14xbf16>, vector<10x14xf32> -> vector<10x14xf32>
      %115 = arith.addf %107, %114 : vector<10x14xf32>
      %c0_112 = arith.constant 0 : index
      %c1_113 = arith.constant 1 : index
      %c0_114 = arith.constant 0 : index
      %c0_115 = arith.constant 0 : index
      %116 = vector.load %arg2[%c0_112, %c1_113, %c0_114, %c0_115] : memref<3x3x10x3xbf16, #tpu.memory_space<vmem>>, vector<1x1x10x3xbf16>
      %117 = vector.shape_cast %116 : vector<1x1x10x3xbf16> to vector<10x3xbf16>
      %c0_i32_116 = arith.constant 0 : i32
      %118 = arith.addi %106, %c0_i32_116 : i32
      %c0_117 = arith.constant 0 : index
      %119 = arith.index_cast %118 : i32 to index
      %c0_118 = arith.constant 0 : index
      %c1_119 = arith.constant 1 : index
      %120 = vector.load %arg1[%c0_117, %119, %c0_118, %c1_119] : memref<1x16x3x16xbf16, #tpu.memory_space<vmem>>, vector<1x1x3x14xbf16>
      %121 = vector.shape_cast %120 : vector<1x1x3x14xbf16> to vector<3x14xbf16>
      %cst_120 = arith.constant dense<0.000000e+00> : vector<10x14xf32>
      %122 = tpu.matmul %117, %121, %cst_120 {dimension_numbers = #tpu.dot_dimension_numbers<[1], [0], [0], [1], [0, 0, 1, 1], [], []>} : vector<10x3xbf16>, vector<3x14xbf16>, vector<10x14xf32> -> vector<10x14xf32>
      %123 = arith.addf %115, %122 : vector<10x14xf32>
      %c0_121 = arith.constant 0 : index
      %c2_122 = arith.constant 2 : index
      %c0_123 = arith.constant 0 : index
      %c0_124 = arith.constant 0 : index
      %124 = vector.load %arg2[%c0_121, %c2_122, %c0_123, %c0_124] : memref<3x3x10x3xbf16, #tpu.memory_space<vmem>>, vector<1x1x10x3xbf16>
      %125 = vector.shape_cast %124 : vector<1x1x10x3xbf16> to vector<10x3xbf16>
      %c0_i32_125 = arith.constant 0 : i32
      %126 = arith.addi %106, %c0_i32_125 : i32
      %c0_126 = arith.constant 0 : index
      %127 = arith.index_cast %126 : i32 to index
      %c0_127 = arith.constant 0 : index
      %c2_128 = arith.constant 2 : index
      %128 = vector.load %arg1[%c0_126, %127, %c0_127, %c2_128] : memref<1x16x3x16xbf16, #tpu.memory_space<vmem>>, vector<1x1x3x14xbf16>
      %129 = vector.shape_cast %128 : vector<1x1x3x14xbf16> to vector<3x14xbf16>
      %cst_129 = arith.constant dense<0.000000e+00> : vector<10x14xf32>
      %130 = tpu.matmul %125, %129, %cst_129 {dimension_numbers = #tpu.dot_dimension_numbers<[1], [0], [0], [1], [0, 0, 1, 1], [], []>} : vector<10x3xbf16>, vector<3x14xbf16>, vector<10x14xf32> -> vector<10x14xf32>
      %131 = arith.addf %123, %130 : vector<10x14xf32>
      %c1_130 = arith.constant 1 : index
      %c0_131 = arith.constant 0 : index
      %c0_132 = arith.constant 0 : index
      %c0_133 = arith.constant 0 : index
      %132 = vector.load %arg2[%c1_130, %c0_131, %c0_132, %c0_133] : memref<3x3x10x3xbf16, #tpu.memory_space<vmem>>, vector<1x1x10x3xbf16>
      %133 = vector.shape_cast %132 : vector<1x1x10x3xbf16> to vector<10x3xbf16>
      %c1_i32_134 = arith.constant 1 : i32
      %134 = arith.addi %106, %c1_i32_134 : i32
      %c0_135 = arith.constant 0 : index
      %135 = arith.index_cast %134 : i32 to index
      %c0_136 = arith.constant 0 : index
      %c0_137 = arith.constant 0 : index
      %136 = vector.load %arg1[%c0_135, %135, %c0_136, %c0_137] : memref<1x16x3x16xbf16, #tpu.memory_space<vmem>>, vector<1x1x3x14xbf16>
      %137 = vector.shape_cast %136 : vector<1x1x3x14xbf16> to vector<3x14xbf16>
      %cst_138 = arith.constant dense<0.000000e+00> : vector<10x14xf32>
      %138 = tpu.matmul %133, %137, %cst_138 {dimension_numbers = #tpu.dot_dimension_numbers<[1], [0], [0], [1], [0, 0, 1, 1], [], []>} : vector<10x3xbf16>, vector<3x14xbf16>, vector<10x14xf32> -> vector<10x14xf32>
      %139 = arith.addf %131, %138 : vector<10x14xf32>
      %c1_139 = arith.constant 1 : index
      %c1_140 = arith.constant 1 : index
      %c0_141 = arith.constant 0 : index
      %c0_142 = arith.constant 0 : index
      %140 = vector.load %arg2[%c1_139, %c1_140, %c0_141, %c0_142] : memref<3x3x10x3xbf16, #tpu.memory_space<vmem>>, vector<1x1x10x3xbf16>
      %141 = vector.shape_cast %140 : vector<1x1x10x3xbf16> to vector<10x3xbf16>
      %c1_i32_143 = arith.constant 1 : i32
      %142 = arith.addi %106, %c1_i32_143 : i32
      %c0_144 = arith.constant 0 : index
      %143 = arith.index_cast %142 : i32 to index
      %c0_145 = arith.constant 0 : index
      %c1_146 = arith.constant 1 : index
      %144 = vector.load %arg1[%c0_144, %143, %c0_145, %c1_146] : memref<1x16x3x16xbf16, #tpu.memory_space<vmem>>, vector<1x1x3x14xbf16>
      %145 = vector.shape_cast %144 : vector<1x1x3x14xbf16> to vector<3x14xbf16>
      %cst_147 = arith.constant dense<0.000000e+00> : vector<10x14xf32>
      %146 = tpu.matmul %141, %145, %cst_147 {dimension_numbers = #tpu.dot_dimension_numbers<[1], [0], [0], [1], [0, 0, 1, 1], [], []>} : vector<10x3xbf16>, vector<3x14xbf16>, vector<10x14xf32> -> vector<10x14xf32>
      %147 = arith.addf %139, %146 : vector<10x14xf32>
      %c1_148 = arith.constant 1 : index
      %c2_149 = arith.constant 2 : index
      %c0_150 = arith.constant 0 : index
      %c0_151 = arith.constant 0 : index
      %148 = vector.load %arg2[%c1_148, %c2_149, %c0_150, %c0_151] : memref<3x3x10x3xbf16, #tpu.memory_space<vmem>>, vector<1x1x10x3xbf16>
      %149 = vector.shape_cast %148 : vector<1x1x10x3xbf16> to vector<10x3xbf16>
      %c1_i32_152 = arith.constant 1 : i32
      %150 = arith.addi %106, %c1_i32_152 : i32
      %c0_153 = arith.constant 0 : index
      %151 = arith.index_cast %150 : i32 to index
      %c0_154 = arith.constant 0 : index
      %c2_155 = arith.constant 2 : index
      %152 = vector.load %arg1[%c0_153, %151, %c0_154, %c2_155] : memref<1x16x3x16xbf16, #tpu.memory_space<vmem>>, vector<1x1x3x14xbf16>
      %153 = vector.shape_cast %152 : vector<1x1x3x14xbf16> to vector<3x14xbf16>
      %cst_156 = arith.constant dense<0.000000e+00> : vector<10x14xf32>
      %154 = tpu.matmul %149, %153, %cst_156 {dimension_numbers = #tpu.dot_dimension_numbers<[1], [0], [0], [1], [0, 0, 1, 1], [], []>} : vector<10x3xbf16>, vector<3x14xbf16>, vector<10x14xf32> -> vector<10x14xf32>
      %155 = arith.addf %147, %154 : vector<10x14xf32>
      %c2_157 = arith.constant 2 : index
      %c0_158 = arith.constant 0 : index
      %c0_159 = arith.constant 0 : index
      %c0_160 = arith.constant 0 : index
      %156 = vector.load %arg2[%c2_157, %c0_158, %c0_159, %c0_160] : memref<3x3x10x3xbf16, #tpu.memory_space<vmem>>, vector<1x1x10x3xbf16>
      %157 = vector.shape_cast %156 : vector<1x1x10x3xbf16> to vector<10x3xbf16>
      %c2_i32_161 = arith.constant 2 : i32
      %158 = arith.addi %106, %c2_i32_161 : i32
      %c0_162 = arith.constant 0 : index
      %159 = arith.index_cast %158 : i32 to index
      %c0_163 = arith.constant 0 : index
      %c0_164 = arith.constant 0 : index
      %160 = vector.load %arg1[%c0_162, %159, %c0_163, %c0_164] : memref<1x16x3x16xbf16, #tpu.memory_space<vmem>>, vector<1x1x3x14xbf16>
      %161 = vector.shape_cast %160 : vector<1x1x3x14xbf16> to vector<3x14xbf16>
      %cst_165 = arith.constant dense<0.000000e+00> : vector<10x14xf32>
      %162 = tpu.matmul %157, %161, %cst_165 {dimension_numbers = #tpu.dot_dimension_numbers<[1], [0], [0], [1], [0, 0, 1, 1], [], []>} : vector<10x3xbf16>, vector<3x14xbf16>, vector<10x14xf32> -> vector<10x14xf32>
      %163 = arith.addf %155, %162 : vector<10x14xf32>
      %c2_166 = arith.constant 2 : index
      %c1_167 = arith.constant 1 : index
      %c0_168 = arith.constant 0 : index
      %c0_169 = arith.constant 0 : index
      %164 = vector.load %arg2[%c2_166, %c1_167, %c0_168, %c0_169] : memref<3x3x10x3xbf16, #tpu.memory_space<vmem>>, vector<1x1x10x3xbf16>
      %165 = vector.shape_cast %164 : vector<1x1x10x3xbf16> to vector<10x3xbf16>
      %c2_i32_170 = arith.constant 2 : i32
      %166 = arith.addi %106, %c2_i32_170 : i32
      %c0_171 = arith.constant 0 : index
      %167 = arith.index_cast %166 : i32 to index
      %c0_172 = arith.constant 0 : index
      %c1_173 = arith.constant 1 : index
      %168 = vector.load %arg1[%c0_171, %167, %c0_172, %c1_173] : memref<1x16x3x16xbf16, #tpu.memory_space<vmem>>, vector<1x1x3x14xbf16>
      %169 = vector.shape_cast %168 : vector<1x1x3x14xbf16> to vector<3x14xbf16>
      %cst_174 = arith.constant dense<0.000000e+00> : vector<10x14xf32>
      %170 = tpu.matmul %165, %169, %cst_174 {dimension_numbers = #tpu.dot_dimension_numbers<[1], [0], [0], [1], [0, 0, 1, 1], [], []>} : vector<10x3xbf16>, vector<3x14xbf16>, vector<10x14xf32> -> vector<10x14xf32>
      %171 = arith.addf %163, %170 : vector<10x14xf32>
      %c2_175 = arith.constant 2 : index
      %c2_176 = arith.constant 2 : index
      %c0_177 = arith.constant 0 : index
      %c0_178 = arith.constant 0 : index
      %172 = vector.load %arg2[%c2_175, %c2_176, %c0_177, %c0_178] : memref<3x3x10x3xbf16, #tpu.memory_space<vmem>>, vector<1x1x10x3xbf16>
      %173 = vector.shape_cast %172 : vector<1x1x10x3xbf16> to vector<10x3xbf16>
      %c2_i32_179 = arith.constant 2 : i32
      %174 = arith.addi %106, %c2_i32_179 : i32
      %c0_180 = arith.constant 0 : index
      %175 = arith.index_cast %174 : i32 to index
      %c0_181 = arith.constant 0 : index
      %c2_182 = arith.constant 2 : index
      %176 = vector.load %arg1[%c0_180, %175, %c0_181, %c2_182] : memref<1x16x3x16xbf16, #tpu.memory_space<vmem>>, vector<1x1x3x14xbf16>
      %177 = vector.shape_cast %176 : vector<1x1x3x14xbf16> to vector<3x14xbf16>
      %cst_183 = arith.constant dense<0.000000e+00> : vector<10x14xf32>
      %178 = tpu.matmul %173, %177, %cst_183 {dimension_numbers = #tpu.dot_dimension_numbers<[1], [0], [0], [1], [0, 0, 1, 1], [], []>} : vector<10x3xbf16>, vector<3x14xbf16>, vector<10x14xf32> -> vector<10x14xf32>
      %179 = arith.addf %171, %178 : vector<10x14xf32>
      %180 = vector.broadcast %3 : vector<10x1xf32> to vector<10x14xf32>
      %181 = arith.addf %179, %180 : vector<10x14xf32>
      %cst_184 = arith.constant 0.000000e+00 : f32
      %182 = vector.broadcast %cst_184 : f32 to vector<10x14xf32>
      %183 = arith.cmpf ogt, %181, %182 : vector<10x14xf32>
      %184 = vector.broadcast %0 : f32 to vector<10x14xf32>
      %185 = arith.mulf %184, %181 : vector<10x14xf32>
      %186 = arith.select %183, %181, %185 : vector<10x14xi1>, vector<10x14xf32>
      %187 = arith.maximumf %104, %186 : vector<10x14xf32>
      %cst_185 = arith.constant dense<0.000000e+00> : vector<10x7xf32>
      %188 = tpu.matmul %187, %13, %cst_185 {dimension_numbers = #tpu.dot_dimension_numbers<[1], [0], [0], [1], [0, 0, 1, 1], [], []>} : vector<10x14xf32>, vector<14x7xf32>, vector<10x7xf32> -> vector<10x7xf32>
      %cst_186 = arith.constant dense<0.000000e+00> : vector<10x7xf32>
      %189 = tpu.matmul %187, %20, %cst_186 {dimension_numbers = #tpu.dot_dimension_numbers<[1], [0], [0], [1], [0, 0, 1, 1], [], []>} : vector<10x14xf32>, vector<14x7xf32>, vector<10x7xf32> -> vector<10x7xf32>
      %190 = arith.maximumf %188, %189 : vector<10x7xf32>
      %191 = arith.truncf %190 : vector<10x7xf32> to vector<10x7xbf16>
      %192 = arith.index_cast %arg14 : i32 to index
      %c0_187 = arith.constant 0 : index
      %c0_188 = arith.constant 0 : index
      %193 = vector.load %arg12[%192, %c0_187, %c0_188] : memref<7x10x7xbf16, #tpu.memory_space<vmem>>, vector<1x10x7xbf16>
      %194 = vector.shape_cast %193 : vector<1x10x7xbf16> to vector<10x7xbf16>
      %195 = vector.shape_cast %191 : vector<10x7xbf16> to vector<1x10x7xbf16>
      tpu.vector_store %arg12[%192, %c0_187, %c0_188], %195 {strides = array<i32>} : memref<7x10x7xbf16, #tpu.memory_space<vmem>>, vector<1x10x7xbf16>,
    }
    %c7_i32_10 = arith.constant 7 : i32
    %c0_i32_11 = arith.constant 0 : i32
    %c5_i32 = arith.constant 5 : i32
    %22 = arith.addi %c0_i32_11, %c5_i32 : i32
    %c1_i32_12 = arith.constant 1 : i32
    scf.for %arg14 = %c0_i32_11 to %22 step %c1_i32_12  : i32 {
      %cst = arith.constant 0.000000e+00 : f32
      %24 = vector.broadcast %cst : f32 to vector<16x5xf32>
      %c0_17 = arith.constant 0 : index
      %c0_18 = arith.constant 0 : index
      %c0_19 = arith.constant 0 : index
      %c0_20 = arith.constant 0 : index
      %25 = vector.load %arg4[%c0_17, %c0_18, %c0_19, %c0_20] : memref<3x3x16x10xbf16, #tpu.memory_space<vmem>>, vector<1x1x16x10xbf16>
      %26 = vector.shape_cast %25 : vector<1x1x16x10xbf16> to vector<16x10xbf16>
      %c0_i32_21 = arith.constant 0 : i32
      %27 = arith.addi %arg14, %c0_i32_21 : i32
      %28 = arith.index_cast %27 : i32 to index
      %c0_22 = arith.constant 0 : index
      %c0_23 = arith.constant 0 : index
      %29 = vector.load %arg12[%28, %c0_22, %c0_23] : memref<7x10x7xbf16, #tpu.memory_space<vmem>>, vector<1x10x5xbf16>
      %30 = vector.shape_cast %29 : vector<1x10x5xbf16> to vector<10x5xbf16>
      %cst_24 = arith.constant dense<0.000000e+00> : vector<16x5xf32>
      %31 = tpu.matmul %26, %30, %cst_24 {dimension_numbers = #tpu.dot_dimension_numbers<[1], [0], [0], [1], [0, 0, 1, 1], [], []>} : vector<16x10xbf16>, vector<10x5xbf16>, vector<16x5xf32> -> vector<16x5xf32>
      %32 = arith.addf %24, %31 : vector<16x5xf32>
      %c0_25 = arith.constant 0 : index
      %c1_26 = arith.constant 1 : index
      %c0_27 = arith.constant 0 : index
      %c0_28 = arith.constant 0 : index
      %33 = vector.load %arg4[%c0_25, %c1_26, %c0_27, %c0_28] : memref<3x3x16x10xbf16, #tpu.memory_space<vmem>>, vector<1x1x16x10xbf16>
      %34 = vector.shape_cast %33 : vector<1x1x16x10xbf16> to vector<16x10xbf16>
      %c0_i32_29 = arith.constant 0 : i32
      %35 = arith.addi %arg14, %c0_i32_29 : i32
      %36 = arith.index_cast %35 : i32 to index
      %c0_30 = arith.constant 0 : index
      %c1_31 = arith.constant 1 : index
      %37 = vector.load %arg12[%36, %c0_30, %c1_31] : memref<7x10x7xbf16, #tpu.memory_space<vmem>>, vector<1x10x5xbf16>
      %38 = vector.shape_cast %37 : vector<1x10x5xbf16> to vector<10x5xbf16>
      %cst_32 = arith.constant dense<0.000000e+00> : vector<16x5xf32>
      %39 = tpu.matmul %34, %38, %cst_32 {dimension_numbers = #tpu.dot_dimension_numbers<[1], [0], [0], [1], [0, 0, 1, 1], [], []>} : vector<16x10xbf16>, vector<10x5xbf16>, vector<16x5xf32> -> vector<16x5xf32>
      %40 = arith.addf %32, %39 : vector<16x5xf32>
      %c0_33 = arith.constant 0 : index
      %c2_34 = arith.constant 2 : index
      %c0_35 = arith.constant 0 : index
      %c0_36 = arith.constant 0 : index
      %41 = vector.load %arg4[%c0_33, %c2_34, %c0_35, %c0_36] : memref<3x3x16x10xbf16, #tpu.memory_space<vmem>>, vector<1x1x16x10xbf16>
      %42 = vector.shape_cast %41 : vector<1x1x16x10xbf16> to vector<16x10xbf16>
      %c0_i32_37 = arith.constant 0 : i32
      %43 = arith.addi %arg14, %c0_i32_37 : i32
      %44 = arith.index_cast %43 : i32 to index
      %c0_38 = arith.constant 0 : index
      %c2_39 = arith.constant 2 : index
      %45 = vector.load %arg12[%44, %c0_38, %c2_39] : memref<7x10x7xbf16, #tpu.memory_space<vmem>>, vector<1x10x5xbf16>
      %46 = vector.shape_cast %45 : vector<1x10x5xbf16> to vector<10x5xbf16>
      %cst_40 = arith.constant dense<0.000000e+00> : vector<16x5xf32>
      %47 = tpu.matmul %42, %46, %cst_40 {dimension_numbers = #tpu.dot_dimension_numbers<[1], [0], [0], [1], [0, 0, 1, 1], [], []>} : vector<16x10xbf16>, vector<10x5xbf16>, vector<16x5xf32> -> vector<16x5xf32>
      %48 = arith.addf %40, %47 : vector<16x5xf32>
      %c1_41 = arith.constant 1 : index
      %c0_42 = arith.constant 0 : index
      %c0_43 = arith.constant 0 : index
      %c0_44 = arith.constant 0 : index
      %49 = vector.load %arg4[%c1_41, %c0_42, %c0_43, %c0_44] : memref<3x3x16x10xbf16, #tpu.memory_space<vmem>>, vector<1x1x16x10xbf16>
      %50 = vector.shape_cast %49 : vector<1x1x16x10xbf16> to vector<16x10xbf16>
      %c1_i32_45 = arith.constant 1 : i32
      %51 = arith.addi %arg14, %c1_i32_45 : i32
      %52 = arith.index_cast %51 : i32 to index
      %c0_46 = arith.constant 0 : index
      %c0_47 = arith.constant 0 : index
      %53 = vector.load %arg12[%52, %c0_46, %c0_47] : memref<7x10x7xbf16, #tpu.memory_space<vmem>>, vector<1x10x5xbf16>
      %54 = vector.shape_cast %53 : vector<1x10x5xbf16> to vector<10x5xbf16>
      %cst_48 = arith.constant dense<0.000000e+00> : vector<16x5xf32>
      %55 = tpu.matmul %50, %54, %cst_48 {dimension_numbers = #tpu.dot_dimension_numbers<[1], [0], [0], [1], [0, 0, 1, 1], [], []>} : vector<16x10xbf16>, vector<10x5xbf16>, vector<16x5xf32> -> vector<16x5xf32>
      %56 = arith.addf %48, %55 : vector<16x5xf32>
      %c1_49 = arith.constant 1 : index
      %c1_50 = arith.constant 1 : index
      %c0_51 = arith.constant 0 : index
      %c0_52 = arith.constant 0 : index
      %57 = vector.load %arg4[%c1_49, %c1_50, %c0_51, %c0_52] : memref<3x3x16x10xbf16, #tpu.memory_space<vmem>>, vector<1x1x16x10xbf16>
      %58 = vector.shape_cast %57 : vector<1x1x16x10xbf16> to vector<16x10xbf16>
      %c1_i32_53 = arith.constant 1 : i32
      %59 = arith.addi %arg14, %c1_i32_53 : i32
      %60 = arith.index_cast %59 : i32 to index
      %c0_54 = arith.constant 0 : index
      %c1_55 = arith.constant 1 : index
      %61 = vector.load %arg12[%60, %c0_54, %c1_55] : memref<7x10x7xbf16, #tpu.memory_space<vmem>>, vector<1x10x5xbf16>
      %62 = vector.shape_cast %61 : vector<1x10x5xbf16> to vector<10x5xbf16>
      %cst_56 = arith.constant dense<0.000000e+00> : vector<16x5xf32>
      %63 = tpu.matmul %58, %62, %cst_56 {dimension_numbers = #tpu.dot_dimension_numbers<[1], [0], [0], [1], [0, 0, 1, 1], [], []>} : vector<16x10xbf16>, vector<10x5xbf16>, vector<16x5xf32> -> vector<16x5xf32>
      %64 = arith.addf %56, %63 : vector<16x5xf32>
      %c1_57 = arith.constant 1 : index
      %c2_58 = arith.constant 2 : index
      %c0_59 = arith.constant 0 : index
      %c0_60 = arith.constant 0 : index
      %65 = vector.load %arg4[%c1_57, %c2_58, %c0_59, %c0_60] : memref<3x3x16x10xbf16, #tpu.memory_space<vmem>>, vector<1x1x16x10xbf16>
      %66 = vector.shape_cast %65 : vector<1x1x16x10xbf16> to vector<16x10xbf16>
      %c1_i32_61 = arith.constant 1 : i32
      %67 = arith.addi %arg14, %c1_i32_61 : i32
      %68 = arith.index_cast %67 : i32 to index
      %c0_62 = arith.constant 0 : index
      %c2_63 = arith.constant 2 : index
      %69 = vector.load %arg12[%68, %c0_62, %c2_63] : memref<7x10x7xbf16, #tpu.memory_space<vmem>>, vector<1x10x5xbf16>
      %70 = vector.shape_cast %69 : vector<1x10x5xbf16> to vector<10x5xbf16>
      %cst_64 = arith.constant dense<0.000000e+00> : vector<16x5xf32>
      %71 = tpu.matmul %66, %70, %cst_64 {dimension_numbers = #tpu.dot_dimension_numbers<[1], [0], [0], [1], [0, 0, 1, 1], [], []>} : vector<16x10xbf16>, vector<10x5xbf16>, vector<16x5xf32> -> vector<16x5xf32>
      %72 = arith.addf %64, %71 : vector<16x5xf32>
      %c2_65 = arith.constant 2 : index
      %c0_66 = arith.constant 0 : index
      %c0_67 = arith.constant 0 : index
      %c0_68 = arith.constant 0 : index
      %73 = vector.load %arg4[%c2_65, %c0_66, %c0_67, %c0_68] : memref<3x3x16x10xbf16, #tpu.memory_space<vmem>>, vector<1x1x16x10xbf16>
      %74 = vector.shape_cast %73 : vector<1x1x16x10xbf16> to vector<16x10xbf16>
      %c2_i32_69 = arith.constant 2 : i32
      %75 = arith.addi %arg14, %c2_i32_69 : i32
      %76 = arith.index_cast %75 : i32 to index
      %c0_70 = arith.constant 0 : index
      %c0_71 = arith.constant 0 : index
      %77 = vector.load %arg12[%76, %c0_70, %c0_71] : memref<7x10x7xbf16, #tpu.memory_space<vmem>>, vector<1x10x5xbf16>
      %78 = vector.shape_cast %77 : vector<1x10x5xbf16> to vector<10x5xbf16>
      %cst_72 = arith.constant dense<0.000000e+00> : vector<16x5xf32>
      %79 = tpu.matmul %74, %78, %cst_72 {dimension_numbers = #tpu.dot_dimension_numbers<[1], [0], [0], [1], [0, 0, 1, 1], [], []>} : vector<16x10xbf16>, vector<10x5xbf16>, vector<16x5xf32> -> vector<16x5xf32>
      %80 = arith.addf %72, %79 : vector<16x5xf32>
      %c2_73 = arith.constant 2 : index
      %c1_74 = arith.constant 1 : index
      %c0_75 = arith.constant 0 : index
      %c0_76 = arith.constant 0 : index
      %81 = vector.load %arg4[%c2_73, %c1_74, %c0_75, %c0_76] : memref<3x3x16x10xbf16, #tpu.memory_space<vmem>>, vector<1x1x16x10xbf16>
      %82 = vector.shape_cast %81 : vector<1x1x16x10xbf16> to vector<16x10xbf16>
      %c2_i32_77 = arith.constant 2 : i32
      %83 = arith.addi %arg14, %c2_i32_77 : i32
      %84 = arith.index_cast %83 : i32 to index
      %c0_78 = arith.constant 0 : index
      %c1_79 = arith.constant 1 : index
      %85 = vector.load %arg12[%84, %c0_78, %c1_79] : memref<7x10x7xbf16, #tpu.memory_space<vmem>>, vector<1x10x5xbf16>
      %86 = vector.shape_cast %85 : vector<1x10x5xbf16> to vector<10x5xbf16>
      %cst_80 = arith.constant dense<0.000000e+00> : vector<16x5xf32>
      %87 = tpu.matmul %82, %86, %cst_80 {dimension_numbers = #tpu.dot_dimension_numbers<[1], [0], [0], [1], [0, 0, 1, 1], [], []>} : vector<16x10xbf16>, vector<10x5xbf16>, vector<16x5xf32> -> vector<16x5xf32>
      %88 = arith.addf %80, %87 : vector<16x5xf32>
      %c2_81 = arith.constant 2 : index
      %c2_82 = arith.constant 2 : index
      %c0_83 = arith.constant 0 : index
      %c0_84 = arith.constant 0 : index
      %89 = vector.load %arg4[%c2_81, %c2_82, %c0_83, %c0_84] : memref<3x3x16x10xbf16, #tpu.memory_space<vmem>>, vector<1x1x16x10xbf16>
      %90 = vector.shape_cast %89 : vector<1x1x16x10xbf16> to vector<16x10xbf16>
      %c2_i32_85 = arith.constant 2 : i32
      %91 = arith.addi %arg14, %c2_i32_85 : i32
      %92 = arith.index_cast %91 : i32 to index
      %c0_86 = arith.constant 0 : index
      %c2_87 = arith.constant 2 : index
      %93 = vector.load %arg12[%92, %c0_86, %c2_87] : memref<7x10x7xbf16, #tpu.memory_space<vmem>>, vector<1x10x5xbf16>
      %94 = vector.shape_cast %93 : vector<1x10x5xbf16> to vector<10x5xbf16>
      %cst_88 = arith.constant dense<0.000000e+00> : vector<16x5xf32>
      %95 = tpu.matmul %90, %94, %cst_88 {dimension_numbers = #tpu.dot_dimension_numbers<[1], [0], [0], [1], [0, 0, 1, 1], [], []>} : vector<16x10xbf16>, vector<10x5xbf16>, vector<16x5xf32> -> vector<16x5xf32>
      %96 = arith.addf %88, %95 : vector<16x5xf32>
      %97 = vector.broadcast %4 : vector<16x1xf32> to vector<16x5xf32>
      %98 = arith.addf %96, %97 : vector<16x5xf32>
      %cst_89 = arith.constant 0.000000e+00 : f32
      %99 = vector.broadcast %cst_89 : f32 to vector<16x5xf32>
      %100 = arith.cmpf ogt, %98, %99 : vector<16x5xf32>
      %101 = vector.broadcast %1 : f32 to vector<16x5xf32>
      %102 = arith.mulf %101, %98 : vector<16x5xf32>
      %103 = arith.select %100, %98, %102 : vector<16x5xi1>, vector<16x5xf32>
      %104 = arith.truncf %103 : vector<16x5xf32> to vector<16x5xbf16>
      %105 = arith.index_cast %arg14 : i32 to index
      %c0_90 = arith.constant 0 : index
      %c0_91 = arith.constant 0 : index
      %106 = vector.load %arg13[%105, %c0_90, %c0_91] : memref<5x16x5xbf16, #tpu.memory_space<vmem>>, vector<1x16x5xbf16>
      %107 = vector.shape_cast %106 : vector<1x16x5xbf16> to vector<16x5xbf16>
      %108 = vector.shape_cast %104 : vector<16x5xbf16> to vector<1x16x5xbf16>
      tpu.vector_store %arg13[%105, %c0_90, %c0_91], %108 {strides = array<i32>} : memref<5x16x5xbf16, #tpu.memory_space<vmem>>, vector<1x16x5xbf16>,
    }
    %c5_i32_13 = arith.constant 5 : i32
    %c0_i32_14 = arith.constant 0 : i32
    %c3_i32 = arith.constant 3 : i32
    %23 = arith.addi %c0_i32_14, %c3_i32 : i32
    %c1_i32_15 = arith.constant 1 : i32
    scf.for %arg14 = %c0_i32_14 to %23 step %c1_i32_15  : i32 {
      %cst = arith.constant 0.000000e+00 : f32
      %24 = vector.broadcast %cst : f32 to vector<32x3xf32>
      %c0_17 = arith.constant 0 : index
      %c0_18 = arith.constant 0 : index
      %c0_19 = arith.constant 0 : index
      %c0_20 = arith.constant 0 : index
      %25 = vector.load %arg6[%c0_17, %c0_18, %c0_19, %c0_20] : memref<3x3x32x16xbf16, #tpu.memory_space<vmem>>, vector<1x1x32x16xbf16>
      %26 = vector.shape_cast %25 : vector<1x1x32x16xbf16> to vector<32x16xbf16>
      %c0_i32_21 = arith.constant 0 : i32
      %27 = arith.addi %arg14, %c0_i32_21 : i32
      %28 = arith.index_cast %27 : i32 to index
      %c0_22 = arith.constant 0 : index
      %c0_23 = arith.constant 0 : index
      %29 = vector.load %arg13[%28, %c0_22, %c0_23] : memref<5x16x5xbf16, #tpu.memory_space<vmem>>, vector<1x16x3xbf16>
      %30 = vector.shape_cast %29 : vector<1x16x3xbf16> to vector<16x3xbf16>
      %cst_24 = arith.constant dense<0.000000e+00> : vector<32x3xf32>
      %31 = tpu.matmul %26, %30, %cst_24 {dimension_numbers = #tpu.dot_dimension_numbers<[1], [0], [0], [1], [0, 0, 1, 1], [], []>} : vector<32x16xbf16>, vector<16x3xbf16>, vector<32x3xf32> -> vector<32x3xf32>
      %32 = arith.addf %24, %31 : vector<32x3xf32>
      %c0_25 = arith.constant 0 : index
      %c1_26 = arith.constant 1 : index
      %c0_27 = arith.constant 0 : index
      %c0_28 = arith.constant 0 : index
      %33 = vector.load %arg6[%c0_25, %c1_26, %c0_27, %c0_28] : memref<3x3x32x16xbf16, #tpu.memory_space<vmem>>, vector<1x1x32x16xbf16>
      %34 = vector.shape_cast %33 : vector<1x1x32x16xbf16> to vector<32x16xbf16>
      %c0_i32_29 = arith.constant 0 : i32
      %35 = arith.addi %arg14, %c0_i32_29 : i32
      %36 = arith.index_cast %35 : i32 to index
      %c0_30 = arith.constant 0 : index
      %c1_31 = arith.constant 1 : index
      %37 = vector.load %arg13[%36, %c0_30, %c1_31] : memref<5x16x5xbf16, #tpu.memory_space<vmem>>, vector<1x16x3xbf16>
      %38 = vector.shape_cast %37 : vector<1x16x3xbf16> to vector<16x3xbf16>
      %cst_32 = arith.constant dense<0.000000e+00> : vector<32x3xf32>
      %39 = tpu.matmul %34, %38, %cst_32 {dimension_numbers = #tpu.dot_dimension_numbers<[1], [0], [0], [1], [0, 0, 1, 1], [], []>} : vector<32x16xbf16>, vector<16x3xbf16>, vector<32x3xf32> -> vector<32x3xf32>
      %40 = arith.addf %32, %39 : vector<32x3xf32>
      %c0_33 = arith.constant 0 : index
      %c2_34 = arith.constant 2 : index
      %c0_35 = arith.constant 0 : index
      %c0_36 = arith.constant 0 : index
      %41 = vector.load %arg6[%c0_33, %c2_34, %c0_35, %c0_36] : memref<3x3x32x16xbf16, #tpu.memory_space<vmem>>, vector<1x1x32x16xbf16>
      %42 = vector.shape_cast %41 : vector<1x1x32x16xbf16> to vector<32x16xbf16>
      %c0_i32_37 = arith.constant 0 : i32
      %43 = arith.addi %arg14, %c0_i32_37 : i32
      %44 = arith.index_cast %43 : i32 to index
      %c0_38 = arith.constant 0 : index
      %c2_39 = arith.constant 2 : index
      %45 = vector.load %arg13[%44, %c0_38, %c2_39] : memref<5x16x5xbf16, #tpu.memory_space<vmem>>, vector<1x16x3xbf16>
      %46 = vector.shape_cast %45 : vector<1x16x3xbf16> to vector<16x3xbf16>
      %cst_40 = arith.constant dense<0.000000e+00> : vector<32x3xf32>
      %47 = tpu.matmul %42, %46, %cst_40 {dimension_numbers = #tpu.dot_dimension_numbers<[1], [0], [0], [1], [0, 0, 1, 1], [], []>} : vector<32x16xbf16>, vector<16x3xbf16>, vector<32x3xf32> -> vector<32x3xf32>
      %48 = arith.addf %40, %47 : vector<32x3xf32>
      %c1_41 = arith.constant 1 : index
      %c0_42 = arith.constant 0 : index
      %c0_43 = arith.constant 0 : index
      %c0_44 = arith.constant 0 : index
      %49 = vector.load %arg6[%c1_41, %c0_42, %c0_43, %c0_44] : memref<3x3x32x16xbf16, #tpu.memory_space<vmem>>, vector<1x1x32x16xbf16>
      %50 = vector.shape_cast %49 : vector<1x1x32x16xbf16> to vector<32x16xbf16>
      %c1_i32_45 = arith.constant 1 : i32
      %51 = arith.addi %arg14, %c1_i32_45 : i32
      %52 = arith.index_cast %51 : i32 to index
      %c0_46 = arith.constant 0 : index
      %c0_47 = arith.constant 0 : index
      %53 = vector.load %arg13[%52, %c0_46, %c0_47] : memref<5x16x5xbf16, #tpu.memory_space<vmem>>, vector<1x16x3xbf16>
      %54 = vector.shape_cast %53 : vector<1x16x3xbf16> to vector<16x3xbf16>
      %cst_48 = arith.constant dense<0.000000e+00> : vector<32x3xf32>
      %55 = tpu.matmul %50, %54, %cst_48 {dimension_numbers = #tpu.dot_dimension_numbers<[1], [0], [0], [1], [0, 0, 1, 1], [], []>} : vector<32x16xbf16>, vector<16x3xbf16>, vector<32x3xf32> -> vector<32x3xf32>
      %56 = arith.addf %48, %55 : vector<32x3xf32>
      %c1_49 = arith.constant 1 : index
      %c1_50 = arith.constant 1 : index
      %c0_51 = arith.constant 0 : index
      %c0_52 = arith.constant 0 : index
      %57 = vector.load %arg6[%c1_49, %c1_50, %c0_51, %c0_52] : memref<3x3x32x16xbf16, #tpu.memory_space<vmem>>, vector<1x1x32x16xbf16>
      %58 = vector.shape_cast %57 : vector<1x1x32x16xbf16> to vector<32x16xbf16>
      %c1_i32_53 = arith.constant 1 : i32
      %59 = arith.addi %arg14, %c1_i32_53 : i32
      %60 = arith.index_cast %59 : i32 to index
      %c0_54 = arith.constant 0 : index
      %c1_55 = arith.constant 1 : index
      %61 = vector.load %arg13[%60, %c0_54, %c1_55] : memref<5x16x5xbf16, #tpu.memory_space<vmem>>, vector<1x16x3xbf16>
      %62 = vector.shape_cast %61 : vector<1x16x3xbf16> to vector<16x3xbf16>
      %cst_56 = arith.constant dense<0.000000e+00> : vector<32x3xf32>
      %63 = tpu.matmul %58, %62, %cst_56 {dimension_numbers = #tpu.dot_dimension_numbers<[1], [0], [0], [1], [0, 0, 1, 1], [], []>} : vector<32x16xbf16>, vector<16x3xbf16>, vector<32x3xf32> -> vector<32x3xf32>
      %64 = arith.addf %56, %63 : vector<32x3xf32>
      %c1_57 = arith.constant 1 : index
      %c2_58 = arith.constant 2 : index
      %c0_59 = arith.constant 0 : index
      %c0_60 = arith.constant 0 : index
      %65 = vector.load %arg6[%c1_57, %c2_58, %c0_59, %c0_60] : memref<3x3x32x16xbf16, #tpu.memory_space<vmem>>, vector<1x1x32x16xbf16>
      %66 = vector.shape_cast %65 : vector<1x1x32x16xbf16> to vector<32x16xbf16>
      %c1_i32_61 = arith.constant 1 : i32
      %67 = arith.addi %arg14, %c1_i32_61 : i32
      %68 = arith.index_cast %67 : i32 to index
      %c0_62 = arith.constant 0 : index
      %c2_63 = arith.constant 2 : index
      %69 = vector.load %arg13[%68, %c0_62, %c2_63] : memref<5x16x5xbf16, #tpu.memory_space<vmem>>, vector<1x16x3xbf16>
      %70 = vector.shape_cast %69 : vector<1x16x3xbf16> to vector<16x3xbf16>
      %cst_64 = arith.constant dense<0.000000e+00> : vector<32x3xf32>
      %71 = tpu.matmul %66, %70, %cst_64 {dimension_numbers = #tpu.dot_dimension_numbers<[1], [0], [0], [1], [0, 0, 1, 1], [], []>} : vector<32x16xbf16>, vector<16x3xbf16>, vector<32x3xf32> -> vector<32x3xf32>
      %72 = arith.addf %64, %71 : vector<32x3xf32>
      %c2_65 = arith.constant 2 : index
      %c0_66 = arith.constant 0 : index
      %c0_67 = arith.constant 0 : index
      %c0_68 = arith.constant 0 : index
      %73 = vector.load %arg6[%c2_65, %c0_66, %c0_67, %c0_68] : memref<3x3x32x16xbf16, #tpu.memory_space<vmem>>, vector<1x1x32x16xbf16>
      %74 = vector.shape_cast %73 : vector<1x1x32x16xbf16> to vector<32x16xbf16>
      %c2_i32_69 = arith.constant 2 : i32
      %75 = arith.addi %arg14, %c2_i32_69 : i32
      %76 = arith.index_cast %75 : i32 to index
      %c0_70 = arith.constant 0 : index
      %c0_71 = arith.constant 0 : index
      %77 = vector.load %arg13[%76, %c0_70, %c0_71] : memref<5x16x5xbf16, #tpu.memory_space<vmem>>, vector<1x16x3xbf16>
      %78 = vector.shape_cast %77 : vector<1x16x3xbf16> to vector<16x3xbf16>
      %cst_72 = arith.constant dense<0.000000e+00> : vector<32x3xf32>
      %79 = tpu.matmul %74, %78, %cst_72 {dimension_numbers = #tpu.dot_dimension_numbers<[1], [0], [0], [1], [0, 0, 1, 1], [], []>} : vector<32x16xbf16>, vector<16x3xbf16>, vector<32x3xf32> -> vector<32x3xf32>
      %80 = arith.addf %72, %79 : vector<32x3xf32>
      %c2_73 = arith.constant 2 : index
      %c1_74 = arith.constant 1 : index
      %c0_75 = arith.constant 0 : index
      %c0_76 = arith.constant 0 : index
      %81 = vector.load %arg6[%c2_73, %c1_74, %c0_75, %c0_76] : memref<3x3x32x16xbf16, #tpu.memory_space<vmem>>, vector<1x1x32x16xbf16>
      %82 = vector.shape_cast %81 : vector<1x1x32x16xbf16> to vector<32x16xbf16>
      %c2_i32_77 = arith.constant 2 : i32
      %83 = arith.addi %arg14, %c2_i32_77 : i32
      %84 = arith.index_cast %83 : i32 to index
      %c0_78 = arith.constant 0 : index
      %c1_79 = arith.constant 1 : index
      %85 = vector.load %arg13[%84, %c0_78, %c1_79] : memref<5x16x5xbf16, #tpu.memory_space<vmem>>, vector<1x16x3xbf16>
      %86 = vector.shape_cast %85 : vector<1x16x3xbf16> to vector<16x3xbf16>
      %cst_80 = arith.constant dense<0.000000e+00> : vector<32x3xf32>
      %87 = tpu.matmul %82, %86, %cst_80 {dimension_numbers = #tpu.dot_dimension_numbers<[1], [0], [0], [1], [0, 0, 1, 1], [], []>} : vector<32x16xbf16>, vector<16x3xbf16>, vector<32x3xf32> -> vector<32x3xf32>
      %88 = arith.addf %80, %87 : vector<32x3xf32>
      %c2_81 = arith.constant 2 : index
      %c2_82 = arith.constant 2 : index
      %c0_83 = arith.constant 0 : index
      %c0_84 = arith.constant 0 : index
      %89 = vector.load %arg6[%c2_81, %c2_82, %c0_83, %c0_84] : memref<3x3x32x16xbf16, #tpu.memory_space<vmem>>, vector<1x1x32x16xbf16>
      %90 = vector.shape_cast %89 : vector<1x1x32x16xbf16> to vector<32x16xbf16>
      %c2_i32_85 = arith.constant 2 : i32
      %91 = arith.addi %arg14, %c2_i32_85 : i32
      %92 = arith.index_cast %91 : i32 to index
      %c0_86 = arith.constant 0 : index
      %c2_87 = arith.constant 2 : index
      %93 = vector.load %arg13[%92, %c0_86, %c2_87] : memref<5x16x5xbf16, #tpu.memory_space<vmem>>, vector<1x16x3xbf16>
      %94 = vector.shape_cast %93 : vector<1x16x3xbf16> to vector<16x3xbf16>
      %cst_88 = arith.constant dense<0.000000e+00> : vector<32x3xf32>
      %95 = tpu.matmul %90, %94, %cst_88 {dimension_numbers = #tpu.dot_dimension_numbers<[1], [0], [0], [1], [0, 0, 1, 1], [], []>} : vector<32x16xbf16>, vector<16x3xbf16>, vector<32x3xf32> -> vector<32x3xf32>
      %96 = arith.addf %88, %95 : vector<32x3xf32>
      %97 = vector.broadcast %5 : vector<32x1xf32> to vector<32x3xf32>
      %98 = arith.addf %96, %97 : vector<32x3xf32>
      %cst_89 = arith.constant 0.000000e+00 : f32
      %99 = vector.broadcast %cst_89 : f32 to vector<32x3xf32>
      %100 = arith.cmpf ogt, %98, %99 : vector<32x3xf32>
      %101 = vector.broadcast %2 : f32 to vector<32x3xf32>
      %102 = arith.mulf %101, %98 : vector<32x3xf32>
      %103 = arith.select %100, %98, %102 : vector<32x3xi1>, vector<32x3xf32>
      %c0_90 = arith.constant 0 : index
      %c0_91 = arith.constant 0 : index
      %104 = vector.load %arg8[%c0_90, %c0_91] : memref<5x32xbf16, #tpu.memory_space<vmem>>, vector<5x32xbf16>
      %105 = arith.truncf %103 : vector<32x3xf32> to vector<32x3xbf16>
      %cst_92 = arith.constant dense<0.000000e+00> : vector<5x3xf32>
      %106 = tpu.matmul %104, %105, %cst_92 {dimension_numbers = #tpu.dot_dimension_numbers<[1], [0], [0], [1], [0, 0, 1, 1], [], []>} : vector<5x32xbf16>, vector<32x3xbf16>, vector<5x3xf32> -> vector<5x3xf32>
      %107 = vector.broadcast %6 : vector<5x1xf32> to vector<5x3xf32>
      %108 = arith.addf %106, %107 : vector<5x3xf32>
      %cst_93 = arith.constant 0.000000e+00 : f32
      %109 = vector.broadcast %cst_93 : f32 to vector<5x3xf32>
      %110 = arith.subf %109, %108 : vector<5x3xf32>
      %111 = math.exp %110 : vector<5x3xf32>
      %cst_94 = arith.constant 1.000000e+00 : f32
      %112 = vector.broadcast %cst_94 : f32 to vector<5x3xf32>
      %113 = arith.addf %112, %111 : vector<5x3xf32>
      %114 = tpu.reciprocal %113 {approx = true} : vector<5x3xf32> -> vector<5x3xf32>
      %cst_95 = arith.constant 1.000000e+00 : f32
      %115 = vector.broadcast %cst_95 : f32 to vector<5x3xf32>
      %116 = arith.minimumf %114, %115 : vector<5x3xf32>
      %117 = tpu.iota {dimensions = array<i32: 0>} : vector<5x3xi32>
      %c0_i32_96 = arith.constant 0 : i32
      %118 = vector.broadcast %c0_i32_96 : i32 to vector<5x3xi32>
      %119 = arith.cmpi eq, %117, %118 : vector<5x3xi32>
      %120 = arith.select %119, %116, %108 : vector<5x3xi1>, vector<5x3xf32>
      %c0_97 = arith.constant 0 : index
      %121 = arith.index_cast %arg14 : i32 to index
      %c0_98 = arith.constant 0 : index
      %c0_99 = arith.constant 0 : index
      %122 = vector.load %arg11[%c0_97, %121, %c0_98, %c0_99] : memref<1x3x5x3xf32, #tpu.memory_space<vmem>>, vector<1x1x5x3xf32>
      %123 = vector.shape_cast %122 : vector<1x1x5x3xf32> to vector<5x3xf32>
      %124 = vector.shape_cast %120 : vector<5x3xf32> to vector<1x1x5x3xf32>
      tpu.vector_store %arg11[%c0_97, %121, %c0_98, %c0_99], %124 {strides = array<i32>} : memref<1x3x5x3xf32, #tpu.memory_space<vmem>>, vector<1x1x5x3xf32>,
    }
    %c3_i32_16 = arith.constant 3 : i32
    return
  }
  func.func @transform_0(%arg0: i32) -> (i32, i32, i32, i32) {
    %c0_i32 = arith.constant 0 : i32
    %c0_i32_0 = arith.constant 0 : i32
    %c0_i32_1 = arith.constant 0 : i32
    %c0_i32_2 = arith.constant 0 : i32
    return %arg0, %c0_i32, %c0_i32_0, %c0_i32_1 : i32, i32, i32, i32
  }
  func.func @transform_1(%arg0: i32) -> (i32, i32, i32, i32) {
    %c0_i32 = arith.constant 0 : i32
    %c0_i32_0 = arith.constant 0 : i32
    %c0_i32_1 = arith.constant 0 : i32
    %c0_i32_2 = arith.constant 0 : i32
    %c0_i32_3 = arith.constant 0 : i32
    return %c0_i32, %c0_i32_0, %c0_i32_1, %c0_i32_2 : i32, i32, i32, i32
  }
  func.func @transform_2(%arg0: i32) -> (i32, i32) {
    %c0_i32 = arith.constant 0 : i32
    %c0_i32_0 = arith.constant 0 : i32
    %c0_i32_1 = arith.constant 0 : i32
    return %c0_i32, %c0_i32_0 : i32, i32
  }
  func.func @transform_3(%arg0: i32) -> (i32, i32, i32, i32) {
    %c0_i32 = arith.constant 0 : i32
    %c0_i32_0 = arith.constant 0 : i32
    %c0_i32_1 = arith.constant 0 : i32
    %c0_i32_2 = arith.constant 0 : i32
    %c0_i32_3 = arith.constant 0 : i32
    return %c0_i32, %c0_i32_0, %c0_i32_1, %c0_i32_2 : i32, i32, i32, i32
  }
  func.func @transform_4(%arg0: i32) -> (i32, i32) {
    %c0_i32 = arith.constant 0 : i32
    %c0_i32_0 = arith.constant 0 : i32
    %c0_i32_1 = arith.constant 0 : i32
    return %c0_i32, %c0_i32_0 : i32, i32
  }
  func.func @transform_5(%arg0: i32) -> (i32, i32, i32, i32) {
    %c0_i32 = arith.constant 0 : i32
    %c0_i32_0 = arith.constant 0 : i32
    %c0_i32_1 = arith.constant 0 : i32
    %c0_i32_2 = arith.constant 0 : i32
    %c0_i32_3 = arith.constant 0 : i32
    return %c0_i32, %c0_i32_0, %c0_i32_1, %c0_i32_2 : i32, i32, i32, i32
  }
  func.func @transform_6(%arg0: i32) -> (i32, i32) {
    %c0_i32 = arith.constant 0 : i32
    %c0_i32_0 = arith.constant 0 : i32
    %c0_i32_1 = arith.constant 0 : i32
    return %c0_i32, %c0_i32_0 : i32, i32
  }
  func.func @transform_7(%arg0: i32) -> (i32, i32) {
    %c0_i32 = arith.constant 0 : i32
    %c0_i32_0 = arith.constant 0 : i32
    %c0_i32_1 = arith.constant 0 : i32
    return %c0_i32, %c0_i32_0 : i32, i32
  }
  func.func @transform_8(%arg0: i32) -> (i32, i32) {
    %c0_i32 = arith.constant 0 : i32
    %c0_i32_0 = arith.constant 0 : i32
    %c0_i32_1 = arith.constant 0 : i32
    return %c0_i32, %c0_i32_0 : i32, i32
  }
  func.func @transform_9(%arg0: i32) -> i32 {
    %c0_i32 = arith.constant 0 : i32
    %c0_i32_0 = arith.constant 0 : i32
    return %c0_i32 : i32
  }
  func.func @transform_10(%arg0: i32) -> (i32, i32, i32, i32) {
    %c0_i32 = arith.constant 0 : i32
    %c0_i32_0 = arith.constant 0 : i32
    %c0_i32_1 = arith.constant 0 : i32
    %c0_i32_2 = arith.constant 0 : i32
    return %arg0, %c0_i32, %c0_i32_0, %c0_i32_1 : i32, i32, i32, i32
  }
}

</mosaic_0001>

<llo_original>
// kernel: pnet_forward.1
$region0: #{pnet_forward.1}
  #allocation0 [shape = 'u32[]', space=smem, size = 0x4, offset = 0x4, fixed_abs, tag = 'smem constant byte address 0x4 - core index']
  #allocation1 [shape = 'u32[144,128]{1,0:T(1,128)}', space=vmem, size = 0x12000, scoped, tag = 'internal scratch']
  #allocation2 [shape = 'bf16[7,10,7]{2,1,0:T(8,128)(2,1)}', space=vmem, size = 0x7000, scoped, tag = 'scratch operand']
  #allocation3 [shape = 'bf16[5,16,5]{2,1,0:T(16,128)(2,1)}', space=vmem, size = 0x5000, scoped, tag = 'scratch operand']
  %s0 = inlined_call_operand.vmem [shape: bf16[2,16,3,16], index: 0, kind: input, shape index: {}]
  %s1 = inlined_call_operand.vmem [shape: bf16[3,3,10,3], index: 1, kind: input, shape index: {}]
  %s2 = inlined_call_operand.vmem [shape: f32[10,1], index: 2, kind: input, shape index: {}]
  %s3 = inlined_call_operand.vmem [shape: bf16[3,3,16,10], index: 3, kind: input, shape index: {}]
  %s4 = inlined_call_operand.vmem [shape: f32[16,1], index: 4, kind: input, shape index: {}]
  %s5 = inlined_call_operand.vmem [shape: bf16[3,3,32,16], index: 5, kind: input, shape index: {}]
  %s6 = inlined_call_operand.vmem [shape: f32[32,1], index: 6, kind: input, shape index: {}]
  %s7 = inlined_call_operand.vmem [shape: bf16[5,32], index: 7, kind: input, shape index: {}]
  %s8 = inlined_call_operand.vmem [shape: f32[5,1], index: 8, kind: input, shape index: {}]
  %s9 = inlined_call_operand.vmem [shape: f32[3], index: 9, kind: input, shape index: {}]
  %s10 = inlined_call_operand.vmem [shape: f32[2,3,5,3], index: 10, kind: output, shape index: {}]
  %s11 = sld [smem:[#allocation0]]
  $region98: #{pnet_forward.1} parent=0
    _
  %s13 = ssub.s32 1, %s11
  %s14 = scalar_select 0, %s13, %s11
  $region1: #{pnet_forward.1} parent=0
    #allocation4 [shape = 'u8[512]{0}', space=smem, size = 0x200, scoped, tag = 'input window, operand 9, single buffered']
    #allocation5 [shape = 's32[2]{0}', space=sflag, size = 0x8, scoped, tag = 'scoped memory for pnet_forward.1']
    %15 = vsyncpa [#allocation5], 0
    loop: start=0, step=1, limit=4
    $region2: #{pnet_forward.1} parent=1 // loop_pre_header
      _
    $region3: #{pnet_forward.1} parent=1 // loop_header
      %s17 = sphi 0, %s21
      %p18 = scmp.ge.s32.totalorder %s17, 4
      %s27 = sphi 0, %s29
      %s30 = sphi 0, %s27
      %s31 = sphi 0, %s30
      %s47 = sphi 0, %s31
      %s51 = sphi 0, %s51
      %s53 = sphi 0, %s51
      %s54 = sphi 0, %s53
      %s68 = sphi 0, %s54
      %s72 = sphi 0, %s72
      %s74 = sphi 0, %s72
      %s75 = sphi 0, %s74
      %s89 = sphi 0, %s75
      %s93 = sphi 0, %s93
      %s95 = sphi 0, %s93
      %s96 = sphi 0, %s95
      %s110 = sphi 0, %s96
      %s114 = sphi 0, %s114
      %s116 = sphi 0, %s114
      %s117 = sphi 0, %s116
      %s131 = sphi 0, %s117
      %s135 = sphi 0, %s135
      %s137 = sphi 0, %s135
      %s138 = sphi 0, %s137
      %s152 = sphi 0, %s138
      %s156 = sphi 0, %s156
      %s158 = sphi 0, %s156
      %s159 = sphi 0, %s158
      %s173 = sphi 0, %s159
      %s177 = sphi 0, %s177
      %s179 = sphi 0, %s177
      %s180 = sphi 0, %s179
      %s194 = sphi 0, %s180
      %s198 = sphi 0, %s198
      %s200 = sphi 0, %s198
      %s201 = sphi 0, %s200
      %s215 = sphi 0, %s201
      %s219 = sphi 0, %s219
      %s221 = sphi 0, %s219
      %s222 = sphi 0, %s221
      %s236 = sphi 0, %s222
      %s242 = sphi 0, %s244
      %s245 = sphi 0, %s242
      %s246 = sphi 0, %s245
      %s262 = sphi 0, %s246
    $region4: #{pnet_forward.1} parent=1 // loop_header_branch
      %20 = sbr.rel (%p18) target = $region8
    $region5: #{pnet_forward.1} parent=1 // loop_body
      %s22 = ssub.s32 %s17, 1
      %s23 = ssub.s32 %s17, 2
      %s24 = sadd.s32 %s17, 1
      %s25 = ssub.s32 %s17, %s24
      %p26 = scmp.eq.s32.totalorder %s25, 0
      %s28 = sadd.s32 %s27, 1
      %s29 = scalar_select %p26, %s27, %s28
      %p32 = pneg %p26
      %p33 = scmp.eq.s32.totalorder %s17, 1
      %p34 = por %p32, %p33
      %p35 = scmp.ne.s32.totalorder %s27, %s30
      %p36 = scmp.eq.s32.totalorder %s17, 0
      %p37 = por %p35, %p36
      %p38 = scmp.ne.s32.totalorder %s27, %s30
      %p39 = scmp.eq.s32.totalorder %s22, 1
      %p40 = por %p38, %p39
      %p41 = scmp.ne.s32.totalorder %s30, %s31
      %p42 = scmp.eq.s32.totalorder %s22, 0
      %p43 = por %p41, %p42
      %p44 = scmp.ne.s32.totalorder %s30, %s31
      %p45 = scmp.eq.s32.totalorder %s23, 1
      %p46 = por %p44, %p45
      %p48 = scmp.ne.s32.totalorder %s31, %s47
      %p49 = scmp.eq.s32.totalorder %s23, 0
      %p50 = por %p48, %p49
      %s52 = sadd.s32 %s51, 1
      %p55 = scmp.eq.s32.totalorder %s17, 1
      %p56 = scmp.ne.s32.totalorder %s51, %s53
      %p57 = scmp.eq.s32.totalorder %s17, 0
      %p58 = por %p56, %p57
      %p59 = scmp.ne.s32.totalorder %s51, %s53
      %p60 = scmp.eq.s32.totalorder %s22, 1
      %p61 = por %p59, %p60
      %p62 = scmp.ne.s32.totalorder %s53, %s54
      %p63 = scmp.eq.s32.totalorder %s22, 0
      %p64 = por %p62, %p63
      %p65 = scmp.ne.s32.totalorder %s53, %s54
      %p66 = scmp.eq.s32.totalorder %s23, 1
      %p67 = por %p65, %p66
      %p69 = scmp.ne.s32.totalorder %s54, %s68
      %p70 = scmp.eq.s32.totalorder %s23, 0
      %p71 = por %p69, %p70
      %s73 = sadd.s32 %s72, 1
      %p76 = scmp.eq.s32.totalorder %s17, 1
      %p77 = scmp.ne.s32.totalorder %s72, %s74
      %p78 = scmp.eq.s32.totalorder %s17, 0
      %p79 = por %p77, %p78
      %p80 = scmp.ne.s32.totalorder %s72, %s74
      %p81 = scmp.eq.s32.totalorder %s22, 1
      %p82 = por %p80, %p81
      %p83 = scmp.ne.s32.totalorder %s74, %s75
      %p84 = scmp.eq.s32.totalorder %s22, 0
      %p85 = por %p83, %p84
      %p86 = scmp.ne.s32.totalorder %s74, %s75
      %p87 = scmp.eq.s32.totalorder %s23, 1
      %p88 = por %p86, %p87
      %p90 = scmp.ne.s32.totalorder %s75, %s89
      %p91 = scmp.eq.s32.totalorder %s23, 0
      %p92 = por %p90, %p91
      %s94 = sadd.s32 %s93, 1
      %p97 = scmp.eq.s32.totalorder %s17, 1
      %p98 = scmp.ne.s32.totalorder %s93, %s95
      %p99 = scmp.eq.s32.totalorder %s17, 0
      %p100 = por %p98, %p99
      %p101 = scmp.ne.s32.totalorder %s93, %s95
      %p102 = scmp.eq.s32.totalorder %s22, 1
      %p103 = por %p101, %p102
      %p104 = scmp.ne.s32.totalorder %s95, %s96
      %p105 = scmp.eq.s32.totalorder %s22, 0
      %p106 = por %p104, %p105
      %p107 = scmp.ne.s32.totalorder %s95, %s96
      %p108 = scmp.eq.s32.totalorder %s23, 1
      %p109 = por %p107, %p108
      %p111 = scmp.ne.s32.totalorder %s96, %s110
      %p112 = scmp.eq.s32.totalorder %s23, 0
      %p113 = por %p111, %p112
      %s115 = sadd.s32 %s114, 1
      %p118 = scmp.eq.s32.totalorder %s17, 1
      %p119 = scmp.ne.s32.totalorder %s114, %s116
      %p120 = scmp.eq.s32.totalorder %s17, 0
      %p121 = por %p119, %p120
      %p122 = scmp.ne.s32.totalorder %s114, %s116
      %p123 = scmp.eq.s32.totalorder %s22, 1
      %p124 = por %p122, %p123
      %p125 = scmp.ne.s32.totalorder %s116, %s117
      %p126 = scmp.eq.s32.totalorder %s22, 0
      %p127 = por %p125, %p126
      %p128 = scmp.ne.s32.totalorder %s116, %s117
      %p129 = scmp.eq.s32.totalorder %s23, 1
      %p130 = por %p128, %p129
      %p132 = scmp.ne.s32.totalorder %s117, %s131
      %p133 = scmp.eq.s32.totalorder %s23, 0
      %p134 = por %p132, %p133
      %s136 = sadd.s32 %s135, 1
      %p139 = scmp.eq.s32.totalorder %s17, 1
      %p140 = scmp.ne.s32.totalorder %s135, %s137
      %p141 = scmp.eq.s32.totalorder %s17, 0
      %p142 = por %p140, %p141
      %p143 = scmp.ne.s32.totalorder %s135, %s137
      %p144 = scmp.eq.s32.totalorder %s22, 1
      %p145 = por %p143, %p144
      %p146 = scmp.ne.s32.totalorder %s137, %s138
      %p147 = scmp.eq.s32.totalorder %s22, 0
      %p148 = por %p146, %p147
      %p149 = scmp.ne.s32.totalorder %s137, %s138
      %p150 = scmp.eq.s32.totalorder %s23, 1
      %p151 = por %p149, %p150
      %p153 = scmp.ne.s32.totalorder %s138, %s152
      %p154 = scmp.eq.s32.totalorder %s23, 0
      %p155 = por %p153, %p154
      %s157 = sadd.s32 %s156, 1
      %p160 = scmp.eq.s32.totalorder %s17, 1
      %p161 = scmp.ne.s32.totalorder %s156, %s158
      %p162 = scmp.eq.s32.totalorder %s17, 0
      %p163 = por %p161, %p162
      %p164 = scmp.ne.s32.totalorder %s156, %s158
      %p165 = scmp.eq.s32.totalorder %s22, 1
      %p166 = por %p164, %p165
      %p167 = scmp.ne.s32.totalorder %s158, %s159
      %p168 = scmp.eq.s32.totalorder %s22, 0
      %p169 = por %p167, %p168
      %p170 = scmp.ne.s32.totalorder %s158, %s159
      %p171 = scmp.eq.s32.totalorder %s23, 1
      %p172 = por %p170, %p171
      %p174 = scmp.ne.s32.totalorder %s159, %s173
      %p175 = scmp.eq.s32.totalorder %s23, 0
      %p176 = por %p174, %p175
      %s178 = sadd.s32 %s177, 1
      %p181 = scmp.eq.s32.totalorder %s17, 1
      %p182 = scmp.ne.s32.totalorder %s177, %s179
      %p183 = scmp.eq.s32.totalorder %s17, 0
      %p184 = por %p182, %p183
      %p185 = scmp.ne.s32.totalorder %s177, %s179
      %p186 = scmp.eq.s32.totalorder %s22, 1
      %p187 = por %p185, %p186
      %p188 = scmp.ne.s32.totalorder %s179, %s180
      %p189 = scmp.eq.s32.totalorder %s22, 0
      %p190 = por %p188, %p189
      %p191 = scmp.ne.s32.totalorder %s179, %s180
      %p192 = scmp.eq.s32.totalorder %s23, 1
      %p193 = por %p191, %p192
      %p195 = scmp.ne.s32.totalorder %s180, %s194
      %p196 = scmp.eq.s32.totalorder %s23, 0
      %p197 = por %p195, %p196
      %s199 = sadd.s32 %s198, 1
      %p202 = scmp.eq.s32.totalorder %s17, 1
      %p203 = scmp.ne.s32.totalorder %s198, %s200
      %p204 = scmp.eq.s32.totalorder %s17, 0
      %p205 = por %p203, %p204
      %p206 = scmp.ne.s32.totalorder %s198, %s200
      %p207 = scmp.eq.s32.totalorder %s22, 1
      %p208 = por %p206, %p207
      %p209 = scmp.ne.s32.totalorder %s200, %s201
      %p210 = scmp.eq.s32.totalorder %s22, 0
      %p211 = por %p209, %p210
      %p212 = scmp.ne.s32.totalorder %s200, %s201
      %p213 = scmp.eq.s32.totalorder %s23, 1
      %p214 = por %p212, %p213
      %p216 = scmp.ne.s32.totalorder %s201, %s215
      %p217 = scmp.eq.s32.totalorder %s23, 0
      %p218 = por %p216, %p217
      %s220 = sadd.s32 %s219, 1
      %p223 = scmp.eq.s32.totalorder %s17, 1
      %p224 = scmp.ne.s32.totalorder %s219, %s221
      %p225 = scmp.eq.s32.totalorder %s17, 0
      %p226 = por %p224, %p225
      %p227 = scmp.ne.s32.totalorder %s219, %s221
      %p228 = scmp.eq.s32.totalorder %s22, 1
      %p229 = por %p227, %p228
      %p230 = scmp.ne.s32.totalorder %s221, %s222
      %p231 = scmp.eq.s32.totalorder %s22, 0
      %p232 = por %p230, %p231
      %p233 = scmp.ne.s32.totalorder %s221, %s222
      %p234 = scmp.eq.s32.totalorder %s23, 1
      %p235 = por %p233, %p234
      %p237 = scmp.ne.s32.totalorder %s222, %s236
      %p238 = scmp.eq.s32.totalorder %s23, 0
      %p239 = por %p237, %p238
      %s240 = ssub.s32 %s17, %s24
      %p241 = scmp.eq.s32.totalorder %s240, 0
      %s243 = sadd.s32 %s242, 1
      %s244 = scalar_select %p241, %s242, %s243
      %p247 = pneg %p241
      %p248 = scmp.eq.s32.totalorder %s17, 1
      %p249 = por %p247, %p248
      %p250 = scmp.ne.s32.totalorder %s242, %s245
      %p251 = scmp.eq.s32.totalorder %s17, 0
      %p252 = por %p250, %p251
      %p253 = scmp.ne.s32.totalorder %s242, %s245
      %p254 = scmp.eq.s32.totalorder %s22, 1
      %p255 = por %p253, %p254
      %p256 = scmp.ne.s32.totalorder %s245, %s246
      %p257 = scmp.eq.s32.totalorder %s22, 0
      %p258 = por %p256, %p257
      %p259 = scmp.ne.s32.totalorder %s245, %s246
      %p260 = scmp.eq.s32.totalorder %s23, 1
      %p261 = por %p259, %p260
      %p263 = scmp.ne.s32.totalorder %s246, %s262
      %p264 = scmp.eq.s32.totalorder %s23, 0
      %p265 = por %p263, %p264
      %p266 = scmp.le.s32.totalorder 1, %s17
      %p267 = scmp.lt.s32.totalorder %s17, 3
      %p268 = pnand %p266, %p267
      %p269 = pneg %p268
      // Predicated region
      $region9: #{pnet_forward.1} parent=5 // pred_check
        _
      $region10: #{pnet_forward.1} parent=5 // pred_check_branch
        %271 = sbr.rel (%p268) target = $region12
      $region11: #{pnet_forward.1} parent=5 // pred_region
        %s272 = ssub.s32 %s17, 1
        // Predicated region
        $region13: #{pnet_forward.1} parent=11 // pred_check
          %p273 = pneg %p64
        $region14: #{pnet_forward.1} parent=11 // pred_check_branch
          %275 = sbr.rel (%p273) target = $region16
        $region15: #{pnet_forward.1} parent=11 // pred_region
          _
        $region16: #{pnet_forward.1} parent=11 // pred_fallthru
          _
        // Predicated region
        $region17: #{pnet_forward.1} parent=11 // pred_check
          %p276 = pneg %p85
        $region18: #{pnet_forward.1} parent=11 // pred_check_branch
          %278 = sbr.rel (%p276) target = $region20
        $region19: #{pnet_forward.1} parent=11 // pred_region
          _
        $region20: #{pnet_forward.1} parent=11 // pred_fallthru
          _
        // Predicated region
        $region21: #{pnet_forward.1} parent=11 // pred_check
          %p279 = pneg %p106
        $region22: #{pnet_forward.1} parent=11 // pred_check_branch
          %281 = sbr.rel (%p279) target = $region24
        $region23: #{pnet_forward.1} parent=11 // pred_region
          _
        $region24: #{pnet_forward.1} parent=11 // pred_fallthru
          _
        // Predicated region
        $region25: #{pnet_forward.1} parent=11 // pred_check
          %p282 = pneg %p127
        $region26: #{pnet_forward.1} parent=11 // pred_check_branch
          %284 = sbr.rel (%p282) target = $region28
        $region27: #{pnet_forward.1} parent=11 // pred_region
          _
        $region28: #{pnet_forward.1} parent=11 // pred_fallthru
          _
        // Predicated region
        $region29: #{pnet_forward.1} parent=11 // pred_check
          %p285 = pneg %p148
        $region30: #{pnet_forward.1} parent=11 // pred_check_branch
          %287 = sbr.rel (%p285) target = $region32
        $region31: #{pnet_forward.1} parent=11 // pred_region
          _
        $region32: #{pnet_forward.1} parent=11 // pred_fallthru
          _
        // Predicated region
        $region33: #{pnet_forward.1} parent=11 // pred_check
          %p288 = pneg %p169
        $region34: #{pnet_forward.1} parent=11 // pred_check_branch
          %290 = sbr.rel (%p288) target = $region36
        $region35: #{pnet_forward.1} parent=11 // pred_region
          _
        $region36: #{pnet_forward.1} parent=11 // pred_fallthru
          _
        // Predicated region
        $region37: #{pnet_forward.1} parent=11 // pred_check
          %p291 = pneg %p190
        $region38: #{pnet_forward.1} parent=11 // pred_check_branch
          %293 = sbr.rel (%p291) target = $region40
        $region39: #{pnet_forward.1} parent=11 // pred_region
          _
        $region40: #{pnet_forward.1} parent=11 // pred_fallthru
          _
        // Predicated region
        $region41: #{pnet_forward.1} parent=11 // pred_check
          %p294 = pneg %p211
        $region42: #{pnet_forward.1} parent=11 // pred_check_branch
          %296 = sbr.rel (%p294) target = $region44
        $region43: #{pnet_forward.1} parent=11 // pred_region
          _
        $region44: #{pnet_forward.1} parent=11 // pred_fallthru
          _
        // Predicated region
        $region45: #{pnet_forward.1} parent=11 // pred_check
          %p297 = pneg %p232
        $region46: #{pnet_forward.1} parent=11 // pred_check_branch
          %299 = sbr.rel (%p297) target = $region48
        $region47: #{pnet_forward.1} parent=11 // pred_region
          %s301 = ssub.s32 16, 16
          %302 = vsyncadd [#allocation5], %s301
          %s304 = sshll.u32 %s9, 4
          %s305 = int_to_ptr.vmem [resolvable:$true] %s304
          %307 = dma.vmem_to_smem %s305, 16, [#allocation4], [#allocation5]
        $region48: #{pnet_forward.1} parent=11 // pred_fallthru
          _
      $region12: #{pnet_forward.1} parent=5 // pred_fallthru
        _
      %p308 = scmp.lt.s32.totalorder %s17, 2
      // Predicated region
      $region49: #{pnet_forward.1} parent=5 // pred_check
        %p309 = pneg %p308
      $region50: #{pnet_forward.1} parent=5 // pred_check_branch
        %311 = sbr.rel (%p309) target = $region52
      $region51: #{pnet_forward.1} parent=5 // pred_region
        // Predicated region
        $region53: #{pnet_forward.1} parent=51 // pred_check
          %p312 = pneg %p37
        $region54: #{pnet_forward.1} parent=51 // pred_check_branch
          %314 = sbr.rel (%p312) target = $region56
        $region55: #{pnet_forward.1} parent=51 // pred_region
          %p315 = scmp.lt.s32.totalorder %s17, 1
          %s316 = scalar_select %p315, %s17, 1
          %s317 = smul.addr %s316, 16
          %s318 = smul.addr %s317, 2
          %s319 = scalar_lea.vmem %s0, %s318
        $region56: #{pnet_forward.1} parent=51 // pred_fallthru
          _
      $region52: #{pnet_forward.1} parent=5 // pred_fallthru
        _
      %p320 = scmp.le.s32.totalorder 1, %s17
      %p321 = scmp.lt.s32.totalorder %s17, 3
      %p322 = pnand %p320, %p321
      %p323 = pneg %p322
      // Predicated region
      $region57: #{pnet_forward.1} parent=5 // pred_check
        _
      $region58: #{pnet_forward.1} parent=5 // pred_check_branch
        %325 = sbr.rel (%p322) target = $region60
      $region59: #{pnet_forward.1} parent=5 // pred_region
        %s326 = ssub.s32 %s17, 1
        // Predicated region
        $region61: #{pnet_forward.1} parent=59 // pred_check
          %p327 = pneg %p232
        $region62: #{pnet_forward.1} parent=59 // pred_check_branch
          %329 = sbr.rel (%p327) target = $region64
        $region63: #{pnet_forward.1} parent=59 // pred_region
          %330 = dma.done [#allocation5], 16
        $region64: #{pnet_forward.1} parent=59 // pred_fallthru
          _
        %331 = sfence
        %p332 = scmp.lt.s32.totalorder %s22, 1
        %s333 = scalar_select %p332, %s22, 1
        %s334 = smul.addr %s333, 16
        %s335 = smul.addr %s334, 2
        %s336 = scalar_lea.vmem %s0, %s335
        %p337 = pneg %p43
        %p338 = pneg %p40
        %p339 = pneg %p64
        %p340 = pneg %p61
        %p341 = pneg %p85
        %p342 = pneg %p82
        %p343 = pneg %p106
        %p344 = pneg %p103
        %p345 = pneg %p127
        %p346 = pneg %p124
        %p347 = pneg %p148
        %p348 = pneg %p145
        %p349 = pneg %p169
        %p350 = pneg %p166
        %p351 = pneg %p190
        %p352 = pneg %p187
        %p353 = pneg %p211
        %p354 = pneg %p208
        %p355 = pneg %p232
        %p356 = pneg %p229
        %p357 = pneg %p258
        %p358 = pneg %p255
        %p359 = scmp.lt.s32.totalorder %s22, 1
        %s360 = scalar_select %p359, %s22, 1
        %s361 = smul.addr %s360, 3
        %s362 = smul.addr %s361, 8
        %s363 = scalar_lea.vmem %s10, %s362
        %p364 = scmp.lt.s32.totalorder %s22, 1
        %s365 = scalar_select %p364, %s22, 1
        %s366 = smul.addr %s365, 16
        %s367 = smul.addr %s366, 2
        %s368 = scalar_lea.vmem %s0, %s367
        %p369 = scmp.lt.s32.totalorder %s22, 1
        %s370 = scalar_select %p369, %s22, 1
        %s371 = smul.addr %s370, 3
        %s372 = smul.addr %s371, 8
        %s373 = scalar_lea.vmem %s10, %s372
        %s375 = sld [smem:[#allocation4]]
        %s376 = sld [smem:[#allocation4 + $0x1]]
        %s377 = sld [smem:[#allocation4 + $0x2]]
        %v378 = vld [vmem:[%s2] sm:$0xff]
        %v379 = vld [vmem:[%s2 + $0x8] sm:$0x3]
        %v380 = vld [vmem:[%s4] sm:$0xff]
        %v381 = vld [vmem:[%s4 + $0x8] sm:$0xff]
        %v382 = vld [vmem:[%s6] sm:$0xff]
        %v383 = vld [vmem:[%s6 + $0x8] sm:$0xff]
        %v384 = vld [vmem:[%s6 + $0x10] sm:$0xff]
        %v385 = vld [vmem:[%s6 + $0x18] sm:$0xff]
        %v386 = vld [vmem:[%s8] sm:$0x1f]
        %v387 = vlaneseq
        %v388 = vshrl.u32 %v387, 7
        %v389 = vadd.s32 %v388, 8
        %v390 = vlaneseq
        %v391 = vand.u32 %v390, 127
        %v392 = vmul.u32 %v391, 2
        %vm393 = vcmp.eq.s32.totalorder %v388, %v392
        %vm394 = vcmp.eq.s32.totalorder %v389, %v392
        %v395 = vsel %vm393, 1, 0
        %v396 = vsel %vm394, 1, 0
        %v397 = vcvt.s32.f32 %v395
        %v398 = vcvt.s32.f32 %v396
        %v399 = vadd.s32 %v392, 1
        %vm400 = vcmp.eq.s32.totalorder %v388, %v399
        %vm401 = vcmp.eq.s32.totalorder %v389, %v399
        %v402 = vsel %vm400, 1, 0
        %v403 = vsel %vm401, 1, 0
        %v404 = vcvt.s32.f32 %v402
        %v405 = vcvt.s32.f32 %v403
        loop: start=0, step=1, limit=7
        $region65: #{pnet_forward.1} parent=59 // loop_pre_header
          _
        $region66: #{pnet_forward.1} parent=59 // loop_header
          %s407 = sphi 0, %s411
          %p408 = scmp.ge.s32.totalorder %s407, 7
        $region67: #{pnet_forward.1} parent=59 // loop_header_branch
          %410 = sbr.rel (%p408) target = $region71
        $region68: #{pnet_forward.1} parent=59 // loop_body
          %s412 = smul.u32 %s407, 2
          %v413 = vld [vmem:[%s1] sm:$0xf]
          %v414 = vld [vmem:[%s1 + $0x4] sm:$0x1]
          %s415 = smul.addr %s412, 2
          %s416 = scalar_lea.vmem %s368, %s415
          %v417 = vld [vmem:[%s416] sm:$0x3]
          %s418 = scalar_lea.vmem %s1, 8
          %v419 = vld [vmem:[%s418] sm:$0xf]
          %v420 = vld [vmem:[%s418 + $0x4] sm:$0x1]
          %v423 = vunpack.c.l.b16 %v419
          %v424 = vunpack.c.l.b16 %v420
          %v425 = vpack.c.b16 %v424, %v423
          %v428 = vunpack.c.l.s4 1983009808
          %v429 = vunpack.c.0.s8 %v428
          %v430 = vlaneseq
          %v431 = vshrl.u32 %v430, 7
          %v432 = vsub.s32 %v429, %v431
          %v433 = vrot.slane %v417, %v432
          %434 = vrot.lane.b32.xlu0 %v433, 127
          %v435 = vpop.permute.xlu0 %434
          %vm436 = vcmask 23552
          %v438 = vsel %vm436, %v425, 0
          %vm440 = vcmask 1040384
          %vm441 = vcmask 1041408
          %v442 = vsel %vm440, 4294967295, 65535
          %v443 = vsel %vm441, %v442, 0
          %v445 = vand.u32 %v435, %v443
          %447 = vmatprep.subr.bf16.mxu0 0
          %448 = vmatpush1.bf16.msra.mxu0 %v445
          %449 = vmatprep.subr.bf16.mxu0 0
          %450 = vmatpush1.bf16.msra.mxu0 0
          %451 = vmatprep.subr.bf16.mxu0 0
          %452 = vmatpush1.bf16.msra.mxu0 0
          %453 = vmatprep.subr.bf16.mxu0 0
          %454 = vmatpush1.bf16.msra.mxu0 0
          %455 = vmatprep.subr.bf16.mxu0 0
          %456 = vmatpush1.bf16.msra.mxu0 0
          %457 = vmatprep.subr.bf16.mxu0 0
          %458 = vmatpush1.bf16.msra.mxu0 0
          %459 = vmatprep.subr.bf16.mxu0 0
          %460 = vmatpush1.bf16.msra.mxu0 0
          %461 = vmatprep.subr.bf16.mxu0 0
          %462 = vmatpush1.bf16.msra.mxu0 0
          %463 = vmatprep.subr.bf16.mxu0 0
          %464 = vmatpush1.bf16.msra.mxu0 0
          %465 = vmatprep.subr.bf16.mxu0 0
          %466 = vmatpush1.bf16.msra.mxu0 0
          %467 = vmatprep.subr.bf16.mxu0 0
          %468 = vmatpush1.bf16.msra.mxu0 0
          %469 = vmatprep.subr.bf16.mxu0 0
          %470 = vmatpush1.bf16.msra.mxu0 0
          %471 = vmatprep.subr.bf16.mxu0 0
          %472 = vmatpush1.bf16.msra.mxu0 0
          %473 = vmatprep.subr.bf16.mxu0 0
          %474 = vmatpush1.bf16.msra.mxu0 0
          %475 = vmatprep.subr.bf16.mxu0 0
          %476 = vmatpush1.bf16.msra.mxu0 0
          %477 = vmatprep.subr.bf16.mxu0 0
          %478 = vmatpush1.bf16.msra.mxu0 0
          %479 = vmatprep.mubr.bf16.mxu0 0
          %480 = vmatmul.mubr.bf16.gmra.mrb[0].mxu0 %v438
          %v481 = vpop.f32.mrb[0].mxu0
          %v482 = vadd.f32 0.0, %v481
          %v483 = vpop.f32.mrb[0].mxu0
          %v484 = vpop.f32.mrb[0].mxu0
          %v485 = vadd.f32 0.0, %v484
          %v486 = vpop.f32.mrb[0].mxu0
          %487 = vdwg.mxu0
          %v490 = vunpack.c.l.b16 %v413
          %v491 = vunpack.c.l.b16 %v414
          %v492 = vpack.c.b16 %v491, %v490
          %v494 = vsel %vm436, %v492, 0
          %v497 = vand.u32 %v417, %v443
          %499 = vmatprep.subr.bf16.mxu0 0
          %500 = vmatpush1.bf16.msra.mxu0 %v497
          %501 = vmatprep.subr.bf16.mxu0 0
          %502 = vmatpush1.bf16.msra.mxu0 0
          %503 = vmatprep.subr.bf16.mxu0 0
          %504 = vmatpush1.bf16.msra.mxu0 0
          %505 = vmatprep.subr.bf16.mxu0 0
          %506 = vmatpush1.bf16.msra.mxu0 0
          %507 = vmatprep.subr.bf16.mxu0 0
          %508 = vmatpush1.bf16.msra.mxu0 0
          %509 = vmatprep.subr.bf16.mxu0 0
          %510 = vmatpush1.bf16.msra.mxu0 0
          %511 = vmatprep.subr.bf16.mxu0 0
          %512 = vmatpush1.bf16.msra.mxu0 0
          %513 = vmatprep.subr.bf16.mxu0 0
          %514 = vmatpush1.bf16.msra.mxu0 0
          %515 = vmatprep.subr.bf16.mxu0 0
          %516 = vmatpush1.bf16.msra.mxu0 0
          %517 = vmatprep.subr.bf16.mxu0 0
          %518 = vmatpush1.bf16.msra.mxu0 0
          %519 = vmatprep.subr.bf16.mxu0 0
          %520 = vmatpush1.bf16.msra.mxu0 0
          %521 = vmatprep.subr.bf16.mxu0 0
          %522 = vmatpush1.bf16.msra.mxu0 0
          %523 = vmatprep.subr.bf16.mxu0 0
          %524 = vmatpush1.bf16.msra.mxu0 0
          %525 = vmatprep.subr.bf16.mxu0 0
          %526 = vmatpush1.bf16.msra.mxu0 0
          %527 = vmatprep.subr.bf16.mxu0 0
          %528 = vmatpush1.bf16.msra.mxu0 0
          %529 = vmatprep.subr.bf16.mxu0 0
          %530 = vmatpush1.bf16.msra.mxu0 0
          %531 = vmatprep.mubr.bf16.mxu0 0
          %532 = vmatmul.mubr.bf16.gmra.mrb[0].mxu0 %v494
          %v533 = vpop.f32.mrb[0].mxu0
          %v534 = vadd.f32 %v482, %v533
          %v535 = vpop.f32.mrb[0].mxu0
          %v536 = vpop.f32.mrb[0].mxu0
          %v537 = vadd.f32 %v485, %v536
          %v538 = vpop.f32.mrb[0].mxu0
          %539 = vdwg.mxu0
          %s540 = scalar_lea.vmem %s1, 16
          %v541 = vld [vmem:[%s540] sm:$0xf]
          %v542 = vld [vmem:[%s540 + $0x4] sm:$0x1]
          %v543 = vld [vmem:[%s416] sm:$0x3]
          %v546 = vunpack.c.l.b16 %v541
          %v547 = vunpack.c.l.b16 %v542
          %v548 = vpack.c.b16 %v547, %v546
          %v551 = vunpack.c.l.s4 1983009808
          %v552 = vunpack.c.0.s8 %v551
          %v553 = vlaneseq
          %v554 = vshrl.u32 %v553, 7
          %v555 = vsub.s32 %v552, %v554
          %v556 = vrot.slane %v543, %v555
          %557 = vrot.lane.b32.xlu0 %v556, 126
          %v558 = vpop.permute.xlu0 %557
          %v560 = vsel %vm436, %v548, 0
          %v563 = vand.u32 %v558, %v443
          %565 = vmatprep.subr.bf16.mxu0 0
          %566 = vmatpush1.bf16.msra.mxu0 %v563
          %567 = vmatprep.subr.bf16.mxu0 0
          %568 = vmatpush1.bf16.msra.mxu0 0
          %569 = vmatprep.subr.bf16.mxu0 0
          %570 = vmatpush1.bf16.msra.mxu0 0
          %571 = vmatprep.subr.bf16.mxu0 0
          %572 = vmatpush1.bf16.msra.mxu0 0
          %573 = vmatprep.subr.bf16.mxu0 0
          %574 = vmatpush1.bf16.msra.mxu0 0
          %575 = vmatprep.subr.bf16.mxu0 0
          %576 = vmatpush1.bf16.msra.mxu0 0
          %577 = vmatprep.subr.bf16.mxu0 0
          %578 = vmatpush1.bf16.msra.mxu0 0
          %579 = vmatprep.subr.bf16.mxu0 0
          %580 = vmatpush1.bf16.msra.mxu0 0
          %581 = vmatprep.subr.bf16.mxu0 0
          %582 = vmatpush1.bf16.msra.mxu0 0
          %583 = vmatprep.subr.bf16.mxu0 0
          %584 = vmatpush1.bf16.msra.mxu0 0
          %585 = vmatprep.subr.bf16.mxu0 0
          %586 = vmatpush1.bf16.msra.mxu0 0
          %587 = vmatprep.subr.bf16.mxu0 0
          %588 = vmatpush1.bf16.msra.mxu0 0
          %589 = vmatprep.subr.bf16.mxu0 0
          %590 = vmatpush1.bf16.msra.mxu0 0
          %591 = vmatprep.subr.bf16.mxu0 0
          %592 = vmatpush1.bf16.msra.mxu0 0
          %593 = vmatprep.subr.bf16.mxu0 0
          %594 = vmatpush1.bf16.msra.mxu0 0
          %595 = vmatprep.subr.bf16.mxu0 0
          %596 = vmatpush1.bf16.msra.mxu0 0
          %597 = vmatprep.mubr.bf16.mxu0 0
          %598 = vmatmul.mubr.bf16.gmra.mrb[0].mxu0 %v560
          %v599 = vpop.f32.mrb[0].mxu0
          %v600 = vadd.f32 0.0, %v599
          %v601 = vpop.f32.mrb[0].mxu0
          %v602 = vpop.f32.mrb[0].mxu0
          %v603 = vadd.f32 0.0, %v602
          %v604 = vpop.f32.mrb[0].mxu0
          %605 = vdwg.mxu0
          %v606 = vadd.f32 %v534, %v600
          %v607 = vadd.f32 %v537, %v603
          %s608 = scalar_lea.vmem %s1, 24
          %v609 = vld [vmem:[%s608] sm:$0xf]
          %v610 = vld [vmem:[%s608 + $0x4] sm:$0x1]
          %s611 = sadd.s32 %s412, 1
          %s612 = smul.addr %s611, 2
          %s613 = scalar_lea.vmem %s368, %s612
          %v614 = vld [vmem:[%s613] sm:$0x3]
          %v617 = vunpack.c.l.b16 %v609
          %v618 = vunpack.c.l.b16 %v610
          %v619 = vpack.c.b16 %v618, %v617
          %v621 = vsel %vm436, %v619, 0
          %v624 = vand.u32 %v614, %v443
          %626 = vmatprep.subr.bf16.mxu0 0
          %627 = vmatpush1.bf16.msra.mxu0 %v624
          %628 = vmatprep.subr.bf16.mxu0 0
          %629 = vmatpush1.bf16.msra.mxu0 0
          %630 = vmatprep.subr.bf16.mxu0 0
          %631 = vmatpush1.bf16.msra.mxu0 0
          %632 = vmatprep.subr.bf16.mxu0 0
          %633 = vmatpush1.bf16.msra.mxu0 0
          %634 = vmatprep.subr.bf16.mxu0 0
          %635 = vmatpush1.bf16.msra.mxu0 0
          %636 = vmatprep.subr.bf16.mxu0 0
          %637 = vmatpush1.bf16.msra.mxu0 0
          %638 = vmatprep.subr.bf16.mxu0 0
          %639 = vmatpush1.bf16.msra.mxu0 0
          %640 = vmatprep.subr.bf16.mxu0 0
          %641 = vmatpush1.bf16.msra.mxu0 0
          %642 = vmatprep.subr.bf16.mxu0 0
          %643 = vmatpush1.bf16.msra.mxu0 0
          %644 = vmatprep.subr.bf16.mxu0 0
          %645 = vmatpush1.bf16.msra.mxu0 0
          %646 = vmatprep.subr.bf16.mxu0 0
          %647 = vmatpush1.bf16.msra.mxu0 0
          %648 = vmatprep.subr.bf16.mxu0 0
          %649 = vmatpush1.bf16.msra.mxu0 0
          %650 = vmatprep.subr.bf16.mxu0 0
          %651 = vmatpush1.bf16.msra.mxu0 0
          %652 = vmatprep.subr.bf16.mxu0 0
          %653 = vmatpush1.bf16.msra.mxu0 0
          %654 = vmatprep.subr.bf16.mxu0 0
          %655 = vmatpush1.bf16.msra.mxu0 0
          %656 = vmatprep.subr.bf16.mxu0 0
          %657 = vmatpush1.bf16.msra.mxu0 0
          %658 = vmatprep.mubr.bf16.mxu0 0
          %659 = vmatmul.mubr.bf16.gmra.mrb[0].mxu0 %v621
          %v660 = vpop.f32.mrb[0].mxu0
          %v661 = vadd.f32 0.0, %v660
          %v662 = vpop.f32.mrb[0].mxu0
          %v663 = vpop.f32.mrb[0].mxu0
          %v664 = vadd.f32 0.0, %v663
          %v665 = vpop.f32.mrb[0].mxu0
          %666 = vdwg.mxu0
          %v667 = vadd.f32 %v606, %v661
          %v668 = vadd.f32 %v607, %v664
          %s669 = scalar_lea.vmem %s1, 32
          %v670 = vld [vmem:[%s669] sm:$0xf]
          %v671 = vld [vmem:[%s669 + $0x4] sm:$0x1]
          %v674 = vunpack.c.l.b16 %v670
          %v675 = vunpack.c.l.b16 %v671
          %v676 = vpack.c.b16 %v675, %v674
          %v679 = vunpack.c.l.s4 1983009808
          %v680 = vunpack.c.0.s8 %v679
          %v681 = vlaneseq
          %v682 = vshrl.u32 %v681, 7
          %v683 = vsub.s32 %v680, %v682
          %v684 = vrot.slane %v614, %v683
          %685 = vrot.lane.b32.xlu0 %v684, 127
          %v686 = vpop.permute.xlu0 %685
          %v688 = vsel %vm436, %v676, 0
          %v691 = vand.u32 %v686, %v443
          %693 = vmatprep.subr.bf16.mxu0 0
          %694 = vmatpush1.bf16.msra.mxu0 %v691
          %695 = vmatprep.subr.bf16.mxu0 0
          %696 = vmatpush1.bf16.msra.mxu0 0
          %697 = vmatprep.subr.bf16.mxu0 0
          %698 = vmatpush1.bf16.msra.mxu0 0
          %699 = vmatprep.subr.bf16.mxu0 0
          %700 = vmatpush1.bf16.msra.mxu0 0
          %701 = vmatprep.subr.bf16.mxu0 0
          %702 = vmatpush1.bf16.msra.mxu0 0
          %703 = vmatprep.subr.bf16.mxu0 0
          %704 = vmatpush1.bf16.msra.mxu0 0
          %705 = vmatprep.subr.bf16.mxu0 0
          %706 = vmatpush1.bf16.msra.mxu0 0
          %707 = vmatprep.subr.bf16.mxu0 0
          %708 = vmatpush1.bf16.msra.mxu0 0
          %709 = vmatprep.subr.bf16.mxu0 0
          %710 = vmatpush1.bf16.msra.mxu0 0
          %711 = vmatprep.subr.bf16.mxu0 0
          %712 = vmatpush1.bf16.msra.mxu0 0
          %713 = vmatprep.subr.bf16.mxu0 0
          %714 = vmatpush1.bf16.msra.mxu0 0
          %715 = vmatprep.subr.bf16.mxu0 0
          %716 = vmatpush1.bf16.msra.mxu0 0
          %717 = vmatprep.subr.bf16.mxu0 0
          %718 = vmatpush1.bf16.msra.mxu0 0
          %719 = vmatprep.subr.bf16.mxu0 0
          %720 = vmatpush1.bf16.msra.mxu0 0
          %721 = vmatprep.subr.bf16.mxu0 0
          %722 = vmatpush1.bf16.msra.mxu0 0
          %723 = vmatprep.subr.bf16.mxu0 0
          %724 = vmatpush1.bf16.msra.mxu0 0
          %725 = vmatprep.mubr.bf16.mxu0 0
          %726 = vmatmul.mubr.bf16.gmra.mrb[0].mxu0 %v688
          %v727 = vpop.f32.mrb[0].mxu0
          %v728 = vadd.f32 0.0, %v727
          %v729 = vpop.f32.mrb[0].mxu0
          %v730 = vpop.f32.mrb[0].mxu0
          %v731 = vadd.f32 0.0, %v730
          %v732 = vpop.f32.mrb[0].mxu0
          %733 = vdwg.mxu0
          %v734 = vadd.f32 %v667, %v728
          %v735 = vadd.f32 %v668, %v731
          %s736 = scalar_lea.vmem %s1, 40
          %v737 = vld [vmem:[%s736] sm:$0xf]
          %v738 = vld [vmem:[%s736 + $0x4] sm:$0x1]
          %v739 = vld [vmem:[%s613] sm:$0x3]
          %v742 = vunpack.c.l.b16 %v737
          %v743 = vunpack.c.l.b16 %v738
          %v744 = vpack.c.b16 %v743, %v742
          %v747 = vunpack.c.l.s4 1983009808
          %v748 = vunpack.c.0.s8 %v747
          %v749 = vlaneseq
          %v750 = vshrl.u32 %v749, 7
          %v751 = vsub.s32 %v748, %v750
          %v752 = vrot.slane %v739, %v751
          %753 = vrot.lane.b32.xlu0 %v752, 126
          %v754 = vpop.permute.xlu0 %753
          %v756 = vsel %vm436, %v744, 0
          %v759 = vand.u32 %v754, %v443
          %761 = vmatprep.subr.bf16.mxu0 0
          %762 = vmatpush1.bf16.msra.mxu0 %v759
          %763 = vmatprep.subr.bf16.mxu0 0
          %764 = vmatpush1.bf16.msra.mxu0 0
          %765 = vmatprep.subr.bf16.mxu0 0
          %766 = vmatpush1.bf16.msra.mxu0 0
          %767 = vmatprep.subr.bf16.mxu0 0
          %768 = vmatpush1.bf16.msra.mxu0 0
          %769 = vmatprep.subr.bf16.mxu0 0
          %770 = vmatpush1.bf16.msra.mxu0 0
          %771 = vmatprep.subr.bf16.mxu0 0
          %772 = vmatpush1.bf16.msra.mxu0 0
          %773 = vmatprep.subr.bf16.mxu0 0
          %774 = vmatpush1.bf16.msra.mxu0 0
          %775 = vmatprep.subr.bf16.mxu0 0
          %776 = vmatpush1.bf16.msra.mxu0 0
          %777 = vmatprep.subr.bf16.mxu0 0
          %778 = vmatpush1.bf16.msra.mxu0 0
          %779 = vmatprep.subr.bf16.mxu0 0
          %780 = vmatpush1.bf16.msra.mxu0 0
          %781 = vmatprep.subr.bf16.mxu0 0
          %782 = vmatpush1.bf16.msra.mxu0 0
          %783 = vmatprep.subr.bf16.mxu0 0
          %784 = vmatpush1.bf16.msra.mxu0 0
          %785 = vmatprep.subr.bf16.mxu0 0
          %786 = vmatpush1.bf16.msra.mxu0 0
          %787 = vmatprep.subr.bf16.mxu0 0
          %788 = vmatpush1.bf16.msra.mxu0 0
          %789 = vmatprep.subr.bf16.mxu0 0
          %790 = vmatpush1.bf16.msra.mxu0 0
          %791 = vmatprep.subr.bf16.mxu0 0
          %792 = vmatpush1.bf16.msra.mxu0 0
          %793 = vmatprep.mubr.bf16.mxu0 0
          %794 = vmatmul.mubr.bf16.gmra.mrb[0].mxu0 %v756
          %v795 = vpop.f32.mrb[0].mxu0
          %v796 = vadd.f32 0.0, %v795
          %v797 = vpop.f32.mrb[0].mxu0
          %v798 = vpop.f32.mrb[0].mxu0
          %v799 = vadd.f32 0.0, %v798
          %v800 = vpop.f32.mrb[0].mxu0
          %801 = vdwg.mxu0
          %v802 = vadd.f32 %v734, %v796
          %v803 = vadd.f32 %v735, %v799
          %s804 = scalar_lea.vmem %s1, 48
          %v805 = vld [vmem:[%s804] sm:$0xf]
          %v806 = vld [vmem:[%s804 + $0x4] sm:$0x1]
          %s807 = sadd.s32 %s412, 2
          %s808 = smul.addr %s807, 2
          %s809 = scalar_lea.vmem %s368, %s808
          %v810 = vld [vmem:[%s809] sm:$0x3]
          %v813 = vunpack.c.l.b16 %v805
          %v814 = vunpack.c.l.b16 %v806
          %v815 = vpack.c.b16 %v814, %v813
          %v817 = vsel %vm436, %v815, 0
          %v820 = vand.u32 %v810, %v443
          %822 = vmatprep.subr.bf16.mxu0 0
          %823 = vmatpush1.bf16.msra.mxu0 %v820
          %824 = vmatprep.subr.bf16.mxu0 0
          %825 = vmatpush1.bf16.msra.mxu0 0
          %826 = vmatprep.subr.bf16.mxu0 0
          %827 = vmatpush1.bf16.msra.mxu0 0
          %828 = vmatprep.subr.bf16.mxu0 0
          %829 = vmatpush1.bf16.msra.mxu0 0
          %830 = vmatprep.subr.bf16.mxu0 0
          %831 = vmatpush1.bf16.msra.mxu0 0
          %832 = vmatprep.subr.bf16.mxu0 0
          %833 = vmatpush1.bf16.msra.mxu0 0
          %834 = vmatprep.subr.bf16.mxu0 0
          %835 = vmatpush1.bf16.msra.mxu0 0
          %836 = vmatprep.subr.bf16.mxu0 0
          %837 = vmatpush1.bf16.msra.mxu0 0
          %838 = vmatprep.subr.bf16.mxu0 0
          %839 = vmatpush1.bf16.msra.mxu0 0
          %840 = vmatprep.subr.bf16.mxu0 0
          %841 = vmatpush1.bf16.msra.mxu0 0
          %842 = vmatprep.subr.bf16.mxu0 0
          %843 = vmatpush1.bf16.msra.mxu0 0
          %844 = vmatprep.subr.bf16.mxu0 0
          %845 = vmatpush1.bf16.msra.mxu0 0
          %846 = vmatprep.subr.bf16.mxu0 0
          %847 = vmatpush1.bf16.msra.mxu0 0
          %848 = vmatprep.subr.bf16.mxu0 0
          %849 = vmatpush1.bf16.msra.mxu0 0
          %850 = vmatprep.subr.bf16.mxu0 0
          %851 = vmatpush1.bf16.msra.mxu0 0
          %852 = vmatprep.subr.bf16.mxu0 0
          %853 = vmatpush1.bf16.msra.mxu0 0
          %854 = vmatprep.mubr.bf16.mxu0 0
          %855 = vmatmul.mubr.bf16.gmra.mrb[0].mxu0 %v817
          %v856 = vpop.f32.mrb[0].mxu0
          %v857 = vadd.f32 0.0, %v856
          %v858 = vpop.f32.mrb[0].mxu0
          %v859 = vpop.f32.mrb[0].mxu0
          %v860 = vadd.f32 0.0, %v859
          %v861 = vpop.f32.mrb[0].mxu0
          %862 = vdwg.mxu0
          %v863 = vadd.f32 %v802, %v857
          %v864 = vadd.f32 %v803, %v860
          %s865 = scalar_lea.vmem %s1, 56
          %v866 = vld [vmem:[%s865] sm:$0xf]
          %v867 = vld [vmem:[%s865 + $0x4] sm:$0x1]
          %v870 = vunpack.c.l.b16 %v866
          %v871 = vunpack.c.l.b16 %v867
          %v872 = vpack.c.b16 %v871, %v870
          %v875 = vunpack.c.l.s4 1983009808
          %v876 = vunpack.c.0.s8 %v875
          %v877 = vlaneseq
          %v878 = vshrl.u32 %v877, 7
          %v879 = vsub.s32 %v876, %v878
          %v880 = vrot.slane %v810, %v879
          %881 = vrot.lane.b32.xlu0 %v880, 127
          %v882 = vpop.permute.xlu0 %881
          %v884 = vsel %vm436, %v872, 0
          %v887 = vand.u32 %v882, %v443
          %889 = vmatprep.subr.bf16.mxu0 0
          %890 = vmatpush1.bf16.msra.mxu0 %v887
          %891 = vmatprep.subr.bf16.mxu0 0
          %892 = vmatpush1.bf16.msra.mxu0 0
          %893 = vmatprep.subr.bf16.mxu0 0
          %894 = vmatpush1.bf16.msra.mxu0 0
          %895 = vmatprep.subr.bf16.mxu0 0
          %896 = vmatpush1.bf16.msra.mxu0 0
          %897 = vmatprep.subr.bf16.mxu0 0
          %898 = vmatpush1.bf16.msra.mxu0 0
          %899 = vmatprep.subr.bf16.mxu0 0
          %900 = vmatpush1.bf16.msra.mxu0 0
          %901 = vmatprep.subr.bf16.mxu0 0
          %902 = vmatpush1.bf16.msra.mxu0 0
          %903 = vmatprep.subr.bf16.mxu0 0
          %904 = vmatpush1.bf16.msra.mxu0 0
          %905 = vmatprep.subr.bf16.mxu0 0
          %906 = vmatpush1.bf16.msra.mxu0 0
          %907 = vmatprep.subr.bf16.mxu0 0
          %908 = vmatpush1.bf16.msra.mxu0 0
          %909 = vmatprep.subr.bf16.mxu0 0
          %910 = vmatpush1.bf16.msra.mxu0 0
          %911 = vmatprep.subr.bf16.mxu0 0
          %912 = vmatpush1.bf16.msra.mxu0 0
          %913 = vmatprep.subr.bf16.mxu0 0
          %914 = vmatpush1.bf16.msra.mxu0 0
          %915 = vmatprep.subr.bf16.mxu0 0
          %916 = vmatpush1.bf16.msra.mxu0 0
          %917 = vmatprep.subr.bf16.mxu0 0
          %918 = vmatpush1.bf16.msra.mxu0 0
          %919 = vmatprep.subr.bf16.mxu0 0
          %920 = vmatpush1.bf16.msra.mxu0 0
          %921 = vmatprep.mubr.bf16.mxu0 0
          %922 = vmatmul.mubr.bf16.gmra.mrb[0].mxu0 %v884
          %v923 = vpop.f32.mrb[0].mxu0
          %v924 = vadd.f32 0.0, %v923
          %v925 = vpop.f32.mrb[0].mxu0
          %v926 = vpop.f32.mrb[0].mxu0
          %v927 = vadd.f32 0.0, %v926
          %v928 = vpop.f32.mrb[0].mxu0
          %929 = vdwg.mxu0
          %v930 = vadd.f32 %v863, %v924
          %v931 = vadd.f32 %v864, %v927
          %s932 = scalar_lea.vmem %s1, 64
          %v933 = vld [vmem:[%s932] sm:$0xf]
          %v934 = vld [vmem:[%s932 + $0x4] sm:$0x1]
          %v935 = vld [vmem:[%s809] sm:$0x3]
          %v938 = vunpack.c.l.b16 %v933
          %v939 = vunpack.c.l.b16 %v934
          %v940 = vpack.c.b16 %v939, %v938
          %v943 = vunpack.c.l.s4 1983009808
          %v944 = vunpack.c.0.s8 %v943
          %v945 = vlaneseq
          %v946 = vshrl.u32 %v945, 7
          %v947 = vsub.s32 %v944, %v946
          %v948 = vrot.slane %v935, %v947
          %949 = vrot.lane.b32.xlu0 %v948, 126
          %v950 = vpop.permute.xlu0 %949
          %v952 = vsel %vm436, %v940, 0
          %v955 = vand.u32 %v950, %v443
          %957 = vmatprep.subr.bf16.mxu0 0
          %958 = vmatpush1.bf16.msra.mxu0 %v955
          %959 = vmatprep.subr.bf16.mxu0 0
          %960 = vmatpush1.bf16.msra.mxu0 0
          %961 = vmatprep.subr.bf16.mxu0 0
          %962 = vmatpush1.bf16.msra.mxu0 0
          %963 = vmatprep.subr.bf16.mxu0 0
          %964 = vmatpush1.bf16.msra.mxu0 0
          %965 = vmatprep.subr.bf16.mxu0 0
          %966 = vmatpush1.bf16.msra.mxu0 0
          %967 = vmatprep.subr.bf16.mxu0 0
          %968 = vmatpush1.bf16.msra.mxu0 0
          %969 = vmatprep.subr.bf16.mxu0 0
          %970 = vmatpush1.bf16.msra.mxu0 0
          %971 = vmatprep.subr.bf16.mxu0 0
          %972 = vmatpush1.bf16.msra.mxu0 0
          %973 = vmatprep.subr.bf16.mxu0 0
          %974 = vmatpush1.bf16.msra.mxu0 0
          %975 = vmatprep.subr.bf16.mxu0 0
          %976 = vmatpush1.bf16.msra.mxu0 0
          %977 = vmatprep.subr.bf16.mxu0 0
          %978 = vmatpush1.bf16.msra.mxu0 0
          %979 = vmatprep.subr.bf16.mxu0 0
          %980 = vmatpush1.bf16.msra.mxu0 0
          %981 = vmatprep.subr.bf16.mxu0 0
          %982 = vmatpush1.bf16.msra.mxu0 0
          %983 = vmatprep.subr.bf16.mxu0 0
          %984 = vmatpush1.bf16.msra.mxu0 0
          %985 = vmatprep.subr.bf16.mxu0 0
          %986 = vmatpush1.bf16.msra.mxu0 0
          %987 = vmatprep.subr.bf16.mxu0 0
          %988 = vmatpush1.bf16.msra.mxu0 0
          %989 = vmatprep.mubr.bf16.mxu0 0
          %990 = vmatmul.mubr.bf16.gmra.mrb[0].mxu0 %v952
          %v991 = vpop.f32.mrb[0].mxu0
          %v992 = vadd.f32 0.0, %v991
          %v993 = vpop.f32.mrb[0].mxu0
          %v994 = vpop.f32.mrb[0].mxu0
          %v995 = vadd.f32 0.0, %v994
          %v996 = vpop.f32.mrb[0].mxu0
          %997 = vdwg.mxu0
          %v998 = vadd.f32 %v930, %v992
          %v999 = vadd.f32 %v931, %v995
          %1001 = vset.pattern.permute.xlu0 0
          %1002 = vperm.xlu0 %1001, %v378
          %v1003 = vpop.permute.xlu0 %1002
          %1006 = vset.pattern.permute.xlu0 0
          %1007 = vperm.xlu0 %1006, %v379
          %v1008 = vpop.permute.xlu0 %1007
          %v1010 = vadd.f32 %v998, %v1003
          %v1011 = vadd.f32 %v999, %v1008
          %vm1012 = vcmp.gt.f32.partialorder %v1010, 0.0
          %vm1013 = vcmp.gt.f32.partialorder %v1011, 0.0
          %v1014 = vstv %s375
          %v1015 = vmul.f32 %v1014, %v1010
          %v1016 = vmul.f32 %v1014, %v1011
          %v1017 = vsel %vm1012, %v1010, %v1015
          %v1018 = vsel %vm1013, %v1011, %v1016
          %1019 = vmatprep.subr.bf16.mxu0 0
          %1020 = vmatpush1.bf16.msra.mxu0 %v691
          %1021 = vmatprep.subr.bf16.mxu0 0
          %1022 = vmatpush1.bf16.msra.mxu0 0
          %1023 = vmatprep.subr.bf16.mxu0 0
          %1024 = vmatpush1.bf16.msra.mxu0 0
          %1025 = vmatprep.subr.bf16.mxu0 0
          %1026 = vmatpush1.bf16.msra.mxu0 0
          %1027 = vmatprep.subr.bf16.mxu0 0
          %1028 = vmatpush1.bf16.msra.mxu0 0
          %1029 = vmatprep.subr.bf16.mxu0 0
          %1030 = vmatpush1.bf16.msra.mxu0 0
          %1031 = vmatprep.subr.bf16.mxu0 0
          %1032 = vmatpush1.bf16.msra.mxu0 0
          %1033 = vmatprep.subr.bf16.mxu0 0
          %1034 = vmatpush1.bf16.msra.mxu0 0
          %1035 = vmatprep.subr.bf16.mxu0 0
          %1036 = vmatpush1.bf16.msra.mxu0 0
          %1037 = vmatprep.subr.bf16.mxu0 0
          %1038 = vmatpush1.bf16.msra.mxu0 0
          %1039 = vmatprep.subr.bf16.mxu0 0
          %1040 = vmatpush1.bf16.msra.mxu0 0
          %1041 = vmatprep.subr.bf16.mxu0 0
          %1042 = vmatpush1.bf16.msra.mxu0 0
          %1043 = vmatprep.subr.bf16.mxu0 0
          %1044 = vmatpush1.bf16.msra.mxu0 0
          %1045 = vmatprep.subr.bf16.mxu0 0
          %1046 = vmatpush1.bf16.msra.mxu0 0
          %1047 = vmatprep.subr.bf16.mxu0 0
          %1048 = vmatpush1.bf16.msra.mxu0 0
          %1049 = vmatprep.subr.bf16.mxu0 0
          %1050 = vmatpush1.bf16.msra.mxu0 0
          %1051 = vmatprep.mubr.bf16.mxu0 0
          %1052 = vmatmul.mubr.bf16.gmra.mrb[0].mxu0 %v438
          %v1053 = vpop.f32.mrb[0].mxu0
          %v1054 = vadd.f32 0.0, %v1053
          %v1055 = vpop.f32.mrb[0].mxu0
          %v1056 = vpop.f32.mrb[0].mxu0
          %v1057 = vadd.f32 0.0, %v1056
          %v1058 = vpop.f32.mrb[0].mxu0
          %1059 = vdwg.mxu0
          %1060 = vmatprep.subr.bf16.mxu0 0
          %1061 = vmatpush1.bf16.msra.mxu0 %v624
          %1062 = vmatprep.subr.bf16.mxu0 0
          %1063 = vmatpush1.bf16.msra.mxu0 0
          %1064 = vmatprep.subr.bf16.mxu0 0
          %1065 = vmatpush1.bf16.msra.mxu0 0
          %1066 = vmatprep.subr.bf16.mxu0 0
          %1067 = vmatpush1.bf16.msra.mxu0 0
          %1068 = vmatprep.subr.bf16.mxu0 0
          %1069 = vmatpush1.bf16.msra.mxu0 0
          %1070 = vmatprep.subr.bf16.mxu0 0
          %1071 = vmatpush1.bf16.msra.mxu0 0
          %1072 = vmatprep.subr.bf16.mxu0 0
          %1073 = vmatpush1.bf16.msra.mxu0 0
          %1074 = vmatprep.subr.bf16.mxu0 0
          %1075 = vmatpush1.bf16.msra.mxu0 0
          %1076 = vmatprep.subr.bf16.mxu0 0
          %1077 = vmatpush1.bf16.msra.mxu0 0
          %1078 = vmatprep.subr.bf16.mxu0 0
          %1079 = vmatpush1.bf16.msra.mxu0 0
          %1080 = vmatprep.subr.bf16.mxu0 0
          %1081 = vmatpush1.bf16.msra.mxu0 0
          %1082 = vmatprep.subr.bf16.mxu0 0
          %1083 = vmatpush1.bf16.msra.mxu0 0
          %1084 = vmatprep.subr.bf16.mxu0 0
          %1085 = vmatpush1.bf16.msra.mxu0 0
          %1086 = vmatprep.subr.bf16.mxu0 0
          %1087 = vmatpush1.bf16.msra.mxu0 0
          %1088 = vmatprep.subr.bf16.mxu0 0
          %1089 = vmatpush1.bf16.msra.mxu0 0
          %1090 = vmatprep.subr.bf16.mxu0 0
          %1091 = vmatpush1.bf16.msra.mxu0 0
          %1092 = vmatprep.mubr.bf16.mxu0 0
          %1093 = vmatmul.mubr.bf16.gmra.mrb[0].mxu0 %v494
          %v1094 = vpop.f32.mrb[0].mxu0
          %v1095 = vadd.f32 %v1054, %v1094
          %v1096 = vpop.f32.mrb[0].mxu0
          %v1097 = vpop.f32.mrb[0].mxu0
          %v1098 = vadd.f32 %v1057, %v1097
          %v1099 = vpop.f32.mrb[0].mxu0
          %1100 = vdwg.mxu0
          %1101 = vmatprep.subr.bf16.mxu0 0
          %1102 = vmatpush1.bf16.msra.mxu0 %v759
          %1103 = vmatprep.subr.bf16.mxu0 0
          %1104 = vmatpush1.bf16.msra.mxu0 0
          %1105 = vmatprep.subr.bf16.mxu0 0
          %1106 = vmatpush1.bf16.msra.mxu0 0
          %1107 = vmatprep.subr.bf16.mxu0 0
          %1108 = vmatpush1.bf16.msra.mxu0 0
          %1109 = vmatprep.subr.bf16.mxu0 0
          %1110 = vmatpush1.bf16.msra.mxu0 0
          %1111 = vmatprep.subr.bf16.mxu0 0
          %1112 = vmatpush1.bf16.msra.mxu0 0
          %1113 = vmatprep.subr.bf16.mxu0 0
          %1114 = vmatpush1.bf16.msra.mxu0 0
          %1115 = vmatprep.subr.bf16.mxu0 0
          %1116 = vmatpush1.bf16.msra.mxu0 0
          %1117 = vmatprep.subr.bf16.mxu0 0
          %1118 = vmatpush1.bf16.msra.mxu0 0
          %1119 = vmatprep.subr.bf16.mxu0 0
          %1120 = vmatpush1.bf16.msra.mxu0 0
          %1121 = vmatprep.subr.bf16.mxu0 0
          %1122 = vmatpush1.bf16.msra.mxu0 0
          %1123 = vmatprep.subr.bf16.mxu0 0
          %1124 = vmatpush1.bf16.msra.mxu0 0
          %1125 = vmatprep.subr.bf16.mxu0 0
          %1126 = vmatpush1.bf16.msra.mxu0 0
          %1127 = vmatprep.subr.bf16.mxu0 0
          %1128 = vmatpush1.bf16.msra.mxu0 0
          %1129 = vmatprep.subr.bf16.mxu0 0
          %1130 = vmatpush1.bf16.msra.mxu0 0
          %1131 = vmatprep.subr.bf16.mxu0 0
          %1132 = vmatpush1.bf16.msra.mxu0 0
          %1133 = vmatprep.mubr.bf16.mxu0 0
          %1134 = vmatmul.mubr.bf16.gmra.mrb[0].mxu0 %v560
          %v1135 = vpop.f32.mrb[0].mxu0
          %v1136 = vadd.f32 0.0, %v1135
          %v1137 = vpop.f32.mrb[0].mxu0
          %v1138 = vpop.f32.mrb[0].mxu0
          %v1139 = vadd.f32 0.0, %v1138
          %v1140 = vpop.f32.mrb[0].mxu0
          %1141 = vdwg.mxu0
          %v1142 = vadd.f32 %v1095, %v1136
          %v1143 = vadd.f32 %v1098, %v1139
          %1144 = vmatprep.subr.bf16.mxu0 0
          %1145 = vmatpush1.bf16.msra.mxu0 %v820
          %1146 = vmatprep.subr.bf16.mxu0 0
          %1147 = vmatpush1.bf16.msra.mxu0 0
          %1148 = vmatprep.subr.bf16.mxu0 0
          %1149 = vmatpush1.bf16.msra.mxu0 0
          %1150 = vmatprep.subr.bf16.mxu0 0
          %1151 = vmatpush1.bf16.msra.mxu0 0
          %1152 = vmatprep.subr.bf16.mxu0 0
          %1153 = vmatpush1.bf16.msra.mxu0 0
          %1154 = vmatprep.subr.bf16.mxu0 0
          %1155 = vmatpush1.bf16.msra.mxu0 0
          %1156 = vmatprep.subr.bf16.mxu0 0
          %1157 = vmatpush1.bf16.msra.mxu0 0
          %1158 = vmatprep.subr.bf16.mxu0 0
          %1159 = vmatpush1.bf16.msra.mxu0 0
          %1160 = vmatprep.subr.bf16.mxu0 0
          %1161 = vmatpush1.bf16.msra.mxu0 0
          %1162 = vmatprep.subr.bf16.mxu0 0
          %1163 = vmatpush1.bf16.msra.mxu0 0
          %1164 = vmatprep.subr.bf16.mxu0 0
          %1165 = vmatpush1.bf16.msra.mxu0 0
          %1166 = vmatprep.subr.bf16.mxu0 0
          %1167 = vmatpush1.bf16.msra.mxu0 0
          %1168 = vmatprep.subr.bf16.mxu0 0
          %1169 = vmatpush1.bf16.msra.mxu0 0
          %1170 = vmatprep.subr.bf16.mxu0 0
          %1171 = vmatpush1.bf16.msra.mxu0 0
          %1172 = vmatprep.subr.bf16.mxu0 0
          %1173 = vmatpush1.bf16.msra.mxu0 0
          %1174 = vmatprep.subr.bf16.mxu0 0
          %1175 = vmatpush1.bf16.msra.mxu0 0
          %1176 = vmatprep.mubr.bf16.mxu0 0
          %1177 = vmatmul.mubr.bf16.gmra.mrb[0].mxu0 %v621
          %v1178 = vpop.f32.mrb[0].mxu0
          %v1179 = vadd.f32 0.0, %v1178
          %v1180 = vpop.f32.mrb[0].mxu0
          %v1181 = vpop.f32.mrb[0].mxu0
          %v1182 = vadd.f32 0.0, %v1181
          %v1183 = vpop.f32.mrb[0].mxu0
          %1184 = vdwg.mxu0
          %v1185 = vadd.f32 %v1142, %v1179
          %v1186 = vadd.f32 %v1143, %v1182
          %1187 = vmatprep.subr.bf16.mxu0 0
          %1188 = vmatpush1.bf16.msra.mxu0 %v887
          %1189 = vmatprep.subr.bf16.mxu0 0
          %1190 = vmatpush1.bf16.msra.mxu0 0
          %1191 = vmatprep.subr.bf16.mxu0 0
          %1192 = vmatpush1.bf16.msra.mxu0 0
          %1193 = vmatprep.subr.bf16.mxu0 0
          %1194 = vmatpush1.bf16.msra.mxu0 0
          %1195 = vmatprep.subr.bf16.mxu0 0
          %1196 = vmatpush1.bf16.msra.mxu0 0
          %1197 = vmatprep.subr.bf16.mxu0 0
          %1198 = vmatpush1.bf16.msra.mxu0 0
          %1199 = vmatprep.subr.bf16.mxu0 0
          %1200 = vmatpush1.bf16.msra.mxu0 0
          %1201 = vmatprep.subr.bf16.mxu0 0
          %1202 = vmatpush1.bf16.msra.mxu0 0
          %1203 = vmatprep.subr.bf16.mxu0 0
          %1204 = vmatpush1.bf16.msra.mxu0 0
          %1205 = vmatprep.subr.bf16.mxu0 0
          %1206 = vmatpush1.bf16.msra.mxu0 0
          %1207 = vmatprep.subr.bf16.mxu0 0
          %1208 = vmatpush1.bf16.msra.mxu0 0
          %1209 = vmatprep.subr.bf16.mxu0 0
          %1210 = vmatpush1.bf16.msra.mxu0 0
          %1211 = vmatprep.subr.bf16.mxu0 0
          %1212 = vmatpush1.bf16.msra.mxu0 0
          %1213 = vmatprep.subr.bf16.mxu0 0
          %1214 = vmatpush1.bf16.msra.mxu0 0
          %1215 = vmatprep.subr.bf16.mxu0 0
          %1216 = vmatpush1.bf16.msra.mxu0 0
          %1217 = vmatprep.subr.bf16.mxu0 0
          %1218 = vmatpush1.bf16.msra.mxu0 0
          %1219 = vmatprep.mubr.bf16.mxu0 0
          %1220 = vmatmul.mubr.bf16.gmra.mrb[0].mxu0 %v688
          %v1221 = vpop.f32.mrb[0].mxu0
          %v1222 = vadd.f32 0.0, %v1221
          %v1223 = vpop.f32.mrb[0].mxu0
          %v1224 = vpop.f32.mrb[0].mxu0
          %v1225 = vadd.f32 0.0, %v1224
          %v1226 = vpop.f32.mrb[0].mxu0
          %1227 = vdwg.mxu0
          %v1228 = vadd.f32 %v1185, %v1222
          %v1229 = vadd.f32 %v1186, %v1225
          %1230 = vmatprep.subr.bf16.mxu0 0
          %1231 = vmatpush1.bf16.msra.mxu0 %v955
          %1232 = vmatprep.subr.bf16.mxu0 0
          %1233 = vmatpush1.bf16.msra.mxu0 0
          %1234 = vmatprep.subr.bf16.mxu0 0
          %1235 = vmatpush1.bf16.msra.mxu0 0
          %1236 = vmatprep.subr.bf16.mxu0 0
          %1237 = vmatpush1.bf16.msra.mxu0 0
          %1238 = vmatprep.subr.bf16.mxu0 0
          %1239 = vmatpush1.bf16.msra.mxu0 0
          %1240 = vmatprep.subr.bf16.mxu0 0
          %1241 = vmatpush1.bf16.msra.mxu0 0
          %1242 = vmatprep.subr.bf16.mxu0 0
          %1243 = vmatpush1.bf16.msra.mxu0 0
          %1244 = vmatprep.subr.bf16.mxu0 0
          %1245 = vmatpush1.bf16.msra.mxu0 0
          %1246 = vmatprep.subr.bf16.mxu0 0
          %1247 = vmatpush1.bf16.msra.mxu0 0
          %1248 = vmatprep.subr.bf16.mxu0 0
          %1249 = vmatpush1.bf16.msra.mxu0 0
          %1250 = vmatprep.subr.bf16.mxu0 0
          %1251 = vmatpush1.bf16.msra.mxu0 0
          %1252 = vmatprep.subr.bf16.mxu0 0
          %1253 = vmatpush1.bf16.msra.mxu0 0
          %1254 = vmatprep.subr.bf16.mxu0 0
          %1255 = vmatpush1.bf16.msra.mxu0 0
          %1256 = vmatprep.subr.bf16.mxu0 0
          %1257 = vmatpush1.bf16.msra.mxu0 0
          %1258 = vmatprep.subr.bf16.mxu0 0
          %1259 = vmatpush1.bf16.msra.mxu0 0
          %1260 = vmatprep.subr.bf16.mxu0 0
          %1261 = vmatpush1.bf16.msra.mxu0 0
          %1262 = vmatprep.mubr.bf16.mxu0 0
          %1263 = vmatmul.mubr.bf16.gmra.mrb[0].mxu0 %v756
          %v1264 = vpop.f32.mrb[0].mxu0
          %v1265 = vadd.f32 0.0, %v1264
          %v1266 = vpop.f32.mrb[0].mxu0
          %v1267 = vpop.f32.mrb[0].mxu0
          %v1268 = vadd.f32 0.0, %v1267
          %v1269 = vpop.f32.mrb[0].mxu0
          %1270 = vdwg.mxu0
          %v1271 = vadd.f32 %v1228, %v1265
          %v1272 = vadd.f32 %v1229, %v1268
          %s1273 = sadd.s32 %s412, 3
          %s1274 = smul.addr %s1273, 2
          %s1275 = scalar_lea.vmem %s368, %s1274
          %v1276 = vld [vmem:[%s1275] sm:$0x3]
          %v1278 = vand.u32 %v1276, %v443
          %1280 = vmatprep.subr.bf16.mxu0 0
          %1281 = vmatpush1.bf16.msra.mxu0 %v1278
          %1282 = vmatprep.subr.bf16.mxu0 0
          %1283 = vmatpush1.bf16.msra.mxu0 0
          %1284 = vmatprep.subr.bf16.mxu0 0
          %1285 = vmatpush1.bf16.msra.mxu0 0
          %1286 = vmatprep.subr.bf16.mxu0 0
          %1287 = vmatpush1.bf16.msra.mxu0 0
          %1288 = vmatprep.subr.bf16.mxu0 0
          %1289 = vmatpush1.bf16.msra.mxu0 0
          %1290 = vmatprep.subr.bf16.mxu0 0
          %1291 = vmatpush1.bf16.msra.mxu0 0
          %1292 = vmatprep.subr.bf16.mxu0 0
          %1293 = vmatpush1.bf16.msra.mxu0 0
          %1294 = vmatprep.subr.bf16.mxu0 0
          %1295 = vmatpush1.bf16.msra.mxu0 0
          %1296 = vmatprep.subr.bf16.mxu0 0
          %1297 = vmatpush1.bf16.msra.mxu0 0
          %1298 = vmatprep.subr.bf16.mxu0 0
          %1299 = vmatpush1.bf16.msra.mxu0 0
          %1300 = vmatprep.subr.bf16.mxu0 0
          %1301 = vmatpush1.bf16.msra.mxu0 0
          %1302 = vmatprep.subr.bf16.mxu0 0
          %1303 = vmatpush1.bf16.msra.mxu0 0
          %1304 = vmatprep.subr.bf16.mxu0 0
          %1305 = vmatpush1.bf16.msra.mxu0 0
          %1306 = vmatprep.subr.bf16.mxu0 0
          %1307 = vmatpush1.bf16.msra.mxu0 0
          %1308 = vmatprep.subr.bf16.mxu0 0
          %1309 = vmatpush1.bf16.msra.mxu0 0
          %1310 = vmatprep.subr.bf16.mxu0 0
          %1311 = vmatpush1.bf16.msra.mxu0 0
          %1312 = vmatprep.mubr.bf16.mxu0 0
          %1313 = vmatmul.mubr.bf16.gmra.mrb[0].mxu0 %v817
          %v1314 = vpop.f32.mrb[0].mxu0
          %v1315 = vadd.f32 0.0, %v1314
          %v1316 = vpop.f32.mrb[0].mxu0
          %v1317 = vpop.f32.mrb[0].mxu0
          %v1318 = vadd.f32 0.0, %v1317
          %v1319 = vpop.f32.mrb[0].mxu0
          %1320 = vdwg.mxu0
          %v1321 = vadd.f32 %v1271, %v1315
          %v1322 = vadd.f32 %v1272, %v1318
          %v1325 = vunpack.c.l.s4 1983009808
          %v1326 = vunpack.c.0.s8 %v1325
          %v1327 = vlaneseq
          %v1328 = vshrl.u32 %v1327, 7
          %v1329 = vsub.s32 %v1326, %v1328
          %v1330 = vrot.slane %v1276, %v1329
          %1331 = vrot.lane.b32.xlu0 %v1330, 127
          %v1332 = vpop.permute.xlu0 %1331
          %v1334 = vand.u32 %v1332, %v443
          %1336 = vmatprep.subr.bf16.mxu0 0
          %1337 = vmatpush1.bf16.msra.mxu0 %v1334
          %1338 = vmatprep.subr.bf16.mxu0 0
          %1339 = vmatpush1.bf16.msra.mxu0 0
          %1340 = vmatprep.subr.bf16.mxu0 0
          %1341 = vmatpush1.bf16.msra.mxu0 0
          %1342 = vmatprep.subr.bf16.mxu0 0
          %1343 = vmatpush1.bf16.msra.mxu0 0
          %1344 = vmatprep.subr.bf16.mxu0 0
          %1345 = vmatpush1.bf16.msra.mxu0 0
          %1346 = vmatprep.subr.bf16.mxu0 0
          %1347 = vmatpush1.bf16.msra.mxu0 0
          %1348 = vmatprep.subr.bf16.mxu0 0
          %1349 = vmatpush1.bf16.msra.mxu0 0
          %1350 = vmatprep.subr.bf16.mxu0 0
          %1351 = vmatpush1.bf16.msra.mxu0 0
          %1352 = vmatprep.subr.bf16.mxu0 0
          %1353 = vmatpush1.bf16.msra.mxu0 0
          %1354 = vmatprep.subr.bf16.mxu0 0
          %1355 = vmatpush1.bf16.msra.mxu0 0
          %1356 = vmatprep.subr.bf16.mxu0 0
          %1357 = vmatpush1.bf16.msra.mxu0 0
          %1358 = vmatprep.subr.bf16.mxu0 0
          %1359 = vmatpush1.bf16.msra.mxu0 0
          %1360 = vmatprep.subr.bf16.mxu0 0
          %1361 = vmatpush1.bf16.msra.mxu0 0
          %1362 = vmatprep.subr.bf16.mxu0 0
          %1363 = vmatpush1.bf16.msra.mxu0 0
          %1364 = vmatprep.subr.bf16.mxu0 0
          %1365 = vmatpush1.bf16.msra.mxu0 0
          %1366 = vmatprep.subr.bf16.mxu0 0
          %1367 = vmatpush1.bf16.msra.mxu0 0
          %1368 = vmatprep.mubr.bf16.mxu0 0
          %1369 = vmatmul.mubr.bf16.gmra.mrb[0].mxu0 %v884
          %v1370 = vpop.f32.mrb[0].mxu0
          %v1371 = vadd.f32 0.0, %v1370
          %v1372 = vpop.f32.mrb[0].mxu0
          %v1373 = vpop.f32.mrb[0].mxu0
          %v1374 = vadd.f32 0.0, %v1373
          %v1375 = vpop.f32.mrb[0].mxu0
          %1376 = vdwg.mxu0
          %v1377 = vadd.f32 %v1321, %v1371
          %v1378 = vadd.f32 %v1322, %v1374
          %v1379 = vld [vmem:[%s1275] sm:$0x3]
          %v1382 = vunpack.c.l.s4 1983009808
          %v1383 = vunpack.c.0.s8 %v1382
          %v1384 = vlaneseq
          %v1385 = vshrl.u32 %v1384, 7
          %v1386 = vsub.s32 %v1383, %v1385
          %v1387 = vrot.slane %v1379, %v1386
          %1388 = vrot.lane.b32.xlu0 %v1387, 126
          %v1389 = vpop.permute.xlu0 %1388
          %v1391 = vand.u32 %v1389, %v443
          %1393 = vmatprep.subr.bf16.mxu0 0
          %1394 = vmatpush1.bf16.msra.mxu0 %v1391
          %1395 = vmatprep.subr.bf16.mxu0 0
          %1396 = vmatpush1.bf16.msra.mxu0 0
          %1397 = vmatprep.subr.bf16.mxu0 0
          %1398 = vmatpush1.bf16.msra.mxu0 0
          %1399 = vmatprep.subr.bf16.mxu0 0
          %1400 = vmatpush1.bf16.msra.mxu0 0
          %1401 = vmatprep.subr.bf16.mxu0 0
          %1402 = vmatpush1.bf16.msra.mxu0 0
          %1403 = vmatprep.subr.bf16.mxu0 0
          %1404 = vmatpush1.bf16.msra.mxu0 0
          %1405 = vmatprep.subr.bf16.mxu0 0
          %1406 = vmatpush1.bf16.msra.mxu0 0
          %1407 = vmatprep.subr.bf16.mxu0 0
          %1408 = vmatpush1.bf16.msra.mxu0 0
          %1409 = vmatprep.subr.bf16.mxu0 0
          %1410 = vmatpush1.bf16.msra.mxu0 0
          %1411 = vmatprep.subr.bf16.mxu0 0
          %1412 = vmatpush1.bf16.msra.mxu0 0
          %1413 = vmatprep.subr.bf16.mxu0 0
          %1414 = vmatpush1.bf16.msra.mxu0 0
          %1415 = vmatprep.subr.bf16.mxu0 0
          %1416 = vmatpush1.bf16.msra.mxu0 0
          %1417 = vmatprep.subr.bf16.mxu0 0
          %1418 = vmatpush1.bf16.msra.mxu0 0
          %1419 = vmatprep.subr.bf16.mxu0 0
          %1420 = vmatpush1.bf16.msra.mxu0 0
          %1421 = vmatprep.subr.bf16.mxu0 0
          %1422 = vmatpush1.bf16.msra.mxu0 0
          %1423 = vmatprep.subr.bf16.mxu0 0
          %1424 = vmatpush1.bf16.msra.mxu0 0
          %1425 = vmatprep.mubr.bf16.mxu0 0
          %1426 = vmatmul.mubr.bf16.gmra.mrb[0].mxu0 %v952
          %v1427 = vpop.f32.mrb[0].mxu0
          %v1428 = vadd.f32 0.0, %v1427
          %v1429 = vpop.f32.mrb[0].mxu0
          %v1430 = vpop.f32.mrb[0].mxu0
          %v1431 = vadd.f32 0.0, %v1430
          %v1432 = vpop.f32.mrb[0].mxu0
          %1433 = vdwg.mxu0
          %v1434 = vadd.f32 %v1377, %v1428
          %v1435 = vadd.f32 %v1378, %v1431
          %v1436 = vadd.f32 %v1434, %v1003
          %v1437 = vadd.f32 %v1435, %v1008
          %vm1438 = vcmp.gt.f32.partialorder %v1436, 0.0
          %vm1439 = vcmp.gt.f32.partialorder %v1437, 0.0
          %v1440 = vmul.f32 %v1014, %v1436
          %v1441 = vmul.f32 %v1014, %v1437
          %v1442 = vsel %vm1438, %v1436, %v1440
          %v1443 = vsel %vm1439, %v1437, %v1441
          %v1444 = vmax.f32 %v1017, %v1442
          %v1445 = vmax.f32 %v1018, %v1443
          %vm1446 = vcmask 113664
          %v1448 = vsel %vm1446, %v1444, 0
          %v1451 = vsel %vm1446, %v1445, 0
          %vm1453 = vcmask 1045504
          %v1455 = vsel %vm1453, %v398, 0
          %1457 = vmatprep.subr.mxu0 0.0
          %1458 = vmatpush1.msra.mxu0 %v397
          %1459 = vmatprep.subr.mxu0 0.0
          %1460 = vmatpush1.msra.mxu0 %v1455
          %1461 = vmatprep.subr.mxu0 0.0
          %1462 = vmatpush1.msra.mxu0 0.0
          %1463 = vmatprep.subr.mxu0 0.0
          %1464 = vmatpush1.msra.mxu0 0.0
          %1465 = vmatprep.subr.mxu0 0.0
          %1466 = vmatpush1.msra.mxu0 0.0
          %1467 = vmatprep.subr.mxu0 0.0
          %1468 = vmatpush1.msra.mxu0 0.0
          %1469 = vmatprep.subr.mxu0 0.0
          %1470 = vmatpush1.msra.mxu0 0.0
          %1471 = vmatprep.subr.mxu0 0.0
          %1472 = vmatpush1.msra.mxu0 0.0
          %1473 = vmatprep.subr.mxu0 0.0
          %1474 = vmatpush1.msra.mxu0 0.0
          %1475 = vmatprep.subr.mxu0 0.0
          %1476 = vmatpush1.msra.mxu0 0.0
          %1477 = vmatprep.subr.mxu0 0.0
          %1478 = vmatpush1.msra.mxu0 0.0
          %1479 = vmatprep.subr.mxu0 0.0
          %1480 = vmatpush1.msra.mxu0 0.0
          %1481 = vmatprep.subr.mxu0 0.0
          %1482 = vmatpush1.msra.mxu0 0.0
          %1483 = vmatprep.subr.mxu0 0.0
          %1484 = vmatpush1.msra.mxu0 0.0
          %1485 = vmatprep.subr.mxu0 0.0
          %1486 = vmatpush1.msra.mxu0 0.0
          %1487 = vmatprep.subr.mxu0 0.0
          %1488 = vmatpush1.msra.mxu0 0.0
          %1489 = vmatprep.subr.mxu0 0.0
          %1490 = vmatpush1.msra.mxu0 0.0
          %1491 = vmatprep.subr.mxu0 0.0
          %1492 = vmatpush1.msra.mxu0 0.0
          %1493 = vmatprep.subr.mxu0 0.0
          %1494 = vmatpush1.msra.mxu0 0.0
          %1495 = vmatprep.subr.mxu0 0.0
          %1496 = vmatpush1.msra.mxu0 0.0
          %1497 = vmatprep.subr.mxu0 0.0
          %1498 = vmatpush1.msra.mxu0 0.0
          %1499 = vmatprep.subr.mxu0 0.0
          %1500 = vmatpush1.msra.mxu0 0.0
          %1501 = vmatprep.subr.mxu0 0.0
          %1502 = vmatpush1.msra.mxu0 0.0
          %1503 = vmatprep.subr.mxu0 0.0
          %1504 = vmatpush1.msra.mxu0 0.0
          %1505 = vmatprep.subr.mxu0 0.0
          %1506 = vmatpush1.msra.mxu0 0.0
          %1507 = vmatprep.subr.mxu0 0.0
          %1508 = vmatpush1.msra.mxu0 0.0
          %1509 = vmatprep.subr.mxu0 0.0
          %1510 = vmatpush1.msra.mxu0 0.0
          %1511 = vmatprep.subr.mxu0 0.0
          %1512 = vmatpush1.msra.mxu0 0.0
          %1513 = vmatprep.subr.mxu0 0.0
          %1514 = vmatpush1.msra.mxu0 0.0
          %1515 = vmatprep.subr.mxu0 0.0
          %1516 = vmatpush1.msra.mxu0 0.0
          %1517 = vmatprep.subr.mxu0 0.0
          %1518 = vmatpush1.msra.mxu0 0.0
          %1519 = vmatprep.subr.mxu0 0.0
          %1520 = vmatpush1.msra.mxu0 0.0
          %1521 = vmatprep.mubr.f32.mxu0 0.0
          %1522 = vmatmul.mubr.f32.gmra.mrb[0].mxu0 %v1448
          %v1523 = vpop.f32.mrb[0].mxu0
          %v1524 = vadd.f32 0.0, %v1523
          %v1525 = vpop.f32.mrb[0].mxu0
          %1526 = vmatprep.mubr.f32.mxu0 0.0
          %1527 = vmatmul.mubr.f32.gmra.mrb[0].mxu0 %v1451
          %v1528 = vpop.f32.mrb[0].mxu0
          %v1529 = vadd.f32 0.0, %v1528
          %v1530 = vpop.f32.mrb[0].mxu0
          %1531 = vdwg.mxu0
          %v1533 = vsel %vm1453, %v405, 0
          %1535 = vmatprep.subr.mxu0 0.0
          %1536 = vmatpush1.msra.mxu0 %v404
          %1537 = vmatprep.subr.mxu0 0.0
          %1538 = vmatpush1.msra.mxu0 %v1533
          %1539 = vmatprep.subr.mxu0 0.0
          %1540 = vmatpush1.msra.mxu0 0.0
          %1541 = vmatprep.subr.mxu0 0.0
          %1542 = vmatpush1.msra.mxu0 0.0
          %1543 = vmatprep.subr.mxu0 0.0
          %1544 = vmatpush1.msra.mxu0 0.0
          %1545 = vmatprep.subr.mxu0 0.0
          %1546 = vmatpush1.msra.mxu0 0.0
          %1547 = vmatprep.subr.mxu0 0.0
          %1548 = vmatpush1.msra.mxu0 0.0
          %1549 = vmatprep.subr.mxu0 0.0
          %1550 = vmatpush1.msra.mxu0 0.0
          %1551 = vmatprep.subr.mxu0 0.0
          %1552 = vmatpush1.msra.mxu0 0.0
          %1553 = vmatprep.subr.mxu0 0.0
          %1554 = vmatpush1.msra.mxu0 0.0
          %1555 = vmatprep.subr.mxu0 0.0
          %1556 = vmatpush1.msra.mxu0 0.0
          %1557 = vmatprep.subr.mxu0 0.0
          %1558 = vmatpush1.msra.mxu0 0.0
          %1559 = vmatprep.subr.mxu0 0.0
          %1560 = vmatpush1.msra.mxu0 0.0
          %1561 = vmatprep.subr.mxu0 0.0
          %1562 = vmatpush1.msra.mxu0 0.0
          %1563 = vmatprep.subr.mxu0 0.0
          %1564 = vmatpush1.msra.mxu0 0.0
          %1565 = vmatprep.subr.mxu0 0.0
          %1566 = vmatpush1.msra.mxu0 0.0
          %1567 = vmatprep.subr.mxu0 0.0
          %1568 = vmatpush1.msra.mxu0 0.0
          %1569 = vmatprep.subr.mxu0 0.0
          %1570 = vmatpush1.msra.mxu0 0.0
          %1571 = vmatprep.subr.mxu0 0.0
          %1572 = vmatpush1.msra.mxu0 0.0
          %1573 = vmatprep.subr.mxu0 0.0
          %1574 = vmatpush1.msra.mxu0 0.0
          %1575 = vmatprep.subr.mxu0 0.0
          %1576 = vmatpush1.msra.mxu0 0.0
          %1577 = vmatprep.subr.mxu0 0.0
          %1578 = vmatpush1.msra.mxu0 0.0
          %1579 = vmatprep.subr.mxu0 0.0
          %1580 = vmatpush1.msra.mxu0 0.0
          %1581 = vmatprep.subr.mxu0 0.0
          %1582 = vmatpush1.msra.mxu0 0.0
          %1583 = vmatprep.subr.mxu0 0.0
          %1584 = vmatpush1.msra.mxu0 0.0
          %1585 = vmatprep.subr.mxu0 0.0
          %1586 = vmatpush1.msra.mxu0 0.0
          %1587 = vmatprep.subr.mxu0 0.0
          %1588 = vmatpush1.msra.mxu0 0.0
          %1589 = vmatprep.subr.mxu0 0.0
          %1590 = vmatpush1.msra.mxu0 0.0
          %1591 = vmatprep.subr.mxu0 0.0
          %1592 = vmatpush1.msra.mxu0 0.0
          %1593 = vmatprep.subr.mxu0 0.0
          %1594 = vmatpush1.msra.mxu0 0.0
          %1595 = vmatprep.subr.mxu0 0.0
          %1596 = vmatpush1.msra.mxu0 0.0
          %1597 = vmatprep.subr.mxu0 0.0
          %1598 = vmatpush1.msra.mxu0 0.0
          %1599 = vmatprep.mubr.f32.mxu0 0.0
          %1600 = vmatmul.mubr.f32.gmra.mrb[0].mxu0 %v1448
          %v1601 = vpop.f32.mrb[0].mxu0
          %v1602 = vadd.f32 0.0, %v1601
          %v1603 = vpop.f32.mrb[0].mxu0
          %1604 = vmatprep.mubr.f32.mxu0 0.0
          %1605 = vmatmul.mubr.f32.gmra.mrb[0].mxu0 %v1451
          %v1606 = vpop.f32.mrb[0].mxu0
          %v1607 = vadd.f32 0.0, %v1606
          %v1608 = vpop.f32.mrb[0].mxu0
          %1609 = vdwg.mxu0
          %v1610 = vmax.f32 %v1524, %v1602
          %v1611 = vmax.f32 %v1529, %v1607
          %v1612 = vpack.c.bf16 %v1611, %v1610
          %v1614 = vunpack.c.l.b16 %v1612
          %v1615 = vunpack.c.h.b16 %v1612
          %v1616 = vpack.c.b16 %v1614, %v1614
          %v1617 = vpack.c.b16 %v1615, %v1615
          %s1620 = smul.addr %s412, 4
          %s1621 = scalar_lea.vmem [#allocation2], %s1620
          %vm1622 = vcmask 52224
          %1623 = vst.msk [vmem:[%s1621] sm:$0xf] %vm1622, %v1616
          %vm1624 = vcmask 49152
          %1625 = vst.msk [vmem:[%s1621 + $0x4] sm:$0x1] %vm1624, %v1617
        $region69: #{pnet_forward.1} parent=59 // loop_footer
          %s411 = sadd.s32 1, %s407
        $region70: #{pnet_forward.1} parent=59 // loop_footer_branch
          %406 = sbr.rel target = $region66
        $region71: #{pnet_forward.1} parent=59 // loop_exit
          _
        loop: start=0, step=1, limit=5
        $region72: #{pnet_forward.1} parent=59 // loop_pre_header
          _
        $region73: #{pnet_forward.1} parent=59 // loop_header
          %s1627 = sphi 0, %s1631
          %p1628 = scmp.ge.s32.totalorder %s1627, 5
        $region74: #{pnet_forward.1} parent=59 // loop_header_branch
          %1630 = sbr.rel (%p1628) target = $region78
        $region75: #{pnet_forward.1} parent=59 // loop_body
          %v1632 = vld [vmem:[%s3] sm:$0xf]
          %v1633 = vld [vmem:[%s3 + $0x4] sm:$0xf]
          %s1634 = smul.u32 %s1627, 2
          %s1635 = smul.addr %s1634, 4
          %s1636 = scalar_lea.vmem [#allocation2], %s1635
          %v1637 = vld [vmem:[%s1636] sm:$0xf]
          %v1638 = vld [vmem:[%s1636 + $0x4] sm:$0x1]
          %s1639 = scalar_lea.vmem %s3, 8
          %v1640 = vld [vmem:[%s1639] sm:$0xf]
          %v1641 = vld [vmem:[%s1639 + $0x4] sm:$0xf]
          %v1644 = vunpack.c.l.b16 %v1640
          %v1645 = vunpack.c.l.b16 %v1641
          %v1646 = vpack.c.b16 %v1645, %v1644
          %v1649 = vunpack.c.l.b16 %v1637
          %v1650 = vunpack.c.l.b16 %v1638
          %v1651 = vpack.c.b16 %v1650, %v1649
          %1652 = vrot.lane.b32.xlu0 %v1651, 127
          %v1653 = vpop.permute.xlu0 %1652
          %vm1654 = vcmask 80896
          %v1656 = vsel %vm1654, %v1646, 0
          %vm1658 = vcmask 1044480
          %v1660 = vsel %vm1658, %v1653, 0
          %1662 = vmatprep.subr.bf16.mxu0 0
          %1663 = vmatpush1.bf16.msra.mxu0 %v1660
          %1664 = vmatprep.subr.bf16.mxu0 0
          %1665 = vmatpush1.bf16.msra.mxu0 0
          %1666 = vmatprep.subr.bf16.mxu0 0
          %1667 = vmatpush1.bf16.msra.mxu0 0
          %1668 = vmatprep.subr.bf16.mxu0 0
          %1669 = vmatpush1.bf16.msra.mxu0 0
          %1670 = vmatprep.subr.bf16.mxu0 0
          %1671 = vmatpush1.bf16.msra.mxu0 0
          %1672 = vmatprep.subr.bf16.mxu0 0
          %1673 = vmatpush1.bf16.msra.mxu0 0
          %1674 = vmatprep.subr.bf16.mxu0 0
          %1675 = vmatpush1.bf16.msra.mxu0 0
          %1676 = vmatprep.subr.bf16.mxu0 0
          %1677 = vmatpush1.bf16.msra.mxu0 0
          %1678 = vmatprep.subr.bf16.mxu0 0
          %1679 = vmatpush1.bf16.msra.mxu0 0
          %1680 = vmatprep.subr.bf16.mxu0 0
          %1681 = vmatpush1.bf16.msra.mxu0 0
          %1682 = vmatprep.subr.bf16.mxu0 0
          %1683 = vmatpush1.bf16.msra.mxu0 0
          %1684 = vmatprep.subr.bf16.mxu0 0
          %1685 = vmatpush1.bf16.msra.mxu0 0
          %1686 = vmatprep.subr.bf16.mxu0 0
          %1687 = vmatpush1.bf16.msra.mxu0 0
          %1688 = vmatprep.subr.bf16.mxu0 0
          %1689 = vmatpush1.bf16.msra.mxu0 0
          %1690 = vmatprep.subr.bf16.mxu0 0
          %1691 = vmatpush1.bf16.msra.mxu0 0
          %1692 = vmatprep.subr.bf16.mxu0 0
          %1693 = vmatpush1.bf16.msra.mxu0 0
          %1694 = vmatprep.mubr.bf16.mxu0 0
          %1695 = vmatmul.mubr.bf16.gmra.mrb[0].mxu0 %v1656
          %v1696 = vpop.f32.mrb[0].mxu0
          %v1697 = vadd.f32 0.0, %v1696
          %v1698 = vpop.f32.mrb[0].mxu0
          %v1699 = vpop.f32.mrb[0].mxu0
          %v1700 = vadd.f32 0.0, %v1699
          %v1701 = vpop.f32.mrb[0].mxu0
          %1702 = vdwg.mxu0
          %v1705 = vunpack.c.l.b16 %v1632
          %v1706 = vunpack.c.l.b16 %v1633
          %v1707 = vpack.c.b16 %v1706, %v1705
          %v1709 = vsel %vm1654, %v1707, 0
          %v1712 = vsel %vm1658, %v1651, 0
          %1714 = vmatprep.subr.bf16.mxu0 0
          %1715 = vmatpush1.bf16.msra.mxu0 %v1712
          %1716 = vmatprep.subr.bf16.mxu0 0
          %1717 = vmatpush1.bf16.msra.mxu0 0
          %1718 = vmatprep.subr.bf16.mxu0 0
          %1719 = vmatpush1.bf16.msra.mxu0 0
          %1720 = vmatprep.subr.bf16.mxu0 0
          %1721 = vmatpush1.bf16.msra.mxu0 0
          %1722 = vmatprep.subr.bf16.mxu0 0
          %1723 = vmatpush1.bf16.msra.mxu0 0
          %1724 = vmatprep.subr.bf16.mxu0 0
          %1725 = vmatpush1.bf16.msra.mxu0 0
          %1726 = vmatprep.subr.bf16.mxu0 0
          %1727 = vmatpush1.bf16.msra.mxu0 0
          %1728 = vmatprep.subr.bf16.mxu0 0
          %1729 = vmatpush1.bf16.msra.mxu0 0
          %1730 = vmatprep.subr.bf16.mxu0 0
          %1731 = vmatpush1.bf16.msra.mxu0 0
          %1732 = vmatprep.subr.bf16.mxu0 0
          %1733 = vmatpush1.bf16.msra.mxu0 0
          %1734 = vmatprep.subr.bf16.mxu0 0
          %1735 = vmatpush1.bf16.msra.mxu0 0
          %1736 = vmatprep.subr.bf16.mxu0 0
          %1737 = vmatpush1.bf16.msra.mxu0 0
          %1738 = vmatprep.subr.bf16.mxu0 0
          %1739 = vmatpush1.bf16.msra.mxu0 0
          %1740 = vmatprep.subr.bf16.mxu0 0
          %1741 = vmatpush1.bf16.msra.mxu0 0
          %1742 = vmatprep.subr.bf16.mxu0 0
          %1743 = vmatpush1.bf16.msra.mxu0 0
          %1744 = vmatprep.subr.bf16.mxu0 0
          %1745 = vmatpush1.bf16.msra.mxu0 0
          %1746 = vmatprep.mubr.bf16.mxu0 0
          %1747 = vmatmul.mubr.bf16.gmra.mrb[0].mxu0 %v1709
          %v1748 = vpop.f32.mrb[0].mxu0
          %v1749 = vadd.f32 %v1697, %v1748
          %v1750 = vpop.f32.mrb[0].mxu0
          %v1751 = vpop.f32.mrb[0].mxu0
          %v1752 = vadd.f32 %v1700, %v1751
          %v1753 = vpop.f32.mrb[0].mxu0
          %1754 = vdwg.mxu0
          %s1755 = scalar_lea.vmem %s3, 16
          %v1756 = vld [vmem:[%s1755] sm:$0xf]
          %v1757 = vld [vmem:[%s1755 + $0x4] sm:$0xf]
          %v1760 = vunpack.c.l.b16 %v1756
          %v1761 = vunpack.c.l.b16 %v1757
          %v1762 = vpack.c.b16 %v1761, %v1760
          %1763 = vrot.lane.b32.xlu0 %v1651, 126
          %v1764 = vpop.permute.xlu0 %1763
          %v1766 = vsel %vm1654, %v1762, 0
          %v1769 = vsel %vm1658, %v1764, 0
          %1771 = vmatprep.subr.bf16.mxu0 0
          %1772 = vmatpush1.bf16.msra.mxu0 %v1769
          %1773 = vmatprep.subr.bf16.mxu0 0
          %1774 = vmatpush1.bf16.msra.mxu0 0
          %1775 = vmatprep.subr.bf16.mxu0 0
          %1776 = vmatpush1.bf16.msra.mxu0 0
          %1777 = vmatprep.subr.bf16.mxu0 0
          %1778 = vmatpush1.bf16.msra.mxu0 0
          %1779 = vmatprep.subr.bf16.mxu0 0
          %1780 = vmatpush1.bf16.msra.mxu0 0
          %1781 = vmatprep.subr.bf16.mxu0 0
          %1782 = vmatpush1.bf16.msra.mxu0 0
          %1783 = vmatprep.subr.bf16.mxu0 0
          %1784 = vmatpush1.bf16.msra.mxu0 0
          %1785 = vmatprep.subr.bf16.mxu0 0
          %1786 = vmatpush1.bf16.msra.mxu0 0
          %1787 = vmatprep.subr.bf16.mxu0 0
          %1788 = vmatpush1.bf16.msra.mxu0 0
          %1789 = vmatprep.subr.bf16.mxu0 0
          %1790 = vmatpush1.bf16.msra.mxu0 0
          %1791 = vmatprep.subr.bf16.mxu0 0
          %1792 = vmatpush1.bf16.msra.mxu0 0
          %1793 = vmatprep.subr.bf16.mxu0 0
          %1794 = vmatpush1.bf16.msra.mxu0 0
          %1795 = vmatprep.subr.bf16.mxu0 0
          %1796 = vmatpush1.bf16.msra.mxu0 0
          %1797 = vmatprep.subr.bf16.mxu0 0
          %1798 = vmatpush1.bf16.msra.mxu0 0
          %1799 = vmatprep.subr.bf16.mxu0 0
          %1800 = vmatpush1.bf16.msra.mxu0 0
          %1801 = vmatprep.subr.bf16.mxu0 0
          %1802 = vmatpush1.bf16.msra.mxu0 0
          %1803 = vmatprep.mubr.bf16.mxu0 0
          %1804 = vmatmul.mubr.bf16.gmra.mrb[0].mxu0 %v1766
          %v1805 = vpop.f32.mrb[0].mxu0
          %v1806 = vadd.f32 0.0, %v1805
          %v1807 = vpop.f32.mrb[0].mxu0
          %v1808 = vpop.f32.mrb[0].mxu0
          %v1809 = vadd.f32 0.0, %v1808
          %v1810 = vpop.f32.mrb[0].mxu0
          %1811 = vdwg.mxu0
          %v1812 = vadd.f32 %v1749, %v1806
          %v1813 = vadd.f32 %v1752, %v1809
          %s1814 = scalar_lea.vmem %s3, 24
          %v1815 = vld [vmem:[%s1814] sm:$0xf]
          %v1816 = vld [vmem:[%s1814 + $0x4] sm:$0xf]
          %s1817 = sadd.s32 %s1627, 1
          %s1818 = smul.u32 %s1817, 2
          %s1819 = smul.addr %s1818, 4
          %s1820 = scalar_lea.vmem [#allocation2], %s1819
          %v1821 = vld [vmem:[%s1820] sm:$0xf]
          %v1822 = vld [vmem:[%s1820 + $0x4] sm:$0x1]
          %v1825 = vunpack.c.l.b16 %v1815
          %v1826 = vunpack.c.l.b16 %v1816
          %v1827 = vpack.c.b16 %v1826, %v1825
          %v1830 = vunpack.c.l.b16 %v1821
          %v1831 = vunpack.c.l.b16 %v1822
          %v1832 = vpack.c.b16 %v1831, %v1830
          %v1834 = vsel %vm1654, %v1827, 0
          %v1837 = vsel %vm1658, %v1832, 0
          %1839 = vmatprep.subr.bf16.mxu0 0
          %1840 = vmatpush1.bf16.msra.mxu0 %v1837
          %1841 = vmatprep.subr.bf16.mxu0 0
          %1842 = vmatpush1.bf16.msra.mxu0 0
          %1843 = vmatprep.subr.bf16.mxu0 0
          %1844 = vmatpush1.bf16.msra.mxu0 0
          %1845 = vmatprep.subr.bf16.mxu0 0
          %1846 = vmatpush1.bf16.msra.mxu0 0
          %1847 = vmatprep.subr.bf16.mxu0 0
          %1848 = vmatpush1.bf16.msra.mxu0 0
          %1849 = vmatprep.subr.bf16.mxu0 0
          %1850 = vmatpush1.bf16.msra.mxu0 0
          %1851 = vmatprep.subr.bf16.mxu0 0
          %1852 = vmatpush1.bf16.msra.mxu0 0
          %1853 = vmatprep.subr.bf16.mxu0 0
          %1854 = vmatpush1.bf16.msra.mxu0 0
          %1855 = vmatprep.subr.bf16.mxu0 0
          %1856 = vmatpush1.bf16.msra.mxu0 0
          %1857 = vmatprep.subr.bf16.mxu0 0
          %1858 = vmatpush1.bf16.msra.mxu0 0
          %1859 = vmatprep.subr.bf16.mxu0 0
          %1860 = vmatpush1.bf16.msra.mxu0 0
          %1861 = vmatprep.subr.bf16.mxu0 0
          %1862 = vmatpush1.bf16.msra.mxu0 0
          %1863 = vmatprep.subr.bf16.mxu0 0
          %1864 = vmatpush1.bf16.msra.mxu0 0
          %1865 = vmatprep.subr.bf16.mxu0 0
          %1866 = vmatpush1.bf16.msra.mxu0 0
          %1867 = vmatprep.subr.bf16.mxu0 0
          %1868 = vmatpush1.bf16.msra.mxu0 0
          %1869 = vmatprep.subr.bf16.mxu0 0
          %1870 = vmatpush1.bf16.msra.mxu0 0
          %1871 = vmatprep.mubr.bf16.mxu0 0
          %1872 = vmatmul.mubr.bf16.gmra.mrb[0].mxu0 %v1834
          %v1873 = vpop.f32.mrb[0].mxu0
          %v1874 = vadd.f32 0.0, %v1873
          %v1875 = vpop.f32.mrb[0].mxu0
          %v1876 = vpop.f32.mrb[0].mxu0
          %v1877 = vadd.f32 0.0, %v1876
          %v1878 = vpop.f32.mrb[0].mxu0
          %1879 = vdwg.mxu0
          %v1880 = vadd.f32 %v1812, %v1874
          %v1881 = vadd.f32 %v1813, %v1877
          %s1882 = scalar_lea.vmem %s3, 32
          %v1883 = vld [vmem:[%s1882] sm:$0xf]
          %v1884 = vld [vmem:[%s1882 + $0x4] sm:$0xf]
          %v1887 = vunpack.c.l.b16 %v1883
          %v1888 = vunpack.c.l.b16 %v1884
          %v1889 = vpack.c.b16 %v1888, %v1887
          %1890 = vrot.lane.b32.xlu0 %v1832, 127
          %v1891 = vpop.permute.xlu0 %1890
          %v1893 = vsel %vm1654, %v1889, 0
          %v1896 = vsel %vm1658, %v1891, 0
          %1898 = vmatprep.subr.bf16.mxu0 0
          %1899 = vmatpush1.bf16.msra.mxu0 %v1896
          %1900 = vmatprep.subr.bf16.mxu0 0
          %1901 = vmatpush1.bf16.msra.mxu0 0
          %1902 = vmatprep.subr.bf16.mxu0 0
          %1903 = vmatpush1.bf16.msra.mxu0 0
          %1904 = vmatprep.subr.bf16.mxu0 0
          %1905 = vmatpush1.bf16.msra.mxu0 0
          %1906 = vmatprep.subr.bf16.mxu0 0
          %1907 = vmatpush1.bf16.msra.mxu0 0
          %1908 = vmatprep.subr.bf16.mxu0 0
          %1909 = vmatpush1.bf16.msra.mxu0 0
          %1910 = vmatprep.subr.bf16.mxu0 0
          %1911 = vmatpush1.bf16.msra.mxu0 0
          %1912 = vmatprep.subr.bf16.mxu0 0
          %1913 = vmatpush1.bf16.msra.mxu0 0
          %1914 = vmatprep.subr.bf16.mxu0 0
          %1915 = vmatpush1.bf16.msra.mxu0 0
          %1916 = vmatprep.subr.bf16.mxu0 0
          %1917 = vmatpush1.bf16.msra.mxu0 0
          %1918 = vmatprep.subr.bf16.mxu0 0
          %1919 = vmatpush1.bf16.msra.mxu0 0
          %1920 = vmatprep.subr.bf16.mxu0 0
          %1921 = vmatpush1.bf16.msra.mxu0 0
          %1922 = vmatprep.subr.bf16.mxu0 0
          %1923 = vmatpush1.bf16.msra.mxu0 0
          %1924 = vmatprep.subr.bf16.mxu0 0
          %1925 = vmatpush1.bf16.msra.mxu0 0
          %1926 = vmatprep.subr.bf16.mxu0 0
          %1927 = vmatpush1.bf16.msra.mxu0 0
          %1928 = vmatprep.subr.bf16.mxu0 0
          %1929 = vmatpush1.bf16.msra.mxu0 0
          %1930 = vmatprep.mubr.bf16.mxu0 0
          %1931 = vmatmul.mubr.bf16.gmra.mrb[0].mxu0 %v1893
          %v1932 = vpop.f32.mrb[0].mxu0
          %v1933 = vadd.f32 0.0, %v1932
          %v1934 = vpop.f32.mrb[0].mxu0
          %v1935 = vpop.f32.mrb[0].mxu0
          %v1936 = vadd.f32 0.0, %v1935
          %v1937 = vpop.f32.mrb[0].mxu0
          %1938 = vdwg.mxu0
          %v1939 = vadd.f32 %v1880, %v1933
          %v1940 = vadd.f32 %v1881, %v1936
          %s1941 = scalar_lea.vmem %s3, 40
          %v1942 = vld [vmem:[%s1941] sm:$0xf]
          %v1943 = vld [vmem:[%s1941 + $0x4] sm:$0xf]
          %v1946 = vunpack.c.l.b16 %v1942
          %v1947 = vunpack.c.l.b16 %v1943
          %v1948 = vpack.c.b16 %v1947, %v1946
          %1949 = vrot.lane.b32.xlu0 %v1832, 126
          %v1950 = vpop.permute.xlu0 %1949
          %v1952 = vsel %vm1654, %v1948, 0
          %v1955 = vsel %vm1658, %v1950, 0
          %1957 = vmatprep.subr.bf16.mxu0 0
          %1958 = vmatpush1.bf16.msra.mxu0 %v1955
          %1959 = vmatprep.subr.bf16.mxu0 0
          %1960 = vmatpush1.bf16.msra.mxu0 0
          %1961 = vmatprep.subr.bf16.mxu0 0
          %1962 = vmatpush1.bf16.msra.mxu0 0
          %1963 = vmatprep.subr.bf16.mxu0 0
          %1964 = vmatpush1.bf16.msra.mxu0 0
          %1965 = vmatprep.subr.bf16.mxu0 0
          %1966 = vmatpush1.bf16.msra.mxu0 0
          %1967 = vmatprep.subr.bf16.mxu0 0
          %1968 = vmatpush1.bf16.msra.mxu0 0
          %1969 = vmatprep.subr.bf16.mxu0 0
          %1970 = vmatpush1.bf16.msra.mxu0 0
          %1971 = vmatprep.subr.bf16.mxu0 0
          %1972 = vmatpush1.bf16.msra.mxu0 0
          %1973 = vmatprep.subr.bf16.mxu0 0
          %1974 = vmatpush1.bf16.msra.mxu0 0
          %1975 = vmatprep.subr.bf16.mxu0 0
          %1976 = vmatpush1.bf16.msra.mxu0 0
          %1977 = vmatprep.subr.bf16.mxu0 0
          %1978 = vmatpush1.bf16.msra.mxu0 0
          %1979 = vmatprep.subr.bf16.mxu0 0
          %1980 = vmatpush1.bf16.msra.mxu0 0
          %1981 = vmatprep.subr.bf16.mxu0 0
          %1982 = vmatpush1.bf16.msra.mxu0 0
          %1983 = vmatprep.subr.bf16.mxu0 0
          %1984 = vmatpush1.bf16.msra.mxu0 0
          %1985 = vmatprep.subr.bf16.mxu0 0
          %1986 = vmatpush1.bf16.msra.mxu0 0
          %1987 = vmatprep.subr.bf16.mxu0 0
          %1988 = vmatpush1.bf16.msra.mxu0 0
          %1989 = vmatprep.mubr.bf16.mxu0 0
          %1990 = vmatmul.mubr.bf16.gmra.mrb[0].mxu0 %v1952
          %v1991 = vpop.f32.mrb[0].mxu0
          %v1992 = vadd.f32 0.0, %v1991
          %v1993 = vpop.f32.mrb[0].mxu0
          %v1994 = vpop.f32.mrb[0].mxu0
          %v1995 = vadd.f32 0.0, %v1994
          %v1996 = vpop.f32.mrb[0].mxu0
          %1997 = vdwg.mxu0
          %v1998 = vadd.f32 %v1939, %v1992
          %v1999 = vadd.f32 %v1940, %v1995
          %s2000 = scalar_lea.vmem %s3, 48
          %v2001 = vld [vmem:[%s2000] sm:$0xf]
          %v2002 = vld [vmem:[%s2000 + $0x4] sm:$0xf]
          %s2003 = sadd.s32 %s1627, 2
          %s2004 = smul.u32 %s2003, 2
          %s2005 = smul.addr %s2004, 4
          %s2006 = scalar_lea.vmem [#allocation2], %s2005
          %v2007 = vld [vmem:[%s2006] sm:$0xf]
          %v2008 = vld [vmem:[%s2006 + $0x4] sm:$0x1]
          %v2011 = vunpack.c.l.b16 %v2001
          %v2012 = vunpack.c.l.b16 %v2002
          %v2013 = vpack.c.b16 %v2012, %v2011
          %v2016 = vunpack.c.l.b16 %v2007
          %v2017 = vunpack.c.l.b16 %v2008
          %v2018 = vpack.c.b16 %v2017, %v2016
          %v2020 = vsel %vm1654, %v2013, 0
          %v2023 = vsel %vm1658, %v2018, 0
          %2025 = vmatprep.subr.bf16.mxu0 0
          %2026 = vmatpush1.bf16.msra.mxu0 %v2023
          %2027 = vmatprep.subr.bf16.mxu0 0
          %2028 = vmatpush1.bf16.msra.mxu0 0
          %2029 = vmatprep.subr.bf16.mxu0 0
          %2030 = vmatpush1.bf16.msra.mxu0 0
          %2031 = vmatprep.subr.bf16.mxu0 0
          %2032 = vmatpush1.bf16.msra.mxu0 0
          %2033 = vmatprep.subr.bf16.mxu0 0
          %2034 = vmatpush1.bf16.msra.mxu0 0
          %2035 = vmatprep.subr.bf16.mxu0 0
          %2036 = vmatpush1.bf16.msra.mxu0 0
          %2037 = vmatprep.subr.bf16.mxu0 0
          %2038 = vmatpush1.bf16.msra.mxu0 0
          %2039 = vmatprep.subr.bf16.mxu0 0
          %2040 = vmatpush1.bf16.msra.mxu0 0
          %2041 = vmatprep.subr.bf16.mxu0 0
          %2042 = vmatpush1.bf16.msra.mxu0 0
          %2043 = vmatprep.subr.bf16.mxu0 0
          %2044 = vmatpush1.bf16.msra.mxu0 0
          %2045 = vmatprep.subr.bf16.mxu0 0
          %2046 = vmatpush1.bf16.msra.mxu0 0
          %2047 = vmatprep.subr.bf16.mxu0 0
          %2048 = vmatpush1.bf16.msra.mxu0 0
          %2049 = vmatprep.subr.bf16.mxu0 0
          %2050 = vmatpush1.bf16.msra.mxu0 0
          %2051 = vmatprep.subr.bf16.mxu0 0
          %2052 = vmatpush1.bf16.msra.mxu0 0
          %2053 = vmatprep.subr.bf16.mxu0 0
          %2054 = vmatpush1.bf16.msra.mxu0 0
          %2055 = vmatprep.subr.bf16.mxu0 0
          %2056 = vmatpush1.bf16.msra.mxu0 0
          %2057 = vmatprep.mubr.bf16.mxu0 0
          %2058 = vmatmul.mubr.bf16.gmra.mrb[0].mxu0 %v2020
          %v2059 = vpop.f32.mrb[0].mxu0
          %v2060 = vadd.f32 0.0, %v2059
          %v2061 = vpop.f32.mrb[0].mxu0
          %v2062 = vpop.f32.mrb[0].mxu0
          %v2063 = vadd.f32 0.0, %v2062
          %v2064 = vpop.f32.mrb[0].mxu0
          %2065 = vdwg.mxu0
          %v2066 = vadd.f32 %v1998, %v2060
          %v2067 = vadd.f32 %v1999, %v2063
          %s2068 = scalar_lea.vmem %s3, 56
          %v2069 = vld [vmem:[%s2068] sm:$0xf]
          %v2070 = vld [vmem:[%s2068 + $0x4] sm:$0xf]
          %v2073 = vunpack.c.l.b16 %v2069
          %v2074 = vunpack.c.l.b16 %v2070
          %v2075 = vpack.c.b16 %v2074, %v2073
          %2076 = vrot.lane.b32.xlu0 %v2018, 127
          %v2077 = vpop.permute.xlu0 %2076
          %v2079 = vsel %vm1654, %v2075, 0
          %v2082 = vsel %vm1658, %v2077, 0
          %2084 = vmatprep.subr.bf16.mxu0 0
          %2085 = vmatpush1.bf16.msra.mxu0 %v2082
          %2086 = vmatprep.subr.bf16.mxu0 0
          %2087 = vmatpush1.bf16.msra.mxu0 0
          %2088 = vmatprep.subr.bf16.mxu0 0
          %2089 = vmatpush1.bf16.msra.mxu0 0
          %2090 = vmatprep.subr.bf16.mxu0 0
          %2091 = vmatpush1.bf16.msra.mxu0 0
          %2092 = vmatprep.subr.bf16.mxu0 0
          %2093 = vmatpush1.bf16.msra.mxu0 0
          %2094 = vmatprep.subr.bf16.mxu0 0
          %2095 = vmatpush1.bf16.msra.mxu0 0
          %2096 = vmatprep.subr.bf16.mxu0 0
          %2097 = vmatpush1.bf16.msra.mxu0 0
          %2098 = vmatprep.subr.bf16.mxu0 0
          %2099 = vmatpush1.bf16.msra.mxu0 0
          %2100 = vmatprep.subr.bf16.mxu0 0
          %2101 = vmatpush1.bf16.msra.mxu0 0
          %2102 = vmatprep.subr.bf16.mxu0 0
          %2103 = vmatpush1.bf16.msra.mxu0 0
          %2104 = vmatprep.subr.bf16.mxu0 0
          %2105 = vmatpush1.bf16.msra.mxu0 0
          %2106 = vmatprep.subr.bf16.mxu0 0
          %2107 = vmatpush1.bf16.msra.mxu0 0
          %2108 = vmatprep.subr.bf16.mxu0 0
          %2109 = vmatpush1.bf16.msra.mxu0 0
          %2110 = vmatprep.subr.bf16.mxu0 0
          %2111 = vmatpush1.bf16.msra.mxu0 0
          %2112 = vmatprep.subr.bf16.mxu0 0
          %2113 = vmatpush1.bf16.msra.mxu0 0
          %2114 = vmatprep.subr.bf16.mxu0 0
          %2115 = vmatpush1.bf16.msra.mxu0 0
          %2116 = vmatprep.mubr.bf16.mxu0 0
          %2117 = vmatmul.mubr.bf16.gmra.mrb[0].mxu0 %v2079
          %v2118 = vpop.f32.mrb[0].mxu0
          %v2119 = vadd.f32 0.0, %v2118
          %v2120 = vpop.f32.mrb[0].mxu0
          %v2121 = vpop.f32.mrb[0].mxu0
          %v2122 = vadd.f32 0.0, %v2121
          %v2123 = vpop.f32.mrb[0].mxu0
          %2124 = vdwg.mxu0
          %v2125 = vadd.f32 %v2066, %v2119
          %v2126 = vadd.f32 %v2067, %v2122
          %s2127 = scalar_lea.vmem %s3, 64
          %v2128 = vld [vmem:[%s2127] sm:$0xf]
          %v2129 = vld [vmem:[%s2127 + $0x4] sm:$0xf]
          %v2132 = vunpack.c.l.b16 %v2128
          %v2133 = vunpack.c.l.b16 %v2129
          %v2134 = vpack.c.b16 %v2133, %v2132
          %2135 = vrot.lane.b32.xlu0 %v2018, 126
          %v2136 = vpop.permute.xlu0 %2135
          %v2138 = vsel %vm1654, %v2134, 0
          %v2141 = vsel %vm1658, %v2136, 0
          %2143 = vmatprep.subr.bf16.mxu0 0
          %2144 = vmatpush1.bf16.msra.mxu0 %v2141
          %2145 = vmatprep.subr.bf16.mxu0 0
          %2146 = vmatpush1.bf16.msra.mxu0 0
          %2147 = vmatprep.subr.bf16.mxu0 0
          %2148 = vmatpush1.bf16.msra.mxu0 0
          %2149 = vmatprep.subr.bf16.mxu0 0
          %2150 = vmatpush1.bf16.msra.mxu0 0
          %2151 = vmatprep.subr.bf16.mxu0 0
          %2152 = vmatpush1.bf16.msra.mxu0 0
          %2153 = vmatprep.subr.bf16.mxu0 0
          %2154 = vmatpush1.bf16.msra.mxu0 0
          %2155 = vmatprep.subr.bf16.mxu0 0
          %2156 = vmatpush1.bf16.msra.mxu0 0
          %2157 = vmatprep.subr.bf16.mxu0 0
          %2158 = vmatpush1.bf16.msra.mxu0 0
          %2159 = vmatprep.subr.bf16.mxu0 0
          %2160 = vmatpush1.bf16.msra.mxu0 0
          %2161 = vmatprep.subr.bf16.mxu0 0
          %2162 = vmatpush1.bf16.msra.mxu0 0
          %2163 = vmatprep.subr.bf16.mxu0 0
          %2164 = vmatpush1.bf16.msra.mxu0 0
          %2165 = vmatprep.subr.bf16.mxu0 0
          %2166 = vmatpush1.bf16.msra.mxu0 0
          %2167 = vmatprep.subr.bf16.mxu0 0
          %2168 = vmatpush1.bf16.msra.mxu0 0
          %2169 = vmatprep.subr.bf16.mxu0 0
          %2170 = vmatpush1.bf16.msra.mxu0 0
          %2171 = vmatprep.subr.bf16.mxu0 0
          %2172 = vmatpush1.bf16.msra.mxu0 0
          %2173 = vmatprep.subr.bf16.mxu0 0
          %2174 = vmatpush1.bf16.msra.mxu0 0
          %2175 = vmatprep.mubr.bf16.mxu0 0
          %2176 = vmatmul.mubr.bf16.gmra.mrb[0].mxu0 %v2138
          %v2177 = vpop.f32.mrb[0].mxu0
          %v2178 = vadd.f32 0.0, %v2177
          %v2179 = vpop.f32.mrb[0].mxu0
          %v2180 = vpop.f32.mrb[0].mxu0
          %v2181 = vadd.f32 0.0, %v2180
          %v2182 = vpop.f32.mrb[0].mxu0
          %2183 = vdwg.mxu0
          %v2184 = vadd.f32 %v2125, %v2178
          %v2185 = vadd.f32 %v2126, %v2181
          %2187 = vset.pattern.permute.xlu0 0
          %2188 = vperm.xlu0 %2187, %v380
          %v2189 = vpop.permute.xlu0 %2188
          %2192 = vset.pattern.permute.xlu0 0
          %2193 = vperm.xlu0 %2192, %v381
          %v2194 = vpop.permute.xlu0 %2193
          %v2196 = vadd.f32 %v2184, %v2189
          %v2197 = vadd.f32 %v2185, %v2194
          %vm2198 = vcmp.gt.f32.partialorder %v2196, 0.0
          %vm2199 = vcmp.gt.f32.partialorder %v2197, 0.0
          %v2200 = vstv %s376
          %v2201 = vmul.f32 %v2200, %v2196
          %v2202 = vmul.f32 %v2200, %v2197
          %v2203 = vsel %vm2198, %v2196, %v2201
          %v2204 = vsel %vm2199, %v2197, %v2202
          %v2205 = vpack.c.bf16 %v2204, %v2203
          %s2206 = smul.addr %s1627, 8
          %s2207 = scalar_lea.vmem [#allocation3], %s2206
          %vm2208 = vcmask 39936
          %2209 = vst.msk [vmem:[%s2207] sm:$0xff] %vm2208, %v2205
        $region76: #{pnet_forward.1} parent=59 // loop_footer
          %s1631 = sadd.s32 1, %s1627
        $region77: #{pnet_forward.1} parent=59 // loop_footer_branch
          %1626 = sbr.rel target = $region73
        $region78: #{pnet_forward.1} parent=59 // loop_exit
          _
        loop: start=0, step=1, limit=3
        $region79: #{pnet_forward.1} parent=59 // loop_pre_header
          _
        $region80: #{pnet_forward.1} parent=59 // loop_header
          %s2211 = sphi 0, %s2215
          %p2212 = scmp.ge.s32.totalorder %s2211, 3
        $region81: #{pnet_forward.1} parent=59 // loop_header_branch
          %2214 = sbr.rel (%p2212) target = $region85
        $region82: #{pnet_forward.1} parent=59 // loop_body
          %v2216 = vld [vmem:[%s5] sm:$0xf]
          %v2217 = vld [vmem:[%s5 + $0x4] sm:$0xf]
          %v2218 = vld [vmem:[%s5 + $0x8] sm:$0xf]
          %v2219 = vld [vmem:[%s5 + $0xc] sm:$0xf]
          %s2220 = smul.addr %s2211, 8
          %s2221 = scalar_lea.vmem [#allocation3], %s2220
          %v2222 = vld [vmem:[%s2221] sm:$0xff]
          %s2223 = scalar_lea.vmem %s5, 16
          %v2224 = vld [vmem:[%s2223] sm:$0xf]
          %v2225 = vld [vmem:[%s2223 + $0x4] sm:$0xf]
          %v2226 = vld [vmem:[%s2223 + $0x8] sm:$0xf]
          %v2227 = vld [vmem:[%s2223 + $0xc] sm:$0xf]
          %v2232 = vunpack.c.l.b16 %v2224
          %v2233 = vunpack.c.l.b16 %v2225
          %v2234 = vunpack.c.l.b16 %v2226
          %v2235 = vunpack.c.l.b16 %v2227
          %v2236 = vpack.c.b16 %v2233, %v2232
          %v2237 = vpack.c.b16 %v2235, %v2234
          %2239 = vrot.lane.b32.xlu0 %v2222, 127
          %v2240 = vpop.permute.xlu0 %2239
          %vm2242 = vcmask 130048
          %v2244 = vsel %vm2242, %v2236, 0
          %v2247 = vsel %vm2242, %v2237, 0
          %2249 = vmatprep.subr.bf16.mxu0 0
          %2250 = vmatpush1.bf16.msra.mxu0 %v2240
          %2251 = vmatprep.subr.bf16.mxu0 0
          %2252 = vmatpush1.bf16.msra.mxu0 0
          %2253 = vmatprep.subr.bf16.mxu0 0
          %2254 = vmatpush1.bf16.msra.mxu0 0
          %2255 = vmatprep.subr.bf16.mxu0 0
          %2256 = vmatpush1.bf16.msra.mxu0 0
          %2257 = vmatprep.subr.bf16.mxu0 0
          %2258 = vmatpush1.bf16.msra.mxu0 0
          %2259 = vmatprep.subr.bf16.mxu0 0
          %2260 = vmatpush1.bf16.msra.mxu0 0
          %2261 = vmatprep.subr.bf16.mxu0 0
          %2262 = vmatpush1.bf16.msra.mxu0 0
          %2263 = vmatprep.subr.bf16.mxu0 0
          %2264 = vmatpush1.bf16.msra.mxu0 0
          %2265 = vmatprep.subr.bf16.mxu0 0
          %2266 = vmatpush1.bf16.msra.mxu0 0
          %2267 = vmatprep.subr.bf16.mxu0 0
          %2268 = vmatpush1.bf16.msra.mxu0 0
          %2269 = vmatprep.subr.bf16.mxu0 0
          %2270 = vmatpush1.bf16.msra.mxu0 0
          %2271 = vmatprep.subr.bf16.mxu0 0
          %2272 = vmatpush1.bf16.msra.mxu0 0
          %2273 = vmatprep.subr.bf16.mxu0 0
          %2274 = vmatpush1.bf16.msra.mxu0 0
          %2275 = vmatprep.subr.bf16.mxu0 0
          %2276 = vmatpush1.bf16.msra.mxu0 0
          %2277 = vmatprep.subr.bf16.mxu0 0
          %2278 = vmatpush1.bf16.msra.mxu0 0
          %2279 = vmatprep.subr.bf16.mxu0 0
          %2280 = vmatpush1.bf16.msra.mxu0 0
          %2281 = vmatprep.mubr.bf16.mxu0 0
          %2282 = vmatmul.mubr.bf16.gmra.mrb[0].mxu0 %v2244
          %v2283 = vpop.f32.mrb[0].mxu0
          %v2284 = vadd.f32 0.0, %v2283
          %v2285 = vpop.f32.mrb[0].mxu0
          %v2286 = vpop.f32.mrb[0].mxu0
          %v2287 = vadd.f32 0.0, %v2286
          %v2288 = vpop.f32.mrb[0].mxu0
          %2289 = vmatprep.mubr.bf16.mxu0 0
          %2290 = vmatmul.mubr.bf16.gmra.mrb[0].mxu0 %v2247
          %v2291 = vpop.f32.mrb[0].mxu0
          %v2292 = vadd.f32 0.0, %v2291
          %v2293 = vpop.f32.mrb[0].mxu0
          %v2294 = vpop.f32.mrb[0].mxu0
          %v2295 = vadd.f32 0.0, %v2294
          %v2296 = vpop.f32.mrb[0].mxu0
          %2297 = vdwg.mxu0
          %v2302 = vunpack.c.l.b16 %v2216
          %v2303 = vunpack.c.l.b16 %v2217
          %v2304 = vunpack.c.l.b16 %v2218
          %v2305 = vunpack.c.l.b16 %v2219
          %v2306 = vpack.c.b16 %v2303, %v2302
          %v2307 = vpack.c.b16 %v2305, %v2304
          %v2309 = vsel %vm2242, %v2306, 0
          %v2312 = vsel %vm2242, %v2307, 0
          %2314 = vmatprep.subr.bf16.mxu0 0
          %2315 = vmatpush1.bf16.msra.mxu0 %v2222
          %2316 = vmatprep.subr.bf16.mxu0 0
          %2317 = vmatpush1.bf16.msra.mxu0 0
          %2318 = vmatprep.subr.bf16.mxu0 0
          %2319 = vmatpush1.bf16.msra.mxu0 0
          %2320 = vmatprep.subr.bf16.mxu0 0
          %2321 = vmatpush1.bf16.msra.mxu0 0
          %2322 = vmatprep.subr.bf16.mxu0 0
          %2323 = vmatpush1.bf16.msra.mxu0 0
          %2324 = vmatprep.subr.bf16.mxu0 0
          %2325 = vmatpush1.bf16.msra.mxu0 0
          %2326 = vmatprep.subr.bf16.mxu0 0
          %2327 = vmatpush1.bf16.msra.mxu0 0
          %2328 = vmatprep.subr.bf16.mxu0 0
          %2329 = vmatpush1.bf16.msra.mxu0 0
          %2330 = vmatprep.subr.bf16.mxu0 0
          %2331 = vmatpush1.bf16.msra.mxu0 0
          %2332 = vmatprep.subr.bf16.mxu0 0
          %2333 = vmatpush1.bf16.msra.mxu0 0
          %2334 = vmatprep.subr.bf16.mxu0 0
          %2335 = vmatpush1.bf16.msra.mxu0 0
          %2336 = vmatprep.subr.bf16.mxu0 0
          %2337 = vmatpush1.bf16.msra.mxu0 0
          %2338 = vmatprep.subr.bf16.mxu0 0
          %2339 = vmatpush1.bf16.msra.mxu0 0
          %2340 = vmatprep.subr.bf16.mxu0 0
          %2341 = vmatpush1.bf16.msra.mxu0 0
          %2342 = vmatprep.subr.bf16.mxu0 0
          %2343 = vmatpush1.bf16.msra.mxu0 0
          %2344 = vmatprep.subr.bf16.mxu0 0
          %2345 = vmatpush1.bf16.msra.mxu0 0
          %2346 = vmatprep.mubr.bf16.mxu0 0
          %2347 = vmatmul.mubr.bf16.gmra.mrb[0].mxu0 %v2309
          %v2348 = vpop.f32.mrb[0].mxu0
          %v2349 = vadd.f32 %v2284, %v2348
          %v2350 = vpop.f32.mrb[0].mxu0
          %v2351 = vpop.f32.mrb[0].mxu0
          %v2352 = vadd.f32 %v2287, %v2351
          %v2353 = vpop.f32.mrb[0].mxu0
          %2354 = vmatprep.mubr.bf16.mxu0 0
          %2355 = vmatmul.mubr.bf16.gmra.mrb[0].mxu0 %v2312
          %v2356 = vpop.f32.mrb[0].mxu0
          %v2357 = vadd.f32 %v2292, %v2356
          %v2358 = vpop.f32.mrb[0].mxu0
          %v2359 = vpop.f32.mrb[0].mxu0
          %v2360 = vadd.f32 %v2295, %v2359
          %v2361 = vpop.f32.mrb[0].mxu0
          %2362 = vdwg.mxu0
          %s2363 = scalar_lea.vmem %s5, 32
          %v2364 = vld [vmem:[%s2363] sm:$0xf]
          %v2365 = vld [vmem:[%s2363 + $0x4] sm:$0xf]
          %v2366 = vld [vmem:[%s2363 + $0x8] sm:$0xf]
          %v2367 = vld [vmem:[%s2363 + $0xc] sm:$0xf]
          %v2372 = vunpack.c.l.b16 %v2364
          %v2373 = vunpack.c.l.b16 %v2365
          %v2374 = vunpack.c.l.b16 %v2366
          %v2375 = vunpack.c.l.b16 %v2367
          %v2376 = vpack.c.b16 %v2373, %v2372
          %v2377 = vpack.c.b16 %v2375, %v2374
          %2378 = vrot.lane.b32.xlu0 %v2222, 126
          %v2379 = vpop.permute.xlu0 %2378
          %v2382 = vsel %vm2242, %v2376, 0
          %v2385 = vsel %vm2242, %v2377, 0
          %2387 = vmatprep.subr.bf16.mxu0 0
          %2388 = vmatpush1.bf16.msra.mxu0 %v2379
          %2389 = vmatprep.subr.bf16.mxu0 0
          %2390 = vmatpush1.bf16.msra.mxu0 0
          %2391 = vmatprep.subr.bf16.mxu0 0
          %2392 = vmatpush1.bf16.msra.mxu0 0
          %2393 = vmatprep.subr.bf16.mxu0 0
          %2394 = vmatpush1.bf16.msra.mxu0 0
          %2395 = vmatprep.subr.bf16.mxu0 0
          %2396 = vmatpush1.bf16.msra.mxu0 0
          %2397 = vmatprep.subr.bf16.mxu0 0
          %2398 = vmatpush1.bf16.msra.mxu0 0
          %2399 = vmatprep.subr.bf16.mxu0 0
          %2400 = vmatpush1.bf16.msra.mxu0 0
          %2401 = vmatprep.subr.bf16.mxu0 0
          %2402 = vmatpush1.bf16.msra.mxu0 0
          %2403 = vmatprep.subr.bf16.mxu0 0
          %2404 = vmatpush1.bf16.msra.mxu0 0
          %2405 = vmatprep.subr.bf16.mxu0 0
          %2406 = vmatpush1.bf16.msra.mxu0 0
          %2407 = vmatprep.subr.bf16.mxu0 0
          %2408 = vmatpush1.bf16.msra.mxu0 0
          %2409 = vmatprep.subr.bf16.mxu0 0
          %2410 = vmatpush1.bf16.msra.mxu0 0
          %2411 = vmatprep.subr.bf16.mxu0 0
          %2412 = vmatpush1.bf16.msra.mxu0 0
          %2413 = vmatprep.subr.bf16.mxu0 0
          %2414 = vmatpush1.bf16.msra.mxu0 0
          %2415 = vmatprep.subr.bf16.mxu0 0
          %2416 = vmatpush1.bf16.msra.mxu0 0
          %2417 = vmatprep.subr.bf16.mxu0 0
          %2418 = vmatpush1.bf16.msra.mxu0 0
          %2419 = vmatprep.mubr.bf16.mxu0 0
          %2420 = vmatmul.mubr.bf16.gmra.mrb[0].mxu0 %v2382
          %v2421 = vpop.f32.mrb[0].mxu0
          %v2422 = vadd.f32 0.0, %v2421
          %v2423 = vpop.f32.mrb[0].mxu0
          %v2424 = vpop.f32.mrb[0].mxu0
          %v2425 = vadd.f32 0.0, %v2424
          %v2426 = vpop.f32.mrb[0].mxu0
          %2427 = vmatprep.mubr.bf16.mxu0 0
          %2428 = vmatmul.mubr.bf16.gmra.mrb[0].mxu0 %v2385
          %v2429 = vpop.f32.mrb[0].mxu0
          %v2430 = vadd.f32 0.0, %v2429
          %v2431 = vpop.f32.mrb[0].mxu0
          %v2432 = vpop.f32.mrb[0].mxu0
          %v2433 = vadd.f32 0.0, %v2432
          %v2434 = vpop.f32.mrb[0].mxu0
          %2435 = vdwg.mxu0
          %v2436 = vadd.f32 %v2349, %v2422
          %v2437 = vadd.f32 %v2352, %v2425
          %v2438 = vadd.f32 %v2357, %v2430
          %v2439 = vadd.f32 %v2360, %v2433
          %s2440 = scalar_lea.vmem %s5, 48
          %v2441 = vld [vmem:[%s2440] sm:$0xf]
          %v2442 = vld [vmem:[%s2440 + $0x4] sm:$0xf]
          %v2443 = vld [vmem:[%s2440 + $0x8] sm:$0xf]
          %v2444 = vld [vmem:[%s2440 + $0xc] sm:$0xf]
          %s2445 = sadd.s32 %s2211, 1
          %s2446 = smul.addr %s2445, 8
          %s2447 = scalar_lea.vmem [#allocation3], %s2446
          %v2448 = vld [vmem:[%s2447] sm:$0xff]
          %v2453 = vunpack.c.l.b16 %v2441
          %v2454 = vunpack.c.l.b16 %v2442
          %v2455 = vunpack.c.l.b16 %v2443
          %v2456 = vunpack.c.l.b16 %v2444
          %v2457 = vpack.c.b16 %v2454, %v2453
          %v2458 = vpack.c.b16 %v2456, %v2455
          %v2460 = vsel %vm2242, %v2457, 0
          %v2463 = vsel %vm2242, %v2458, 0
          %2465 = vmatprep.subr.bf16.mxu0 0
          %2466 = vmatpush1.bf16.msra.mxu0 %v2448
          %2467 = vmatprep.subr.bf16.mxu0 0
          %2468 = vmatpush1.bf16.msra.mxu0 0
          %2469 = vmatprep.subr.bf16.mxu0 0
          %2470 = vmatpush1.bf16.msra.mxu0 0
          %2471 = vmatprep.subr.bf16.mxu0 0
          %2472 = vmatpush1.bf16.msra.mxu0 0
          %2473 = vmatprep.subr.bf16.mxu0 0
          %2474 = vmatpush1.bf16.msra.mxu0 0
          %2475 = vmatprep.subr.bf16.mxu0 0
          %2476 = vmatpush1.bf16.msra.mxu0 0
          %2477 = vmatprep.subr.bf16.mxu0 0
          %2478 = vmatpush1.bf16.msra.mxu0 0
          %2479 = vmatprep.subr.bf16.mxu0 0
          %2480 = vmatpush1.bf16.msra.mxu0 0
          %2481 = vmatprep.subr.bf16.mxu0 0
          %2482 = vmatpush1.bf16.msra.mxu0 0
          %2483 = vmatprep.subr.bf16.mxu0 0
          %2484 = vmatpush1.bf16.msra.mxu0 0
          %2485 = vmatprep.subr.bf16.mxu0 0
          %2486 = vmatpush1.bf16.msra.mxu0 0
          %2487 = vmatprep.subr.bf16.mxu0 0
          %2488 = vmatpush1.bf16.msra.mxu0 0
          %2489 = vmatprep.subr.bf16.mxu0 0
          %2490 = vmatpush1.bf16.msra.mxu0 0
          %2491 = vmatprep.subr.bf16.mxu0 0
          %2492 = vmatpush1.bf16.msra.mxu0 0
          %2493 = vmatprep.subr.bf16.mxu0 0
          %2494 = vmatpush1.bf16.msra.mxu0 0
          %2495 = vmatprep.subr.bf16.mxu0 0
          %2496 = vmatpush1.bf16.msra.mxu0 0
          %2497 = vmatprep.mubr.bf16.mxu0 0
          %2498 = vmatmul.mubr.bf16.gmra.mrb[0].mxu0 %v2460
          %v2499 = vpop.f32.mrb[0].mxu0
          %v2500 = vadd.f32 0.0, %v2499
          %v2501 = vpop.f32.mrb[0].mxu0
          %v2502 = vpop.f32.mrb[0].mxu0
          %v2503 = vadd.f32 0.0, %v2502
          %v2504 = vpop.f32.mrb[0].mxu0
          %2505 = vmatprep.mubr.bf16.mxu0 0
          %2506 = vmatmul.mubr.bf16.gmra.mrb[0].mxu0 %v2463
          %v2507 = vpop.f32.mrb[0].mxu0
          %v2508 = vadd.f32 0.0, %v2507
          %v2509 = vpop.f32.mrb[0].mxu0
          %v2510 = vpop.f32.mrb[0].mxu0
          %v2511 = vadd.f32 0.0, %v2510
          %v2512 = vpop.f32.mrb[0].mxu0
          %2513 = vdwg.mxu0
          %v2514 = vadd.f32 %v2436, %v2500
          %v2515 = vadd.f32 %v2437, %v2503
          %v2516 = vadd.f32 %v2438, %v2508
          %v2517 = vadd.f32 %v2439, %v2511
          %s2518 = scalar_lea.vmem %s5, 64
          %v2519 = vld [vmem:[%s2518] sm:$0xf]
          %v2520 = vld [vmem:[%s2518 + $0x4] sm:$0xf]
          %v2521 = vld [vmem:[%s2518 + $0x8] sm:$0xf]
          %v2522 = vld [vmem:[%s2518 + $0xc] sm:$0xf]
          %v2527 = vunpack.c.l.b16 %v2519
          %v2528 = vunpack.c.l.b16 %v2520
          %v2529 = vunpack.c.l.b16 %v2521
          %v2530 = vunpack.c.l.b16 %v2522
          %v2531 = vpack.c.b16 %v2528, %v2527
          %v2532 = vpack.c.b16 %v2530, %v2529
          %2534 = vrot.lane.b32.xlu0 %v2448, 127
          %v2535 = vpop.permute.xlu0 %2534
          %v2538 = vsel %vm2242, %v2531, 0
          %v2541 = vsel %vm2242, %v2532, 0
          %2543 = vmatprep.subr.bf16.mxu0 0
          %2544 = vmatpush1.bf16.msra.mxu0 %v2535
          %2545 = vmatprep.subr.bf16.mxu0 0
          %2546 = vmatpush1.bf16.msra.mxu0 0
          %2547 = vmatprep.subr.bf16.mxu0 0
          %2548 = vmatpush1.bf16.msra.mxu0 0
          %2549 = vmatprep.subr.bf16.mxu0 0
          %2550 = vmatpush1.bf16.msra.mxu0 0
          %2551 = vmatprep.subr.bf16.mxu0 0
          %2552 = vmatpush1.bf16.msra.mxu0 0
          %2553 = vmatprep.subr.bf16.mxu0 0
          %2554 = vmatpush1.bf16.msra.mxu0 0
          %2555 = vmatprep.subr.bf16.mxu0 0
          %2556 = vmatpush1.bf16.msra.mxu0 0
          %2557 = vmatprep.subr.bf16.mxu0 0
          %2558 = vmatpush1.bf16.msra.mxu0 0
          %2559 = vmatprep.subr.bf16.mxu0 0
          %2560 = vmatpush1.bf16.msra.mxu0 0
          %2561 = vmatprep.subr.bf16.mxu0 0
          %2562 = vmatpush1.bf16.msra.mxu0 0
          %2563 = vmatprep.subr.bf16.mxu0 0
          %2564 = vmatpush1.bf16.msra.mxu0 0
          %2565 = vmatprep.subr.bf16.mxu0 0
          %2566 = vmatpush1.bf16.msra.mxu0 0
          %2567 = vmatprep.subr.bf16.mxu0 0
          %2568 = vmatpush1.bf16.msra.mxu0 0
          %2569 = vmatprep.subr.bf16.mxu0 0
          %2570 = vmatpush1.bf16.msra.mxu0 0
          %2571 = vmatprep.subr.bf16.mxu0 0
          %2572 = vmatpush1.bf16.msra.mxu0 0
          %2573 = vmatprep.subr.bf16.mxu0 0
          %2574 = vmatpush1.bf16.msra.mxu0 0
          %2575 = vmatprep.mubr.bf16.mxu0 0
          %2576 = vmatmul.mubr.bf16.gmra.mrb[0].mxu0 %v2538
          %v2577 = vpop.f32.mrb[0].mxu0
          %v2578 = vadd.f32 0.0, %v2577
          %v2579 = vpop.f32.mrb[0].mxu0
          %v2580 = vpop.f32.mrb[0].mxu0
          %v2581 = vadd.f32 0.0, %v2580
          %v2582 = vpop.f32.mrb[0].mxu0
          %2583 = vmatprep.mubr.bf16.mxu0 0
          %2584 = vmatmul.mubr.bf16.gmra.mrb[0].mxu0 %v2541
          %v2585 = vpop.f32.mrb[0].mxu0
          %v2586 = vadd.f32 0.0, %v2585
          %v2587 = vpop.f32.mrb[0].mxu0
          %v2588 = vpop.f32.mrb[0].mxu0
          %v2589 = vadd.f32 0.0, %v2588
          %v2590 = vpop.f32.mrb[0].mxu0
          %2591 = vdwg.mxu0
          %v2592 = vadd.f32 %v2514, %v2578
          %v2593 = vadd.f32 %v2515, %v2581
          %v2594 = vadd.f32 %v2516, %v2586
          %v2595 = vadd.f32 %v2517, %v2589
          %s2596 = scalar_lea.vmem %s5, 80
          %v2597 = vld [vmem:[%s2596] sm:$0xf]
          %v2598 = vld [vmem:[%s2596 + $0x4] sm:$0xf]
          %v2599 = vld [vmem:[%s2596 + $0x8] sm:$0xf]
          %v2600 = vld [vmem:[%s2596 + $0xc] sm:$0xf]
          %v2605 = vunpack.c.l.b16 %v2597
          %v2606 = vunpack.c.l.b16 %v2598
          %v2607 = vunpack.c.l.b16 %v2599
          %v2608 = vunpack.c.l.b16 %v2600
          %v2609 = vpack.c.b16 %v2606, %v2605
          %v2610 = vpack.c.b16 %v2608, %v2607
          %2611 = vrot.lane.b32.xlu0 %v2448, 126
          %v2612 = vpop.permute.xlu0 %2611
          %v2615 = vsel %vm2242, %v2609, 0
          %v2618 = vsel %vm2242, %v2610, 0
          %2620 = vmatprep.subr.bf16.mxu0 0
          %2621 = vmatpush1.bf16.msra.mxu0 %v2612
          %2622 = vmatprep.subr.bf16.mxu0 0
          %2623 = vmatpush1.bf16.msra.mxu0 0
          %2624 = vmatprep.subr.bf16.mxu0 0
          %2625 = vmatpush1.bf16.msra.mxu0 0
          %2626 = vmatprep.subr.bf16.mxu0 0
          %2627 = vmatpush1.bf16.msra.mxu0 0
          %2628 = vmatprep.subr.bf16.mxu0 0
          %2629 = vmatpush1.bf16.msra.mxu0 0
          %2630 = vmatprep.subr.bf16.mxu0 0
          %2631 = vmatpush1.bf16.msra.mxu0 0
          %2632 = vmatprep.subr.bf16.mxu0 0
          %2633 = vmatpush1.bf16.msra.mxu0 0
          %2634 = vmatprep.subr.bf16.mxu0 0
          %2635 = vmatpush1.bf16.msra.mxu0 0
          %2636 = vmatprep.subr.bf16.mxu0 0
          %2637 = vmatpush1.bf16.msra.mxu0 0
          %2638 = vmatprep.subr.bf16.mxu0 0
          %2639 = vmatpush1.bf16.msra.mxu0 0
          %2640 = vmatprep.subr.bf16.mxu0 0
          %2641 = vmatpush1.bf16.msra.mxu0 0
          %2642 = vmatprep.subr.bf16.mxu0 0
          %2643 = vmatpush1.bf16.msra.mxu0 0
          %2644 = vmatprep.subr.bf16.mxu0 0
          %2645 = vmatpush1.bf16.msra.mxu0 0
          %2646 = vmatprep.subr.bf16.mxu0 0
          %2647 = vmatpush1.bf16.msra.mxu0 0
          %2648 = vmatprep.subr.bf16.mxu0 0
          %2649 = vmatpush1.bf16.msra.mxu0 0
          %2650 = vmatprep.subr.bf16.mxu0 0
          %2651 = vmatpush1.bf16.msra.mxu0 0
          %2652 = vmatprep.mubr.bf16.mxu0 0
          %2653 = vmatmul.mubr.bf16.gmra.mrb[0].mxu0 %v2615
          %v2654 = vpop.f32.mrb[0].mxu0
          %v2655 = vadd.f32 0.0, %v2654
          %v2656 = vpop.f32.mrb[0].mxu0
          %v2657 = vpop.f32.mrb[0].mxu0
          %v2658 = vadd.f32 0.0, %v2657
          %v2659 = vpop.f32.mrb[0].mxu0
          %2660 = vmatprep.mubr.bf16.mxu0 0
          %2661 = vmatmul.mubr.bf16.gmra.mrb[0].mxu0 %v2618
          %v2662 = vpop.f32.mrb[0].mxu0
          %v2663 = vadd.f32 0.0, %v2662
          %v2664 = vpop.f32.mrb[0].mxu0
          %v2665 = vpop.f32.mrb[0].mxu0
          %v2666 = vadd.f32 0.0, %v2665
          %v2667 = vpop.f32.mrb[0].mxu0
          %2668 = vdwg.mxu0
          %v2669 = vadd.f32 %v2592, %v2655
          %v2670 = vadd.f32 %v2593, %v2658
          %v2671 = vadd.f32 %v2594, %v2663
          %v2672 = vadd.f32 %v2595, %v2666
          %s2673 = scalar_lea.vmem %s5, 96
          %v2674 = vld [vmem:[%s2673] sm:$0xf]
          %v2675 = vld [vmem:[%s2673 + $0x4] sm:$0xf]
          %v2676 = vld [vmem:[%s2673 + $0x8] sm:$0xf]
          %v2677 = vld [vmem:[%s2673 + $0xc] sm:$0xf]
          %s2678 = sadd.s32 %s2211, 2
          %s2679 = smul.addr %s2678, 8
          %s2680 = scalar_lea.vmem [#allocation3], %s2679
          %v2681 = vld [vmem:[%s2680] sm:$0xff]
          %v2686 = vunpack.c.l.b16 %v2674
          %v2687 = vunpack.c.l.b16 %v2675
          %v2688 = vunpack.c.l.b16 %v2676
          %v2689 = vunpack.c.l.b16 %v2677
          %v2690 = vpack.c.b16 %v2687, %v2686
          %v2691 = vpack.c.b16 %v2689, %v2688
          %v2693 = vsel %vm2242, %v2690, 0
          %v2696 = vsel %vm2242, %v2691, 0
          %2698 = vmatprep.subr.bf16.mxu0 0
          %2699 = vmatpush1.bf16.msra.mxu0 %v2681
          %2700 = vmatprep.subr.bf16.mxu0 0
          %2701 = vmatpush1.bf16.msra.mxu0 0
          %2702 = vmatprep.subr.bf16.mxu0 0
          %2703 = vmatpush1.bf16.msra.mxu0 0
          %2704 = vmatprep.subr.bf16.mxu0 0
          %2705 = vmatpush1.bf16.msra.mxu0 0
          %2706 = vmatprep.subr.bf16.mxu0 0
          %2707 = vmatpush1.bf16.msra.mxu0 0
          %2708 = vmatprep.subr.bf16.mxu0 0
          %2709 = vmatpush1.bf16.msra.mxu0 0
          %2710 = vmatprep.subr.bf16.mxu0 0
          %2711 = vmatpush1.bf16.msra.mxu0 0
          %2712 = vmatprep.subr.bf16.mxu0 0
          %2713 = vmatpush1.bf16.msra.mxu0 0
          %2714 = vmatprep.subr.bf16.mxu0 0
          %2715 = vmatpush1.bf16.msra.mxu0 0
          %2716 = vmatprep.subr.bf16.mxu0 0
          %2717 = vmatpush1.bf16.msra.mxu0 0
          %2718 = vmatprep.subr.bf16.mxu0 0
          %2719 = vmatpush1.bf16.msra.mxu0 0
          %2720 = vmatprep.subr.bf16.mxu0 0
          %2721 = vmatpush1.bf16.msra.mxu0 0
          %2722 = vmatprep.subr.bf16.mxu0 0
          %2723 = vmatpush1.bf16.msra.mxu0 0
          %2724 = vmatprep.subr.bf16.mxu0 0
          %2725 = vmatpush1.bf16.msra.mxu0 0
          %2726 = vmatprep.subr.bf16.mxu0 0
          %2727 = vmatpush1.bf16.msra.mxu0 0
          %2728 = vmatprep.subr.bf16.mxu0 0
          %2729 = vmatpush1.bf16.msra.mxu0 0
          %2730 = vmatprep.mubr.bf16.mxu0 0
          %2731 = vmatmul.mubr.bf16.gmra.mrb[0].mxu0 %v2693
          %v2732 = vpop.f32.mrb[0].mxu0
          %v2733 = vadd.f32 0.0, %v2732
          %v2734 = vpop.f32.mrb[0].mxu0
          %v2735 = vpop.f32.mrb[0].mxu0
          %v2736 = vadd.f32 0.0, %v2735
          %v2737 = vpop.f32.mrb[0].mxu0
          %2738 = vmatprep.mubr.bf16.mxu0 0
          %2739 = vmatmul.mubr.bf16.gmra.mrb[0].mxu0 %v2696
          %v2740 = vpop.f32.mrb[0].mxu0
          %v2741 = vadd.f32 0.0, %v2740
          %v2742 = vpop.f32.mrb[0].mxu0
          %v2743 = vpop.f32.mrb[0].mxu0
          %v2744 = vadd.f32 0.0, %v2743
          %v2745 = vpop.f32.mrb[0].mxu0
          %2746 = vdwg.mxu0
          %v2747 = vadd.f32 %v2669, %v2733
          %v2748 = vadd.f32 %v2670, %v2736
          %v2749 = vadd.f32 %v2671, %v2741
          %v2750 = vadd.f32 %v2672, %v2744
          %s2751 = scalar_lea.vmem %s5, 112
          %v2752 = vld [vmem:[%s2751] sm:$0xf]
          %v2753 = vld [vmem:[%s2751 + $0x4] sm:$0xf]
          %v2754 = vld [vmem:[%s2751 + $0x8] sm:$0xf]
          %v2755 = vld [vmem:[%s2751 + $0xc] sm:$0xf]
          %v2760 = vunpack.c.l.b16 %v2752
          %v2761 = vunpack.c.l.b16 %v2753
          %v2762 = vunpack.c.l.b16 %v2754
          %v2763 = vunpack.c.l.b16 %v2755
          %v2764 = vpack.c.b16 %v2761, %v2760
          %v2765 = vpack.c.b16 %v2763, %v2762
          %2767 = vrot.lane.b32.xlu0 %v2681, 127
          %v2768 = vpop.permute.xlu0 %2767
          %v2771 = vsel %vm2242, %v2764, 0
          %v2774 = vsel %vm2242, %v2765, 0
          %2776 = vmatprep.subr.bf16.mxu0 0
          %2777 = vmatpush1.bf16.msra.mxu0 %v2768
          %2778 = vmatprep.subr.bf16.mxu0 0
          %2779 = vmatpush1.bf16.msra.mxu0 0
          %2780 = vmatprep.subr.bf16.mxu0 0
          %2781 = vmatpush1.bf16.msra.mxu0 0
          %2782 = vmatprep.subr.bf16.mxu0 0
          %2783 = vmatpush1.bf16.msra.mxu0 0
          %2784 = vmatprep.subr.bf16.mxu0 0
          %2785 = vmatpush1.bf16.msra.mxu0 0
          %2786 = vmatprep.subr.bf16.mxu0 0
          %2787 = vmatpush1.bf16.msra.mxu0 0
          %2788 = vmatprep.subr.bf16.mxu0 0
          %2789 = vmatpush1.bf16.msra.mxu0 0
          %2790 = vmatprep.subr.bf16.mxu0 0
          %2791 = vmatpush1.bf16.msra.mxu0 0
          %2792 = vmatprep.subr.bf16.mxu0 0
          %2793 = vmatpush1.bf16.msra.mxu0 0
          %2794 = vmatprep.subr.bf16.mxu0 0
          %2795 = vmatpush1.bf16.msra.mxu0 0
          %2796 = vmatprep.subr.bf16.mxu0 0
          %2797 = vmatpush1.bf16.msra.mxu0 0
          %2798 = vmatprep.subr.bf16.mxu0 0
          %2799 = vmatpush1.bf16.msra.mxu0 0
          %2800 = vmatprep.subr.bf16.mxu0 0
          %2801 = vmatpush1.bf16.msra.mxu0 0
          %2802 = vmatprep.subr.bf16.mxu0 0
          %2803 = vmatpush1.bf16.msra.mxu0 0
          %2804 = vmatprep.subr.bf16.mxu0 0
          %2805 = vmatpush1.bf16.msra.mxu0 0
          %2806 = vmatprep.subr.bf16.mxu0 0
          %2807 = vmatpush1.bf16.msra.mxu0 0
          %2808 = vmatprep.mubr.bf16.mxu0 0
          %2809 = vmatmul.mubr.bf16.gmra.mrb[0].mxu0 %v2771
          %v2810 = vpop.f32.mrb[0].mxu0
          %v2811 = vadd.f32 0.0, %v2810
          %v2812 = vpop.f32.mrb[0].mxu0
          %v2813 = vpop.f32.mrb[0].mxu0
          %v2814 = vadd.f32 0.0, %v2813
          %v2815 = vpop.f32.mrb[0].mxu0
          %2816 = vmatprep.mubr.bf16.mxu0 0
          %2817 = vmatmul.mubr.bf16.gmra.mrb[0].mxu0 %v2774
          %v2818 = vpop.f32.mrb[0].mxu0
          %v2819 = vadd.f32 0.0, %v2818
          %v2820 = vpop.f32.mrb[0].mxu0
          %v2821 = vpop.f32.mrb[0].mxu0
          %v2822 = vadd.f32 0.0, %v2821
          %v2823 = vpop.f32.mrb[0].mxu0
          %2824 = vdwg.mxu0
          %v2825 = vadd.f32 %v2747, %v2811
          %v2826 = vadd.f32 %v2748, %v2814
          %v2827 = vadd.f32 %v2749, %v2819
          %v2828 = vadd.f32 %v2750, %v2822
          %s2829 = scalar_lea.vmem %s5, 128
          %v2830 = vld [vmem:[%s2829] sm:$0xf]
          %v2831 = vld [vmem:[%s2829 + $0x4] sm:$0xf]
          %v2832 = vld [vmem:[%s2829 + $0x8] sm:$0xf]
          %v2833 = vld [vmem:[%s2829 + $0xc] sm:$0xf]
          %v2838 = vunpack.c.l.b16 %v2830
          %v2839 = vunpack.c.l.b16 %v2831
          %v2840 = vunpack.c.l.b16 %v2832
          %v2841 = vunpack.c.l.b16 %v2833
          %v2842 = vpack.c.b16 %v2839, %v2838
          %v2843 = vpack.c.b16 %v2841, %v2840
          %2844 = vrot.lane.b32.xlu0 %v2681, 126
          %v2845 = vpop.permute.xlu0 %2844
          %v2848 = vsel %vm2242, %v2842, 0
          %v2851 = vsel %vm2242, %v2843, 0
          %2853 = vmatprep.subr.bf16.mxu0 0
          %2854 = vmatpush1.bf16.msra.mxu0 %v2845
          %2855 = vmatprep.subr.bf16.mxu0 0
          %2856 = vmatpush1.bf16.msra.mxu0 0
          %2857 = vmatprep.subr.bf16.mxu0 0
          %2858 = vmatpush1.bf16.msra.mxu0 0
          %2859 = vmatprep.subr.bf16.mxu0 0
          %2860 = vmatpush1.bf16.msra.mxu0 0
          %2861 = vmatprep.subr.bf16.mxu0 0
          %2862 = vmatpush1.bf16.msra.mxu0 0
          %2863 = vmatprep.subr.bf16.mxu0 0
          %2864 = vmatpush1.bf16.msra.mxu0 0
          %2865 = vmatprep.subr.bf16.mxu0 0
          %2866 = vmatpush1.bf16.msra.mxu0 0
          %2867 = vmatprep.subr.bf16.mxu0 0
          %2868 = vmatpush1.bf16.msra.mxu0 0
          %2869 = vmatprep.subr.bf16.mxu0 0
          %2870 = vmatpush1.bf16.msra.mxu0 0
          %2871 = vmatprep.subr.bf16.mxu0 0
          %2872 = vmatpush1.bf16.msra.mxu0 0
          %2873 = vmatprep.subr.bf16.mxu0 0
          %2874 = vmatpush1.bf16.msra.mxu0 0
          %2875 = vmatprep.subr.bf16.mxu0 0
          %2876 = vmatpush1.bf16.msra.mxu0 0
          %2877 = vmatprep.subr.bf16.mxu0 0
          %2878 = vmatpush1.bf16.msra.mxu0 0
          %2879 = vmatprep.subr.bf16.mxu0 0
          %2880 = vmatpush1.bf16.msra.mxu0 0
          %2881 = vmatprep.subr.bf16.mxu0 0
          %2882 = vmatpush1.bf16.msra.mxu0 0
          %2883 = vmatprep.subr.bf16.mxu0 0
          %2884 = vmatpush1.bf16.msra.mxu0 0
          %2885 = vmatprep.mubr.bf16.mxu0 0
          %2886 = vmatmul.mubr.bf16.gmra.mrb[0].mxu0 %v2848
          %v2887 = vpop.f32.mrb[0].mxu0
          %v2888 = vadd.f32 0.0, %v2887
          %v2889 = vpop.f32.mrb[0].mxu0
          %v2890 = vpop.f32.mrb[0].mxu0
          %v2891 = vadd.f32 0.0, %v2890
          %v2892 = vpop.f32.mrb[0].mxu0
          %2893 = vmatprep.mubr.bf16.mxu0 0
          %2894 = vmatmul.mubr.bf16.gmra.mrb[0].mxu0 %v2851
          %v2895 = vpop.f32.mrb[0].mxu0
          %v2896 = vadd.f32 0.0, %v2895
          %v2897 = vpop.f32.mrb[0].mxu0
          %v2898 = vpop.f32.mrb[0].mxu0
          %v2899 = vadd.f32 0.0, %v2898
          %v2900 = vpop.f32.mrb[0].mxu0
          %2901 = vdwg.mxu0
          %v2902 = vadd.f32 %v2825, %v2888
          %v2903 = vadd.f32 %v2826, %v2891
          %v2904 = vadd.f32 %v2827, %v2896
          %v2905 = vadd.f32 %v2828, %v2899
          %2907 = vset.pattern.permute.xlu0 0
          %2908 = vperm.xlu0 %2907, %v382
          %v2909 = vpop.permute.xlu0 %2908
          %2912 = vset.pattern.permute.xlu0 0
          %2913 = vperm.xlu0 %2912, %v383
          %v2914 = vpop.permute.xlu0 %2913
          %2917 = vset.pattern.permute.xlu0 0
          %2918 = vperm.xlu0 %2917, %v384
          %v2919 = vpop.permute.xlu0 %2918
          %2922 = vset.pattern.permute.xlu0 0
          %2923 = vperm.xlu0 %2922, %v385
          %v2924 = vpop.permute.xlu0 %2923
          %v2926 = vadd.f32 %v2902, %v2909
          %v2927 = vadd.f32 %v2903, %v2914
          %v2928 = vadd.f32 %v2904, %v2919
          %v2929 = vadd.f32 %v2905, %v2924
          %vm2930 = vcmp.gt.f32.partialorder %v2926, 0.0
          %vm2931 = vcmp.gt.f32.partialorder %v2927, 0.0
          %vm2932 = vcmp.gt.f32.partialorder %v2928, 0.0
          %vm2933 = vcmp.gt.f32.partialorder %v2929, 0.0
          %v2934 = vstv %s377
          %v2935 = vmul.f32 %v2934, %v2926
          %v2936 = vmul.f32 %v2934, %v2927
          %v2937 = vmul.f32 %v2934, %v2928
          %v2938 = vmul.f32 %v2934, %v2929
          %v2939 = vsel %vm2930, %v2926, %v2935
          %v2940 = vsel %vm2931, %v2927, %v2936
          %v2941 = vsel %vm2932, %v2928, %v2937
          %v2942 = vsel %vm2933, %v2929, %v2938
          %v2943 = vld [vmem:[%s7] sm:$0x7]
          %v2944 = vpack.c.bf16 %v2940, %v2939
          %v2945 = vpack.c.bf16 %v2942, %v2941
          %2947 = vset.pattern.permute.xlu0 0
          %2948 = vperm.xlu0 %2947, %v386
          %v2949 = vpop.permute.xlu0 %2948
          %vm2951 = vcmask 261120
          %v2953 = vsel %vm2951, %v2943, 0
          %2955 = vmatprep.subr.bf16.mxu0 0
          %2956 = vmatpush1.bf16.msra.mxu0 %v2944
          %2957 = vmatprep.subr.bf16.mxu0 0
          %2958 = vmatpush1.bf16.msra.mxu0 %v2945
          %2959 = vmatprep.subr.bf16.mxu0 0
          %2960 = vmatpush1.bf16.msra.mxu0 0
          %2961 = vmatprep.subr.bf16.mxu0 0
          %2962 = vmatpush1.bf16.msra.mxu0 0
          %2963 = vmatprep.subr.bf16.mxu0 0
          %2964 = vmatpush1.bf16.msra.mxu0 0
          %2965 = vmatprep.subr.bf16.mxu0 0
          %2966 = vmatpush1.bf16.msra.mxu0 0
          %2967 = vmatprep.subr.bf16.mxu0 0
          %2968 = vmatpush1.bf16.msra.mxu0 0
          %2969 = vmatprep.subr.bf16.mxu0 0
          %2970 = vmatpush1.bf16.msra.mxu0 0
          %2971 = vmatprep.subr.bf16.mxu0 0
          %2972 = vmatpush1.bf16.msra.mxu0 0
          %2973 = vmatprep.subr.bf16.mxu0 0
          %2974 = vmatpush1.bf16.msra.mxu0 0
          %2975 = vmatprep.subr.bf16.mxu0 0
          %2976 = vmatpush1.bf16.msra.mxu0 0
          %2977 = vmatprep.subr.bf16.mxu0 0
          %2978 = vmatpush1.bf16.msra.mxu0 0
          %2979 = vmatprep.subr.bf16.mxu0 0
          %2980 = vmatpush1.bf16.msra.mxu0 0
          %2981 = vmatprep.subr.bf16.mxu0 0
          %2982 = vmatpush1.bf16.msra.mxu0 0
          %2983 = vmatprep.subr.bf16.mxu0 0
          %2984 = vmatpush1.bf16.msra.mxu0 0
          %2985 = vmatprep.subr.bf16.mxu0 0
          %2986 = vmatpush1.bf16.msra.mxu0 0
          %2987 = vmatprep.mubr.bf16.mxu0 0
          %2988 = vmatmul.mubr.bf16.gmra.mrb[0].mxu0 %v2953
          %v2989 = vpop.f32.mrb[0].mxu0
          %v2990 = vadd.f32 %v2949, %v2989
          %v2991 = vpop.f32.mrb[0].mxu0
          %v2992 = vpop.f32.mrb[0].mxu0
          %v2993 = vpop.f32.mrb[0].mxu0
          %2994 = vdwg.mxu0
          %v2995 = vsub.f32 0.0, %v2990
          %v2996 = vmul.f32 %v2995, 1.442695
          %v2997 = vpow.pop %v2996
          %v2998 = vadd.f32 %v2997, 1.0
          %v2999 = vrcp.pop %v2998
          %v3000 = vmin.f32 %v2999, 1.0
          %vm3001 = vcmp.eq.s32.totalorder %v388, 0
          %v3002 = vsel %vm3001, %v3000, %v2990
          %s3003 = smul.u32 %s2211, 8
          %s3004 = scalar_lea.vmem %s373, %s3003
          %vm3005 = vcmask 20480
          %3006 = vst.msk [vmem:[%s3004] sm:$0x1f] %vm3005, %v3002
        $region83: #{pnet_forward.1} parent=59 // loop_footer
          %s2215 = sadd.s32 1, %s2211
        $region84: #{pnet_forward.1} parent=59 // loop_footer_branch
          %2210 = sbr.rel target = $region80
        $region85: #{pnet_forward.1} parent=59 // loop_exit
          _
        %p3007 = scmp.lt.s32.totalorder %s22, 1
        %s3008 = scalar_select %p3007, %s22, 1
        %s3009 = smul.addr %s3008, 3
        %s3010 = smul.addr %s3009, 8
        %s3011 = scalar_lea.vmem %s10, %s3010
        // Predicated region
        $region86: #{pnet_forward.1} parent=59 // pred_check
          %p3012 = pneg %p255
        $region87: #{pnet_forward.1} parent=59 // pred_check_branch
          %3014 = sbr.rel (%p3012) target = $region89
        $region88: #{pnet_forward.1} parent=59 // pred_region
          _
        $region89: #{pnet_forward.1} parent=59 // pred_fallthru
          _
      $region60: #{pnet_forward.1} parent=5 // pred_fallthru
        _
      %p3015 = scmp.le.s32.totalorder 2, %s17
      // Predicated region
      $region90: #{pnet_forward.1} parent=5 // pred_check
        %p3016 = pneg %p3015
      $region91: #{pnet_forward.1} parent=5 // pred_check_branch
        %3018 = sbr.rel (%p3016) target = $region93
      $region92: #{pnet_forward.1} parent=5 // pred_region
        %s3019 = ssub.s32 %s17, 2
        // Predicated region
        $region94: #{pnet_forward.1} parent=92 // pred_check
          %p3020 = pneg %p261
        $region95: #{pnet_forward.1} parent=92 // pred_check_branch
          %3022 = sbr.rel (%p3020) target = $region97
        $region96: #{pnet_forward.1} parent=92 // pred_region
          %p3023 = scmp.lt.s32.totalorder %s23, 1
          %s3024 = scalar_select %p3023, %s23, 1
          %s3025 = smul.addr %s3024, 3
          %s3026 = smul.addr %s3025, 8
          %s3027 = scalar_lea.vmem %s10, %s3026
        $region97: #{pnet_forward.1} parent=92 // pred_fallthru
          _
      $region93: #{pnet_forward.1} parent=5 // pred_fallthru
        _
    $region6: #{pnet_forward.1} parent=1 // loop_footer
      %s21 = sadd.s32 1, %s17
    $region7: #{pnet_forward.1} parent=1 // loop_footer_branch
      %16 = sbr.rel target = $region3
    $region8: #{pnet_forward.1} parent=1 // loop_exit
      _
    %3028 = vsyncpa [#allocation5], 1
    %s3029 = scalar_lea.sflag [#allocation5], 1
    %3030 = vsyncpa %s3029, 1

</llo_original>
